<compile_context>
chip_gen: v6e
topology: v6e:2x2x1
jax: 0.10.0
libtpu: 0.0.40
codegen_flags: <defaults>
</compile_context>

<pallas_src>
import math
from functools import partial

import numpy as np
import jax
import jax.numpy as jnp
from jax.experimental import pallas as pl
from jax.experimental.pallas import tpu as pltpu

MODEL_SETTINGS = dict(
    num_hiddens=32,
    num_heads=4,
    f_in=(16,),
    num_layers=(2,),
    dropout=0.0,
)

# TODO(synk): the reference Norm module is not provided; assumed LayerNorm over the last
# axis with learnable gamma/beta and eps = 1e-5 (PyTorch nn.LayerNorm default).
LN_EPS = 1e-5

# ---- row indices into the single packed "vecs" operand (all [D] biases/gammas/betas) ----
V_BCAST_B = 0
V_N1_G, V_N1_B = 1, 2
V_FF_B1, V_FF_B2 = 3, 4
V_N2_G, V_N2_B = 5, 6
V_ENC = 7                                   # rows used by encoder-level params
V_BQ, V_BK, V_BV, V_BO = 0, 1, 2, 3         # per-layer offsets
V_LN1G, V_LN1B, V_FB1, V_FB2, V_LN2G, V_LN2B = 4, 5, 6, 7, 8, 9
V_PER_LAYER = 10

# ---- indices into the single packed [*, D, D] weight stack ----
W_FF1, W_FF2 = 0, 1
W_ENC = 2
W_WO, W_FW1, W_FW2 = 0, 1, 2                # per-layer offsets
W_PER_LAYER = 3


# ==================================== fused kernel ====================================

def _encoder_kernel(x_ref, maskb_ref, bw_ref, wqkv_ref, wstack_ref, vecs_ref, o_ref,
                    *, num_heads, num_layers, B, S, D, scale):
    H = num_heads
    Dh = D // H

    def vec(i):                              # [1, D] bias / gamma / beta row
        return vecs_ref[i:i + 1, :]

    def layer_norm(x, gi, bi):
        mu = jnp.mean(x, axis=-1, keepdims=True)
        var = jnp.mean((x - mu) ** 2, axis=-1, keepdims=True)
        return (x - mu) * jax.lax.rsqrt(var + LN_EPS) * vec(gi) + vec(bi)

    def feed_forward(x, w1, b1, w2, b2):     # Linear -> ReLU -> Linear (dropout = id)
        y = jnp.dot(x, wstack_ref[w1], preferred_element_type=jnp.float32) + vec(b1)
        y = jnp.maximum(y, 0.0)
        return jnp.dot(y, wstack_ref[w2], preferred_element_type=jnp.float32) + vec(b2)

    def split_heads(slab):                   # [B*S, D] -> [H*B, S, Dh]   (z = h*B + b)
        parts = []
        for hh in range(H):
            col = slab[:, hh * Dh:(hh + 1) * Dh]
            for b in range(B):
                parts.append(col[b * S:(b + 1) * S, :])
        return jnp.stack(parts, axis=0)

    def merge_heads(z3d):                    # [H*B, S, Dh] -> [B*S, D]
        rows = [jnp.concatenate([z3d[hh * B + b] for hh in range(H)], axis=-1)
                for b in range(B)]
        return jnp.concatenate(rows, axis=0)

    # ---- x_ = ff(norm1(broadcast(x.transpose(-1, -2)))) : transpose folded in-kernel ----
    xt = jnp.swapaxes(x_ref[...], 1, 2)                          # [B, S, F]
    x2 = jnp.concatenate([xt[b] for b in range(B)], axis=0)      # [B*S, F]
    h = jnp.dot(x2, bw_ref[...], preferred_element_type=jnp.float32) + vec(V_BCAST_B)
    h = layer_norm(h, V_N1_G, V_N1_B)
    h = feed_forward(h, W_FF1, V_FF_B1, W_FF2, V_FF_B2)

    mask_bias = maskb_ref[...]                                   # [H*B, S, S] additive

    # ---- encoder blocks, statically unrolled ----------------------------------------------
    for l in range(num_layers):
        vb = V_ENC + l * V_PER_LAYER
        wb = W_ENC + l * W_PER_LAYER

        # fused QKV projection: one [M, D] x [D, 3D] MXU pass per layer
        qkv = jnp.dot(h, wqkv_ref[l], preferred_element_type=jnp.float32)
        q = split_heads(qkv[:, 0:D] + vec(vb + V_BQ))
        k = split_heads(qkv[:, D:2 * D] + vec(vb + V_BK))
        v = split_heads(qkv[:, 2 * D:3 * D] + vec(vb + V_BV))

        # one batched contraction over all (batch, head) pairs; softmax runs ONCE over the
        # whole [B*H, S, S] tile (single max / exp / sum / div)
        s = jnp.einsum('zqd,zkd->zqk', q, k, preferred_element_type=jnp.float32)
        s = s * scale + mask_bias
        s = s - jnp.max(s, axis=-1, keepdims=True)
        p = jnp.exp(s)
        p = p / jnp.sum(p, axis=-1, keepdims=True)
        ctx = jnp.einsum('zqk,zkd->zqd', p, v, preferred_element_type=jnp.float32)

        # heads re-assembled in registers (no VMEM scratch round-trip) -> output projection
        attn = jnp.dot(merge_heads(ctx), wstack_ref[wb + W_WO],
                       preferred_element_type=jnp.float32) + vec(vb + V_BO)

        # x_ = norm1(x_ + attn(x_)); x_ = norm2(x_ + ff(x_))      (dropout = identity)
        h = layer_norm(h + attn, vb + V_LN1G, vb + V_LN1B)
        h = layer_norm(h + feed_forward(h, wb + W_FW1, vb + V_FB1, wb + W_FW2, vb + V_FB2),
                       vb + V_LN2G, vb + V_LN2B)

    # ---- final encoder-level norm2 ---------------------------------------------------------
    o_ref[...] = layer_norm(h, V_N2_G, V_N2_B)


# ==================================== wrapper ====================================

def _full_spec(a):
    n = a.ndim
    return pl.BlockSpec(tuple(a.shape), lambda i, _n=n: (0,) * _n)


def transformer_encoder(packed, x, mask, *, num_heads, num_layers):
    """x: [B, f_in, S] (PyTorch layout); mask: [B, S, S], 1 = attend, 0 = masked."""
    B, F, S = x.shape
    D = packed["wstack"].shape[-1]
    M = B * S

    # Additive mask bias (one VPU add in-kernel instead of compare+select per layer),
    # replicated per head so in-kernel softmax is one batched [B*H, S, S] tile.
    mask_bias = jnp.tile((mask.astype(jnp.float32) - 1.0) * 1e9, (num_heads, 1, 1))

    inputs = [x.astype(jnp.float32), mask_bias,
              packed["bw"], packed["wqkv"], packed["wstack"], packed["vecs"]]

    out = pl.pallas_call(
        partial(_encoder_kernel, num_heads=num_heads, num_layers=num_layers,
                B=B, S=S, D=D, scale=1.0 / math.sqrt(D // num_heads)),
        out_shape=jax.ShapeDtypeStruct((M, D), jnp.float32),
        grid=(1,),
        in_specs=[_full_spec(a) for a in inputs],
        out_specs=pl.BlockSpec((M, D), lambda i: (0, 0)),
        compiler_params=pltpu.CompilerParams(dimension_semantics=("arbitrary",)),
    )(*inputs)

    # TODO(synk): at production sizes, tile M over a "parallel" grid axis (v7x megacore),
    # stream activation row-blocks with BlockSpecs (weights pinned via constant index_map),
    # and cast matmul operands to bf16; at B*S=16, D=32 the kernel is launch-bound and the
    # single VMEM-resident block is optimal.
    return out.reshape(B, S, D)


# ============================ params: init, pack, pure-JAX reference ============================

def init_params(key, settings):
    """Per-module parameters (Linear weights already stored as [in, out])."""
    D = settings["num_hiddens"]
    F = settings["f_in"][0]
    L = settings["num_layers"][0]
    keys = iter(jax.random.split(key, 64))

    def w(shape):
        return jax.random.normal(next(keys), shape, jnp.float32) * 0.02

    zeros = lambda s: jnp.zeros(s, jnp.float32)
    ones = lambda s: jnp.ones(s, jnp.float32)

    return {
        "broadcast": {"w": w((F, D)), "b": zeros((D,))},
        "norm1": {"g": ones((D,)), "b": zeros((D,))},
        "ff": {"w1": w((D, D)), "b1": zeros((D,)), "w2": w((D, D)), "b2": zeros((D,))},
        "norm2": {"g": ones((D,)), "b": zeros((D,))},
        "blocks": [
            {
                "wq": w((D, D)), "bq": zeros((D,)),
                "wk": w((D, D)), "bk": zeros((D,)),
                "wv": w((D, D)), "bv": zeros((D,)),
                "wo": w((D, D)), "bo": zeros((D,)),
                "n1": {"g": ones((D,)), "b": zeros((D,))},
                "ff": {"w1": w((D, D)), "b1": zeros((D,)),
                       "w2": w((D, D)), "b2": zeros((D,))},
                "n2": {"g": ones((D,)), "b": zeros((D,))},
            }
            for _ in range(L)
        ],
    }


def pack_params(params):
    """Consolidate ~26 small operands into 4 stacked arrays (done once, outside the jit).

    wqkv columns are q|k|v with per-head contiguity (head h = columns h*Dh:(h+1)*Dh of each
    D-wide group), matching the in-kernel head split.
    """
    vec_rows = [
        params["broadcast"]["b"],
        params["norm1"]["g"], params["norm1"]["b"],
        params["ff"]["b1"], params["ff"]["b2"],
        params["norm2"]["g"], params["norm2"]["b"],
    ]
    mats = [params["ff"]["w1"], params["ff"]["w2"]]
    wqkv = []
    for blk in params["blocks"]:
        vec_rows += [blk["bq"], blk["bk"], blk["bv"], blk["bo"],
                     blk["n1"]["g"], blk["n1"]["b"],
                     blk["ff"]["b1"], blk["ff"]["b2"],
                     blk["n2"]["g"], blk["n2"]["b"]]
        mats += [blk["wo"], blk["ff"]["w1"], blk["ff"]["w2"]]
        wqkv.append(jnp.concatenate([blk["wq"], blk["wk"], blk["wv"]], axis=1))
    return {
        "bw": params["broadcast"]["w"],          # [F, D]
        "wqkv": jnp.stack(wqkv, axis=0),         # [L, D, 3D]
        "wstack": jnp.stack(mats, axis=0),       # [2 + 3L, D, D]
        "vecs": jnp.stack(vec_rows, axis=0),     # [7 + 10L, D]
    }


def reference_forward(params, x, mask, *, num_heads):
    """Pure-JAX mirror of TransformerEncoder.forward (dropout = identity)."""
    def ln(v, g, b):
        mu = v.mean(-1, keepdims=True)
        var = ((v - mu) ** 2).mean(-1, keepdims=True)
        return (v - mu) / jnp.sqrt(var + LN_EPS) * g + b

    def ff(v, p):
        return jnp.maximum(v @ p["w1"] + p["b1"], 0.0) @ p["w2"] + p["b2"]

    h = jnp.swapaxes(x, -1, -2) @ params["broadcast"]["w"] + params["broadcast"]["b"]
    h = ff(ln(h, params["norm1"]["g"], params["norm1"]["b"]), params["ff"])
    B, S, D = h.shape
    H = num_heads
    Dh = D // H

    def split(t):
        return t.reshape(B, S, H, Dh).transpose(0, 2, 1, 3)

    for blk in params["blocks"]:
        q = split(h @ blk["wq"] + blk["bq"])
        k = split(h @ blk["wk"] + blk["bk"])
        v = split(h @ blk["wv"] + blk["bv"])
        s = jnp.einsum('bhqd,bhkd->bhqk', q, k) / math.sqrt(Dh)
        s = jnp.where(mask[:, None, :, :] > 0, s, -1e9)
        p = jax.nn.softmax(s, axis=-1)
        ctx = jnp.einsum('bhqk,bhkd->bhqd', p, v).transpose(0, 2, 1, 3).reshape(B, S, D)
        attn = ctx @ blk["wo"] + blk["bo"]
        h = ln(h + attn, blk["n1"]["g"], blk["n1"]["b"])
        h = ln(h + ff(h, blk["ff"]), blk["n2"]["g"], blk["n2"]["b"])
    return ln(h, params["norm2"]["g"], params["norm2"]["b"])


# ==================================== demo ====================================

if __name__ == "__main__":
    settings = MODEL_SETTINGS
    B, F, S = 2, settings["f_in"][0], 8
    D, H, L = settings["num_hiddens"], settings["num_heads"], settings["num_layers"][0]

    key = jax.random.PRNGKey(0)
    k_params, k_x = jax.random.split(key)

    params = init_params(k_params, settings)
    packed = pack_params(params)

    # x follows PyTorch layout [batch, f_in, seq]; mask [batch, seq, seq] (1=attend, 0=mask)
    x = jax.random.normal(k_x, (B, F, S), jnp.float32)
    mask = jnp.ones((B, S, S), jnp.float32).at[1, :, S - 1].set(0.0)

    fwd = jax.jit(partial(transformer_encoder, num_heads=H, num_layers=L))
    out = jax.block_until_ready(fwd(packed, x, mask))

    ref = reference_forward(params, x, mask, num_heads=H)

    assert out.shape == (B, S, D)
    assert bool(jnp.all(jnp.isfinite(out)))
    assert np.allclose(np.asarray(out), np.asarray(ref), atol=5e-3, rtol=5e-3), \
        float(jnp.max(jnp.abs(out - ref)))
    print("KERNEL_OK")
</pallas_src>

<mosaic_0001>
module attributes {stable_mosaic.version = 11 : i64} {
  func.func @_encoder_kernel(%arg0: i32, %arg1: memref<2x16x8xf32, #tpu.memory_space<vmem>>, %arg2: memref<8x8x8xf32, #tpu.memory_space<vmem>>, %arg3: memref<16x32xf32, #tpu.memory_space<vmem>>, %arg4: memref<2x32x96xf32, #tpu.memory_space<vmem>>, %arg5: memref<8x32x32xf32, #tpu.memory_space<vmem>>, %arg6: memref<27x32xf32, #tpu.memory_space<vmem>>, %arg7: memref<16x32xf32, #tpu.memory_space<vmem>>) attributes {dimension_semantics = [#tpu.dimension_semantics<arbitrary>], iteration_bounds = array<i64: 1>, scalar_prefetch = 0 : i64, scratch_operands = 0 : i64, tpu.core_type = #tpu.core_type<tc>, window_params = [{pipeline_mode = #tpu.pipeline_mode<synchronous>, transform_indices = @transform_0, window_bounds = array<i64: 2, 16, 8>}, {pipeline_mode = #tpu.pipeline_mode<synchronous>, transform_indices = @transform_1, window_bounds = array<i64: 8, 8, 8>}, {pipeline_mode = #tpu.pipeline_mode<synchronous>, transform_indices = @transform_2, window_bounds = array<i64: 16, 32>}, {pipeline_mode = #tpu.pipeline_mode<synchronous>, transform_indices = @transform_3, window_bounds = array<i64: 2, 32, 96>}, {pipeline_mode = #tpu.pipeline_mode<synchronous>, transform_indices = @transform_4, window_bounds = array<i64: 8, 32, 32>}, {pipeline_mode = #tpu.pipeline_mode<synchronous>, transform_indices = @transform_5, window_bounds = array<i64: 27, 32>}, {pipeline_mode = #tpu.pipeline_mode<synchronous>, transform_indices = @transform_6, window_bounds = array<i64: 16, 32>}]} {
    %c0 = arith.constant 0 : index
    %c0_0 = arith.constant 0 : index
    %c0_1 = arith.constant 0 : index
    %0 = vector.load %arg1[%c0, %c0_0, %c0_1] : memref<2x16x8xf32, #tpu.memory_space<vmem>>, vector<2x16x8xf32>
    %1 = tpu.transpose %0, [0, 2, 1] : vector<2x16x8xf32> -> vector<2x8x16xf32>
    %2 = vector.extract_strided_slice %1 {offsets = [0, 0, 0], sizes = [1, 8, 16], strides = [1, 1, 1]} : vector<2x8x16xf32> to vector<1x8x16xf32>
    %3 = vector.shape_cast %2 : vector<1x8x16xf32> to vector<8x16xf32>
    %4 = vector.extract_strided_slice %1 {offsets = [1, 0, 0], sizes = [1, 8, 16], strides = [1, 1, 1]} : vector<2x8x16xf32> to vector<1x8x16xf32>
    %5 = vector.shape_cast %4 : vector<1x8x16xf32> to vector<8x16xf32>
    %6 = tpu.concatenate %3, %5 in 0 : vector<8x16xf32>, vector<8x16xf32> -> vector<16x16xf32>
    %c0_2 = arith.constant 0 : index
    %c0_3 = arith.constant 0 : index
    %7 = vector.load %arg3[%c0_2, %c0_3] : memref<16x32xf32, #tpu.memory_space<vmem>>, vector<16x32xf32>
    %cst = arith.constant dense<0.000000e+00> : vector<16x32xf32>
    %8 = tpu.matmul %6, %7, %cst {dimension_numbers = #tpu.dot_dimension_numbers<[1], [0], [0], [1], [0, 0, 1, 1], [], []>} : vector<16x16xf32>, vector<16x32xf32>, vector<16x32xf32> -> vector<16x32xf32>
    %c0_4 = arith.constant 0 : index
    %c0_5 = arith.constant 0 : index
    %9 = vector.load %arg6[%c0_4, %c0_5] : memref<27x32xf32, #tpu.memory_space<vmem>>, vector<1x32xf32>
    %10 = vector.broadcast %9 : vector<1x32xf32> to vector<16x32xf32>
    %11 = arith.addf %8, %10 : vector<16x32xf32>
    %cst_6 = arith.constant dense<0.000000e+00> : vector<16xf32>
    %12 = vector.multi_reduction <add>, %11, %cst_6 [1] : vector<16x32xf32> to vector<16xf32>
    %13 = vector.shape_cast %12 : vector<16xf32> to vector<16x1xf32>
    %cst_7 = arith.constant 3.200000e+01 : f32
    %14 = vector.broadcast %cst_7 : f32 to vector<16x1xf32>
    %15 = arith.divf %13, %14 : vector<16x1xf32>
    %16 = vector.broadcast %15 : vector<16x1xf32> to vector<16x32xf32>
    %17 = arith.subf %11, %16 : vector<16x32xf32>
    %18 = arith.mulf %17, %17 : vector<16x32xf32>
    %cst_8 = arith.constant dense<0.000000e+00> : vector<16xf32>
    %19 = vector.multi_reduction <add>, %18, %cst_8 [1] : vector<16x32xf32> to vector<16xf32>
    %20 = vector.shape_cast %19 : vector<16xf32> to vector<16x1xf32>
    %cst_9 = arith.constant 3.200000e+01 : f32
    %21 = vector.broadcast %cst_9 : f32 to vector<16x1xf32>
    %22 = arith.divf %20, %21 : vector<16x1xf32>
    %23 = vector.broadcast %15 : vector<16x1xf32> to vector<16x32xf32>
    %24 = arith.subf %11, %23 : vector<16x32xf32>
    %cst_10 = arith.constant 9.99999974E-6 : f32
    %25 = vector.broadcast %cst_10 : f32 to vector<16x1xf32>
    %26 = arith.addf %22, %25 : vector<16x1xf32>
    %27 = math.rsqrt %26 : vector<16x1xf32>
    %28 = vector.broadcast %27 : vector<16x1xf32> to vector<16x32xf32>
    %29 = arith.mulf %24, %28 : vector<16x32xf32>
    %c1 = arith.constant 1 : index
    %c0_11 = arith.constant 0 : index
    %30 = vector.load %arg6[%c1, %c0_11] : memref<27x32xf32, #tpu.memory_space<vmem>>, vector<1x32xf32>
    %31 = vector.broadcast %30 : vector<1x32xf32> to vector<16x32xf32>
    %32 = arith.mulf %29, %31 : vector<16x32xf32>
    %c2 = arith.constant 2 : index
    %c0_12 = arith.constant 0 : index
    %33 = vector.load %arg6[%c2, %c0_12] : memref<27x32xf32, #tpu.memory_space<vmem>>, vector<1x32xf32>
    %34 = vector.broadcast %33 : vector<1x32xf32> to vector<16x32xf32>
    %35 = arith.addf %32, %34 : vector<16x32xf32>
    %c0_13 = arith.constant 0 : index
    %c0_14 = arith.constant 0 : index
    %c0_15 = arith.constant 0 : index
    %36 = vector.load %arg5[%c0_13, %c0_14, %c0_15] : memref<8x32x32xf32, #tpu.memory_space<vmem>>, vector<1x32x32xf32>
    %37 = vector.shape_cast %36 : vector<1x32x32xf32> to vector<32x32xf32>
    %cst_16 = arith.constant dense<0.000000e+00> : vector<16x32xf32>
    %38 = tpu.matmul %35, %37, %cst_16 {dimension_numbers = #tpu.dot_dimension_numbers<[1], [0], [0], [1], [0, 0, 1, 1], [], []>} : vector<16x32xf32>, vector<32x32xf32>, vector<16x32xf32> -> vector<16x32xf32>
    %c3 = arith.constant 3 : index
    %c0_17 = arith.constant 0 : index
    %39 = vector.load %arg6[%c3, %c0_17] : memref<27x32xf32, #tpu.memory_space<vmem>>, vector<1x32xf32>
    %40 = vector.broadcast %39 : vector<1x32xf32> to vector<16x32xf32>
    %41 = arith.addf %38, %40 : vector<16x32xf32>
    %cst_18 = arith.constant 0.000000e+00 : f32
    %42 = vector.broadcast %cst_18 : f32 to vector<16x32xf32>
    %43 = arith.maximumf %41, %42 : vector<16x32xf32>
    %c1_19 = arith.constant 1 : index
    %c0_20 = arith.constant 0 : index
    %c0_21 = arith.constant 0 : index
    %44 = vector.load %arg5[%c1_19, %c0_20, %c0_21] : memref<8x32x32xf32, #tpu.memory_space<vmem>>, vector<1x32x32xf32>
    %45 = vector.shape_cast %44 : vector<1x32x32xf32> to vector<32x32xf32>
    %cst_22 = arith.constant dense<0.000000e+00> : vector<16x32xf32>
    %46 = tpu.matmul %43, %45, %cst_22 {dimension_numbers = #tpu.dot_dimension_numbers<[1], [0], [0], [1], [0, 0, 1, 1], [], []>} : vector<16x32xf32>, vector<32x32xf32>, vector<16x32xf32> -> vector<16x32xf32>
    %c4 = arith.constant 4 : index
    %c0_23 = arith.constant 0 : index
    %47 = vector.load %arg6[%c4, %c0_23] : memref<27x32xf32, #tpu.memory_space<vmem>>, vector<1x32xf32>
    %48 = vector.broadcast %47 : vector<1x32xf32> to vector<16x32xf32>
    %49 = arith.addf %46, %48 : vector<16x32xf32>
    %c0_24 = arith.constant 0 : index
    %c0_25 = arith.constant 0 : index
    %c0_26 = arith.constant 0 : index
    %50 = vector.load %arg2[%c0_24, %c0_25, %c0_26] : memref<8x8x8xf32, #tpu.memory_space<vmem>>, vector<8x8x8xf32>
    %c0_27 = arith.constant 0 : index
    %c0_28 = arith.constant 0 : index
    %c0_29 = arith.constant 0 : index
    %51 = vector.load %arg4[%c0_27, %c0_28, %c0_29] : memref<2x32x96xf32, #tpu.memory_space<vmem>>, vector<1x32x96xf32>
    %52 = vector.shape_cast %51 : vector<1x32x96xf32> to vector<32x96xf32>
    %cst_30 = arith.constant dense<0.000000e+00> : vector<16x96xf32>
    %53 = tpu.matmul %49, %52, %cst_30 {dimension_numbers = #tpu.dot_dimension_numbers<[1], [0], [0], [1], [0, 0, 1, 1], [], []>} : vector<16x32xf32>, vector<32x96xf32>, vector<16x96xf32> -> vector<16x96xf32>
    %54 = vector.extract_strided_slice %53 {offsets = [0, 0], sizes = [16, 32], strides = [1, 1]} : vector<16x96xf32> to vector<16x32xf32>
    %c7 = arith.constant 7 : index
    %c0_31 = arith.constant 0 : index
    %55 = vector.load %arg6[%c7, %c0_31] : memref<27x32xf32, #tpu.memory_space<vmem>>, vector<1x32xf32>
    %56 = vector.broadcast %55 : vector<1x32xf32> to vector<16x32xf32>
    %57 = arith.addf %54, %56 : vector<16x32xf32>
    %58 = vector.extract_strided_slice %57 {offsets = [0, 0], sizes = [16, 8], strides = [1, 1]} : vector<16x32xf32> to vector<16x8xf32>
    %59 = vector.extract_strided_slice %58 {offsets = [0, 0], sizes = [8, 8], strides = [1, 1]} : vector<16x8xf32> to vector<8x8xf32>
    %60 = vector.extract_strided_slice %58 {offsets = [8, 0], sizes = [8, 8], strides = [1, 1]} : vector<16x8xf32> to vector<8x8xf32>
    %61 = vector.extract_strided_slice %57 {offsets = [0, 8], sizes = [16, 8], strides = [1, 1]} : vector<16x32xf32> to vector<16x8xf32>
    %62 = vector.extract_strided_slice %61 {offsets = [0, 0], sizes = [8, 8], strides = [1, 1]} : vector<16x8xf32> to vector<8x8xf32>
    %63 = vector.extract_strided_slice %61 {offsets = [8, 0], sizes = [8, 8], strides = [1, 1]} : vector<16x8xf32> to vector<8x8xf32>
    %64 = vector.extract_strided_slice %57 {offsets = [0, 16], sizes = [16, 8], strides = [1, 1]} : vector<16x32xf32> to vector<16x8xf32>
    %65 = vector.extract_strided_slice %64 {offsets = [0, 0], sizes = [8, 8], strides = [1, 1]} : vector<16x8xf32> to vector<8x8xf32>
    %66 = vector.extract_strided_slice %64 {offsets = [8, 0], sizes = [8, 8], strides = [1, 1]} : vector<16x8xf32> to vector<8x8xf32>
    %67 = vector.extract_strided_slice %57 {offsets = [0, 24], sizes = [16, 8], strides = [1, 1]} : vector<16x32xf32> to vector<16x8xf32>
    %68 = vector.extract_strided_slice %67 {offsets = [0, 0], sizes = [8, 8], strides = [1, 1]} : vector<16x8xf32> to vector<8x8xf32>
    %69 = vector.extract_strided_slice %67 {offsets = [8, 0], sizes = [8, 8], strides = [1, 1]} : vector<16x8xf32> to vector<8x8xf32>
    %70 = vector.shape_cast %59 : vector<8x8xf32> to vector<1x8x8xf32>
    %71 = vector.shape_cast %60 : vector<8x8xf32> to vector<1x8x8xf32>
    %72 = vector.shape_cast %62 : vector<8x8xf32> to vector<1x8x8xf32>
    %73 = vector.shape_cast %63 : vector<8x8xf32> to vector<1x8x8xf32>
    %74 = vector.shape_cast %65 : vector<8x8xf32> to vector<1x8x8xf32>
    %75 = vector.shape_cast %66 : vector<8x8xf32> to vector<1x8x8xf32>
    %76 = vector.shape_cast %68 : vector<8x8xf32> to vector<1x8x8xf32>
    %77 = vector.shape_cast %69 : vector<8x8xf32> to vector<1x8x8xf32>
    %78 = tpu.concatenate %70, %71, %72, %73, %74, %75, %76, %77 in 0 : vector<1x8x8xf32>, vector<1x8x8xf32>, vector<1x8x8xf32>, vector<1x8x8xf32>, vector<1x8x8xf32>, vector<1x8x8xf32>, vector<1x8x8xf32>, vector<1x8x8xf32> -> vector<8x8x8xf32>
    %79 = vector.extract_strided_slice %53 {offsets = [0, 32], sizes = [16, 32], strides = [1, 1]} : vector<16x96xf32> to vector<16x32xf32>
    %c8 = arith.constant 8 : index
    %c0_32 = arith.constant 0 : index
    %80 = vector.load %arg6[%c8, %c0_32] : memref<27x32xf32, #tpu.memory_space<vmem>>, vector<1x32xf32>
    %81 = vector.broadcast %80 : vector<1x32xf32> to vector<16x32xf32>
    %82 = arith.addf %79, %81 : vector<16x32xf32>
    %83 = vector.extract_strided_slice %82 {offsets = [0, 0], sizes = [16, 8], strides = [1, 1]} : vector<16x32xf32> to vector<16x8xf32>
    %84 = vector.extract_strided_slice %83 {offsets = [0, 0], sizes = [8, 8], strides = [1, 1]} : vector<16x8xf32> to vector<8x8xf32>
    %85 = vector.extract_strided_slice %83 {offsets = [8, 0], sizes = [8, 8], strides = [1, 1]} : vector<16x8xf32> to vector<8x8xf32>
    %86 = vector.extract_strided_slice %82 {offsets = [0, 8], sizes = [16, 8], strides = [1, 1]} : vector<16x32xf32> to vector<16x8xf32>
    %87 = vector.extract_strided_slice %86 {offsets = [0, 0], sizes = [8, 8], strides = [1, 1]} : vector<16x8xf32> to vector<8x8xf32>
    %88 = vector.extract_strided_slice %86 {offsets = [8, 0], sizes = [8, 8], strides = [1, 1]} : vector<16x8xf32> to vector<8x8xf32>
    %89 = vector.extract_strided_slice %82 {offsets = [0, 16], sizes = [16, 8], strides = [1, 1]} : vector<16x32xf32> to vector<16x8xf32>
    %90 = vector.extract_strided_slice %89 {offsets = [0, 0], sizes = [8, 8], strides = [1, 1]} : vector<16x8xf32> to vector<8x8xf32>
    %91 = vector.extract_strided_slice %89 {offsets = [8, 0], sizes = [8, 8], strides = [1, 1]} : vector<16x8xf32> to vector<8x8xf32>
    %92 = vector.extract_strided_slice %82 {offsets = [0, 24], sizes = [16, 8], strides = [1, 1]} : vector<16x32xf32> to vector<16x8xf32>
    %93 = vector.extract_strided_slice %92 {offsets = [0, 0], sizes = [8, 8], strides = [1, 1]} : vector<16x8xf32> to vector<8x8xf32>
    %94 = vector.extract_strided_slice %92 {offsets = [8, 0], sizes = [8, 8], strides = [1, 1]} : vector<16x8xf32> to vector<8x8xf32>
    %95 = vector.shape_cast %84 : vector<8x8xf32> to vector<1x8x8xf32>
    %96 = vector.shape_cast %85 : vector<8x8xf32> to vector<1x8x8xf32>
    %97 = vector.shape_cast %87 : vector<8x8xf32> to vector<1x8x8xf32>
    %98 = vector.shape_cast %88 : vector<8x8xf32> to vector<1x8x8xf32>
    %99 = vector.shape_cast %90 : vector<8x8xf32> to vector<1x8x8xf32>
    %100 = vector.shape_cast %91 : vector<8x8xf32> to vector<1x8x8xf32>
    %101 = vector.shape_cast %93 : vector<8x8xf32> to vector<1x8x8xf32>
    %102 = vector.shape_cast %94 : vector<8x8xf32> to vector<1x8x8xf32>
    %103 = tpu.concatenate %95, %96, %97, %98, %99, %100, %101, %102 in 0 : vector<1x8x8xf32>, vector<1x8x8xf32>, vector<1x8x8xf32>, vector<1x8x8xf32>, vector<1x8x8xf32>, vector<1x8x8xf32>, vector<1x8x8xf32>, vector<1x8x8xf32> -> vector<8x8x8xf32>
    %104 = vector.extract_strided_slice %53 {offsets = [0, 64], sizes = [16, 32], strides = [1, 1]} : vector<16x96xf32> to vector<16x32xf32>
    %c9 = arith.constant 9 : index
    %c0_33 = arith.constant 0 : index
    %105 = vector.load %arg6[%c9, %c0_33] : memref<27x32xf32, #tpu.memory_space<vmem>>, vector<1x32xf32>
    %106 = vector.broadcast %105 : vector<1x32xf32> to vector<16x32xf32>
    %107 = arith.addf %104, %106 : vector<16x32xf32>
    %108 = vector.extract_strided_slice %107 {offsets = [0, 0], sizes = [16, 8], strides = [1, 1]} : vector<16x32xf32> to vector<16x8xf32>
    %109 = vector.extract_strided_slice %108 {offsets = [0, 0], sizes = [8, 8], strides = [1, 1]} : vector<16x8xf32> to vector<8x8xf32>
    %110 = vector.extract_strided_slice %108 {offsets = [8, 0], sizes = [8, 8], strides = [1, 1]} : vector<16x8xf32> to vector<8x8xf32>
    %111 = vector.extract_strided_slice %107 {offsets = [0, 8], sizes = [16, 8], strides = [1, 1]} : vector<16x32xf32> to vector<16x8xf32>
    %112 = vector.extract_strided_slice %111 {offsets = [0, 0], sizes = [8, 8], strides = [1, 1]} : vector<16x8xf32> to vector<8x8xf32>
    %113 = vector.extract_strided_slice %111 {offsets = [8, 0], sizes = [8, 8], strides = [1, 1]} : vector<16x8xf32> to vector<8x8xf32>
    %114 = vector.extract_strided_slice %107 {offsets = [0, 16], sizes = [16, 8], strides = [1, 1]} : vector<16x32xf32> to vector<16x8xf32>
    %115 = vector.extract_strided_slice %114 {offsets = [0, 0], sizes = [8, 8], strides = [1, 1]} : vector<16x8xf32> to vector<8x8xf32>
    %116 = vector.extract_strided_slice %114 {offsets = [8, 0], sizes = [8, 8], strides = [1, 1]} : vector<16x8xf32> to vector<8x8xf32>
    %117 = vector.extract_strided_slice %107 {offsets = [0, 24], sizes = [16, 8], strides = [1, 1]} : vector<16x32xf32> to vector<16x8xf32>
    %118 = vector.extract_strided_slice %117 {offsets = [0, 0], sizes = [8, 8], strides = [1, 1]} : vector<16x8xf32> to vector<8x8xf32>
    %119 = vector.extract_strided_slice %117 {offsets = [8, 0], sizes = [8, 8], strides = [1, 1]} : vector<16x8xf32> to vector<8x8xf32>
    %120 = vector.shape_cast %109 : vector<8x8xf32> to vector<1x8x8xf32>
    %121 = vector.shape_cast %110 : vector<8x8xf32> to vector<1x8x8xf32>
    %122 = vector.shape_cast %112 : vector<8x8xf32> to vector<1x8x8xf32>
    %123 = vector.shape_cast %113 : vector<8x8xf32> to vector<1x8x8xf32>
    %124 = vector.shape_cast %115 : vector<8x8xf32> to vector<1x8x8xf32>
    %125 = vector.shape_cast %116 : vector<8x8xf32> to vector<1x8x8xf32>
    %126 = vector.shape_cast %118 : vector<8x8xf32> to vector<1x8x8xf32>
    %127 = vector.shape_cast %119 : vector<8x8xf32> to vector<1x8x8xf32>
    %128 = tpu.concatenate %120, %121, %122, %123, %124, %125, %126, %127 in 0 : vector<1x8x8xf32>, vector<1x8x8xf32>, vector<1x8x8xf32>, vector<1x8x8xf32>, vector<1x8x8xf32>, vector<1x8x8xf32>, vector<1x8x8xf32>, vector<1x8x8xf32> -> vector<8x8x8xf32>
    "tpu.trace_start"() <{level = 10 : i32, message = "zqd,zkd->zqk"}> : () -> ()
    %cst_34 = arith.constant dense<0.000000e+00> : vector<8x8x8xf32>
    %129 = tpu.matmul %78, %103, %cst_34 {dimension_numbers = #tpu.dot_dimension_numbers<[2], [2], [1], [1], [0, 0, 0, 1, 1, 1], [0], [0]>} : vector<8x8x8xf32>, vector<8x8x8xf32>, vector<8x8x8xf32> -> vector<8x8x8xf32>
    "tpu.trace_stop"() : () -> ()
    %cst_35 = arith.constant 0.353553385 : f32
    %130 = vector.broadcast %cst_35 : f32 to vector<8x8x8xf32>
    %131 = arith.mulf %129, %130 : vector<8x8x8xf32>
    %132 = arith.addf %131, %50 : vector<8x8x8xf32>
    %cst_36 = arith.constant dense<0xFF800000> : vector<8x8xf32>
    %133 = vector.multi_reduction <maximumf>, %132, %cst_36 [2] : vector<8x8x8xf32> to vector<8x8xf32>
    %134 = vector.shape_cast %133 : vector<8x8xf32> to vector<8x8x1xf32>
    %135 = vector.broadcast %134 : vector<8x8x1xf32> to vector<8x8x8xf32>
    %136 = arith.subf %132, %135 : vector<8x8x8xf32>
    %137 = math.exp %136 : vector<8x8x8xf32>
    %cst_37 = arith.constant dense<0.000000e+00> : vector<8x8xf32>
    %138 = vector.multi_reduction <add>, %137, %cst_37 [2] : vector<8x8x8xf32> to vector<8x8xf32>
    %139 = vector.shape_cast %138 : vector<8x8xf32> to vector<8x8x1xf32>
    %140 = vector.broadcast %139 : vector<8x8x1xf32> to vector<8x8x8xf32>
    %141 = arith.divf %137, %140 : vector<8x8x8xf32>
    "tpu.trace_start"() <{level = 10 : i32, message = "zqk,zkd->zqd"}> : () -> ()
    %cst_38 = arith.constant dense<0.000000e+00> : vector<8x8x8xf32>
    %142 = tpu.matmul %141, %128, %cst_38 {dimension_numbers = #tpu.dot_dimension_numbers<[2], [1], [1], [2], [0, 0, 0, 1, 1, 2], [0], [0]>} : vector<8x8x8xf32>, vector<8x8x8xf32>, vector<8x8x8xf32> -> vector<8x8x8xf32>
    "tpu.trace_stop"() : () -> ()
    %143 = vector.extract_strided_slice %142 {offsets = [0, 0, 0], sizes = [1, 8, 8], strides = [1, 1, 1]} : vector<8x8x8xf32> to vector<1x8x8xf32>
    %144 = vector.shape_cast %143 : vector<1x8x8xf32> to vector<8x8xf32>
    %145 = vector.extract_strided_slice %142 {offsets = [2, 0, 0], sizes = [1, 8, 8], strides = [1, 1, 1]} : vector<8x8x8xf32> to vector<1x8x8xf32>
    %146 = vector.shape_cast %145 : vector<1x8x8xf32> to vector<8x8xf32>
    %147 = vector.extract_strided_slice %142 {offsets = [4, 0, 0], sizes = [1, 8, 8], strides = [1, 1, 1]} : vector<8x8x8xf32> to vector<1x8x8xf32>
    %148 = vector.shape_cast %147 : vector<1x8x8xf32> to vector<8x8xf32>
    %149 = vector.extract_strided_slice %142 {offsets = [6, 0, 0], sizes = [1, 8, 8], strides = [1, 1, 1]} : vector<8x8x8xf32> to vector<1x8x8xf32>
    %150 = vector.shape_cast %149 : vector<1x8x8xf32> to vector<8x8xf32>
    %151 = tpu.concatenate %144, %146, %148, %150 in 1 : vector<8x8xf32>, vector<8x8xf32>, vector<8x8xf32>, vector<8x8xf32> -> vector<8x32xf32>
    %152 = vector.extract_strided_slice %142 {offsets = [1, 0, 0], sizes = [1, 8, 8], strides = [1, 1, 1]} : vector<8x8x8xf32> to vector<1x8x8xf32>
    %153 = vector.shape_cast %152 : vector<1x8x8xf32> to vector<8x8xf32>
    %154 = vector.extract_strided_slice %142 {offsets = [3, 0, 0], sizes = [1, 8, 8], strides = [1, 1, 1]} : vector<8x8x8xf32> to vector<1x8x8xf32>
    %155 = vector.shape_cast %154 : vector<1x8x8xf32> to vector<8x8xf32>
    %156 = vector.extract_strided_slice %142 {offsets = [5, 0, 0], sizes = [1, 8, 8], strides = [1, 1, 1]} : vector<8x8x8xf32> to vector<1x8x8xf32>
    %157 = vector.shape_cast %156 : vector<1x8x8xf32> to vector<8x8xf32>
    %158 = vector.extract_strided_slice %142 {offsets = [7, 0, 0], sizes = [1, 8, 8], strides = [1, 1, 1]} : vector<8x8x8xf32> to vector<1x8x8xf32>
    %159 = vector.shape_cast %158 : vector<1x8x8xf32> to vector<8x8xf32>
    %160 = tpu.concatenate %153, %155, %157, %159 in 1 : vector<8x8xf32>, vector<8x8xf32>, vector<8x8xf32>, vector<8x8xf32> -> vector<8x32xf32>
    %161 = tpu.concatenate %151, %160 in 0 : vector<8x32xf32>, vector<8x32xf32> -> vector<16x32xf32>
    %c2_39 = arith.constant 2 : index
    %c0_40 = arith.constant 0 : index
    %c0_41 = arith.constant 0 : index
    %162 = vector.load %arg5[%c2_39, %c0_40, %c0_41] : memref<8x32x32xf32, #tpu.memory_space<vmem>>, vector<1x32x32xf32>
    %163 = vector.shape_cast %162 : vector<1x32x32xf32> to vector<32x32xf32>
    %cst_42 = arith.constant dense<0.000000e+00> : vector<16x32xf32>
    %164 = tpu.matmul %161, %163, %cst_42 {dimension_numbers = #tpu.dot_dimension_numbers<[1], [0], [0], [1], [0, 0, 1, 1], [], []>} : vector<16x32xf32>, vector<32x32xf32>, vector<16x32xf32> -> vector<16x32xf32>
    %c10 = arith.constant 10 : index
    %c0_43 = arith.constant 0 : index
    %165 = vector.load %arg6[%c10, %c0_43] : memref<27x32xf32, #tpu.memory_space<vmem>>, vector<1x32xf32>
    %166 = vector.broadcast %165 : vector<1x32xf32> to vector<16x32xf32>
    %167 = arith.addf %164, %166 : vector<16x32xf32>
    %168 = arith.addf %49, %167 : vector<16x32xf32>
    %cst_44 = arith.constant dense<0.000000e+00> : vector<16xf32>
    %169 = vector.multi_reduction <add>, %168, %cst_44 [1] : vector<16x32xf32> to vector<16xf32>
    %170 = vector.shape_cast %169 : vector<16xf32> to vector<16x1xf32>
    %cst_45 = arith.constant 3.200000e+01 : f32
    %171 = vector.broadcast %cst_45 : f32 to vector<16x1xf32>
    %172 = arith.divf %170, %171 : vector<16x1xf32>
    %173 = vector.broadcast %172 : vector<16x1xf32> to vector<16x32xf32>
    %174 = arith.subf %168, %173 : vector<16x32xf32>
    %175 = arith.mulf %174, %174 : vector<16x32xf32>
    %cst_46 = arith.constant dense<0.000000e+00> : vector<16xf32>
    %176 = vector.multi_reduction <add>, %175, %cst_46 [1] : vector<16x32xf32> to vector<16xf32>
    %177 = vector.shape_cast %176 : vector<16xf32> to vector<16x1xf32>
    %cst_47 = arith.constant 3.200000e+01 : f32
    %178 = vector.broadcast %cst_47 : f32 to vector<16x1xf32>
    %179 = arith.divf %177, %178 : vector<16x1xf32>
    %180 = vector.broadcast %172 : vector<16x1xf32> to vector<16x32xf32>
    %181 = arith.subf %168, %180 : vector<16x32xf32>
    %cst_48 = arith.constant 9.99999974E-6 : f32
    %182 = vector.broadcast %cst_48 : f32 to vector<16x1xf32>
    %183 = arith.addf %179, %182 : vector<16x1xf32>
    %184 = math.rsqrt %183 : vector<16x1xf32>
    %185 = vector.broadcast %184 : vector<16x1xf32> to vector<16x32xf32>
    %186 = arith.mulf %181, %185 : vector<16x32xf32>
    %c11 = arith.constant 11 : index
    %c0_49 = arith.constant 0 : index
    %187 = vector.load %arg6[%c11, %c0_49] : memref<27x32xf32, #tpu.memory_space<vmem>>, vector<1x32xf32>
    %188 = vector.broadcast %187 : vector<1x32xf32> to vector<16x32xf32>
    %189 = arith.mulf %186, %188 : vector<16x32xf32>
    %c12 = arith.constant 12 : index
    %c0_50 = arith.constant 0 : index
    %190 = vector.load %arg6[%c12, %c0_50] : memref<27x32xf32, #tpu.memory_space<vmem>>, vector<1x32xf32>
    %191 = vector.broadcast %190 : vector<1x32xf32> to vector<16x32xf32>
    %192 = arith.addf %189, %191 : vector<16x32xf32>
    %c3_51 = arith.constant 3 : index
    %c0_52 = arith.constant 0 : index
    %c0_53 = arith.constant 0 : index
    %193 = vector.load %arg5[%c3_51, %c0_52, %c0_53] : memref<8x32x32xf32, #tpu.memory_space<vmem>>, vector<1x32x32xf32>
    %194 = vector.shape_cast %193 : vector<1x32x32xf32> to vector<32x32xf32>
    %cst_54 = arith.constant dense<0.000000e+00> : vector<16x32xf32>
    %195 = tpu.matmul %192, %194, %cst_54 {dimension_numbers = #tpu.dot_dimension_numbers<[1], [0], [0], [1], [0, 0, 1, 1], [], []>} : vector<16x32xf32>, vector<32x32xf32>, vector<16x32xf32> -> vector<16x32xf32>
    %c13 = arith.constant 13 : index
    %c0_55 = arith.constant 0 : index
    %196 = vector.load %arg6[%c13, %c0_55] : memref<27x32xf32, #tpu.memory_space<vmem>>, vector<1x32xf32>
    %197 = vector.broadcast %196 : vector<1x32xf32> to vector<16x32xf32>
    %198 = arith.addf %195, %197 : vector<16x32xf32>
    %cst_56 = arith.constant 0.000000e+00 : f32
    %199 = vector.broadcast %cst_56 : f32 to vector<16x32xf32>
    %200 = arith.maximumf %198, %199 : vector<16x32xf32>
    %c4_57 = arith.constant 4 : index
    %c0_58 = arith.constant 0 : index
    %c0_59 = arith.constant 0 : index
    %201 = vector.load %arg5[%c4_57, %c0_58, %c0_59] : memref<8x32x32xf32, #tpu.memory_space<vmem>>, vector<1x32x32xf32>
    %202 = vector.shape_cast %201 : vector<1x32x32xf32> to vector<32x32xf32>
    %cst_60 = arith.constant dense<0.000000e+00> : vector<16x32xf32>
    %203 = tpu.matmul %200, %202, %cst_60 {dimension_numbers = #tpu.dot_dimension_numbers<[1], [0], [0], [1], [0, 0, 1, 1], [], []>} : vector<16x32xf32>, vector<32x32xf32>, vector<16x32xf32> -> vector<16x32xf32>
    %c14 = arith.constant 14 : index
    %c0_61 = arith.constant 0 : index
    %204 = vector.load %arg6[%c14, %c0_61] : memref<27x32xf32, #tpu.memory_space<vmem>>, vector<1x32xf32>
    %205 = vector.broadcast %204 : vector<1x32xf32> to vector<16x32xf32>
    %206 = arith.addf %203, %205 : vector<16x32xf32>
    %207 = arith.addf %192, %206 : vector<16x32xf32>
    %cst_62 = arith.constant dense<0.000000e+00> : vector<16xf32>
    %208 = vector.multi_reduction <add>, %207, %cst_62 [1] : vector<16x32xf32> to vector<16xf32>
    %209 = vector.shape_cast %208 : vector<16xf32> to vector<16x1xf32>
    %cst_63 = arith.constant 3.200000e+01 : f32
    %210 = vector.broadcast %cst_63 : f32 to vector<16x1xf32>
    %211 = arith.divf %209, %210 : vector<16x1xf32>
    %212 = vector.broadcast %211 : vector<16x1xf32> to vector<16x32xf32>
    %213 = arith.subf %207, %212 : vector<16x32xf32>
    %214 = arith.mulf %213, %213 : vector<16x32xf32>
    %cst_64 = arith.constant dense<0.000000e+00> : vector<16xf32>
    %215 = vector.multi_reduction <add>, %214, %cst_64 [1] : vector<16x32xf32> to vector<16xf32>
    %216 = vector.shape_cast %215 : vector<16xf32> to vector<16x1xf32>
    %cst_65 = arith.constant 3.200000e+01 : f32
    %217 = vector.broadcast %cst_65 : f32 to vector<16x1xf32>
    %218 = arith.divf %216, %217 : vector<16x1xf32>
    %219 = vector.broadcast %211 : vector<16x1xf32> to vector<16x32xf32>
    %220 = arith.subf %207, %219 : vector<16x32xf32>
    %cst_66 = arith.constant 9.99999974E-6 : f32
    %221 = vector.broadcast %cst_66 : f32 to vector<16x1xf32>
    %222 = arith.addf %218, %221 : vector<16x1xf32>
    %223 = math.rsqrt %222 : vector<16x1xf32>
    %224 = vector.broadcast %223 : vector<16x1xf32> to vector<16x32xf32>
    %225 = arith.mulf %220, %224 : vector<16x32xf32>
    %c15 = arith.constant 15 : index
    %c0_67 = arith.constant 0 : index
    %226 = vector.load %arg6[%c15, %c0_67] : memref<27x32xf32, #tpu.memory_space<vmem>>, vector<1x32xf32>
    %227 = vector.broadcast %226 : vector<1x32xf32> to vector<16x32xf32>
    %228 = arith.mulf %225, %227 : vector<16x32xf32>
    %c16 = arith.constant 16 : index
    %c0_68 = arith.constant 0 : index
    %229 = vector.load %arg6[%c16, %c0_68] : memref<27x32xf32, #tpu.memory_space<vmem>>, vector<1x32xf32>
    %230 = vector.broadcast %229 : vector<1x32xf32> to vector<16x32xf32>
    %231 = arith.addf %228, %230 : vector<16x32xf32>
    %c1_69 = arith.constant 1 : index
    %c0_70 = arith.constant 0 : index
    %c0_71 = arith.constant 0 : index
    %232 = vector.load %arg4[%c1_69, %c0_70, %c0_71] : memref<2x32x96xf32, #tpu.memory_space<vmem>>, vector<1x32x96xf32>
    %233 = vector.shape_cast %232 : vector<1x32x96xf32> to vector<32x96xf32>
    %cst_72 = arith.constant dense<0.000000e+00> : vector<16x96xf32>
    %234 = tpu.matmul %231, %233, %cst_72 {dimension_numbers = #tpu.dot_dimension_numbers<[1], [0], [0], [1], [0, 0, 1, 1], [], []>} : vector<16x32xf32>, vector<32x96xf32>, vector<16x96xf32> -> vector<16x96xf32>
    %235 = vector.extract_strided_slice %234 {offsets = [0, 0], sizes = [16, 32], strides = [1, 1]} : vector<16x96xf32> to vector<16x32xf32>
    %c17 = arith.constant 17 : index
    %c0_73 = arith.constant 0 : index
    %236 = vector.load %arg6[%c17, %c0_73] : memref<27x32xf32, #tpu.memory_space<vmem>>, vector<1x32xf32>
    %237 = vector.broadcast %236 : vector<1x32xf32> to vector<16x32xf32>
    %238 = arith.addf %235, %237 : vector<16x32xf32>
    %239 = vector.extract_strided_slice %238 {offsets = [0, 0], sizes = [16, 8], strides = [1, 1]} : vector<16x32xf32> to vector<16x8xf32>
    %240 = vector.extract_strided_slice %239 {offsets = [0, 0], sizes = [8, 8], strides = [1, 1]} : vector<16x8xf32> to vector<8x8xf32>
    %241 = vector.extract_strided_slice %239 {offsets = [8, 0], sizes = [8, 8], strides = [1, 1]} : vector<16x8xf32> to vector<8x8xf32>
    %242 = vector.extract_strided_slice %238 {offsets = [0, 8], sizes = [16, 8], strides = [1, 1]} : vector<16x32xf32> to vector<16x8xf32>
    %243 = vector.extract_strided_slice %242 {offsets = [0, 0], sizes = [8, 8], strides = [1, 1]} : vector<16x8xf32> to vector<8x8xf32>
    %244 = vector.extract_strided_slice %242 {offsets = [8, 0], sizes = [8, 8], strides = [1, 1]} : vector<16x8xf32> to vector<8x8xf32>
    %245 = vector.extract_strided_slice %238 {offsets = [0, 16], sizes = [16, 8], strides = [1, 1]} : vector<16x32xf32> to vector<16x8xf32>
    %246 = vector.extract_strided_slice %245 {offsets = [0, 0], sizes = [8, 8], strides = [1, 1]} : vector<16x8xf32> to vector<8x8xf32>
    %247 = vector.extract_strided_slice %245 {offsets = [8, 0], sizes = [8, 8], strides = [1, 1]} : vector<16x8xf32> to vector<8x8xf32>
    %248 = vector.extract_strided_slice %238 {offsets = [0, 24], sizes = [16, 8], strides = [1, 1]} : vector<16x32xf32> to vector<16x8xf32>
    %249 = vector.extract_strided_slice %248 {offsets = [0, 0], sizes = [8, 8], strides = [1, 1]} : vector<16x8xf32> to vector<8x8xf32>
    %250 = vector.extract_strided_slice %248 {offsets = [8, 0], sizes = [8, 8], strides = [1, 1]} : vector<16x8xf32> to vector<8x8xf32>
    %251 = vector.shape_cast %240 : vector<8x8xf32> to vector<1x8x8xf32>
    %252 = vector.shape_cast %241 : vector<8x8xf32> to vector<1x8x8xf32>
    %253 = vector.shape_cast %243 : vector<8x8xf32> to vector<1x8x8xf32>
    %254 = vector.shape_cast %244 : vector<8x8xf32> to vector<1x8x8xf32>
    %255 = vector.shape_cast %246 : vector<8x8xf32> to vector<1x8x8xf32>
    %256 = vector.shape_cast %247 : vector<8x8xf32> to vector<1x8x8xf32>
    %257 = vector.shape_cast %249 : vector<8x8xf32> to vector<1x8x8xf32>
    %258 = vector.shape_cast %250 : vector<8x8xf32> to vector<1x8x8xf32>
    %259 = tpu.concatenate %251, %252, %253, %254, %255, %256, %257, %258 in 0 : vector<1x8x8xf32>, vector<1x8x8xf32>, vector<1x8x8xf32>, vector<1x8x8xf32>, vector<1x8x8xf32>, vector<1x8x8xf32>, vector<1x8x8xf32>, vector<1x8x8xf32> -> vector<8x8x8xf32>
    %260 = vector.extract_strided_slice %234 {offsets = [0, 32], sizes = [16, 32], strides = [1, 1]} : vector<16x96xf32> to vector<16x32xf32>
    %c18 = arith.constant 18 : index
    %c0_74 = arith.constant 0 : index
    %261 = vector.load %arg6[%c18, %c0_74] : memref<27x32xf32, #tpu.memory_space<vmem>>, vector<1x32xf32>
    %262 = vector.broadcast %261 : vector<1x32xf32> to vector<16x32xf32>
    %263 = arith.addf %260, %262 : vector<16x32xf32>
    %264 = vector.extract_strided_slice %263 {offsets = [0, 0], sizes = [16, 8], strides = [1, 1]} : vector<16x32xf32> to vector<16x8xf32>
    %265 = vector.extract_strided_slice %264 {offsets = [0, 0], sizes = [8, 8], strides = [1, 1]} : vector<16x8xf32> to vector<8x8xf32>
    %266 = vector.extract_strided_slice %264 {offsets = [8, 0], sizes = [8, 8], strides = [1, 1]} : vector<16x8xf32> to vector<8x8xf32>
    %267 = vector.extract_strided_slice %263 {offsets = [0, 8], sizes = [16, 8], strides = [1, 1]} : vector<16x32xf32> to vector<16x8xf32>
    %268 = vector.extract_strided_slice %267 {offsets = [0, 0], sizes = [8, 8], strides = [1, 1]} : vector<16x8xf32> to vector<8x8xf32>
    %269 = vector.extract_strided_slice %267 {offsets = [8, 0], sizes = [8, 8], strides = [1, 1]} : vector<16x8xf32> to vector<8x8xf32>
    %270 = vector.extract_strided_slice %263 {offsets = [0, 16], sizes = [16, 8], strides = [1, 1]} : vector<16x32xf32> to vector<16x8xf32>
    %271 = vector.extract_strided_slice %270 {offsets = [0, 0], sizes = [8, 8], strides = [1, 1]} : vector<16x8xf32> to vector<8x8xf32>
    %272 = vector.extract_strided_slice %270 {offsets = [8, 0], sizes = [8, 8], strides = [1, 1]} : vector<16x8xf32> to vector<8x8xf32>
    %273 = vector.extract_strided_slice %263 {offsets = [0, 24], sizes = [16, 8], strides = [1, 1]} : vector<16x32xf32> to vector<16x8xf32>
    %274 = vector.extract_strided_slice %273 {offsets = [0, 0], sizes = [8, 8], strides = [1, 1]} : vector<16x8xf32> to vector<8x8xf32>
    %275 = vector.extract_strided_slice %273 {offsets = [8, 0], sizes = [8, 8], strides = [1, 1]} : vector<16x8xf32> to vector<8x8xf32>
    %276 = vector.shape_cast %265 : vector<8x8xf32> to vector<1x8x8xf32>
    %277 = vector.shape_cast %266 : vector<8x8xf32> to vector<1x8x8xf32>
    %278 = vector.shape_cast %268 : vector<8x8xf32> to vector<1x8x8xf32>
    %279 = vector.shape_cast %269 : vector<8x8xf32> to vector<1x8x8xf32>
    %280 = vector.shape_cast %271 : vector<8x8xf32> to vector<1x8x8xf32>
    %281 = vector.shape_cast %272 : vector<8x8xf32> to vector<1x8x8xf32>
    %282 = vector.shape_cast %274 : vector<8x8xf32> to vector<1x8x8xf32>
    %283 = vector.shape_cast %275 : vector<8x8xf32> to vector<1x8x8xf32>
    %284 = tpu.concatenate %276, %277, %278, %279, %280, %281, %282, %283 in 0 : vector<1x8x8xf32>, vector<1x8x8xf32>, vector<1x8x8xf32>, vector<1x8x8xf32>, vector<1x8x8xf32>, vector<1x8x8xf32>, vector<1x8x8xf32>, vector<1x8x8xf32> -> vector<8x8x8xf32>
    %285 = vector.extract_strided_slice %234 {offsets = [0, 64], sizes = [16, 32], strides = [1, 1]} : vector<16x96xf32> to vector<16x32xf32>
    %c19 = arith.constant 19 : index
    %c0_75 = arith.constant 0 : index
    %286 = vector.load %arg6[%c19, %c0_75] : memref<27x32xf32, #tpu.memory_space<vmem>>, vector<1x32xf32>
    %287 = vector.broadcast %286 : vector<1x32xf32> to vector<16x32xf32>
    %288 = arith.addf %285, %287 : vector<16x32xf32>
    %289 = vector.extract_strided_slice %288 {offsets = [0, 0], sizes = [16, 8], strides = [1, 1]} : vector<16x32xf32> to vector<16x8xf32>
    %290 = vector.extract_strided_slice %289 {offsets = [0, 0], sizes = [8, 8], strides = [1, 1]} : vector<16x8xf32> to vector<8x8xf32>
    %291 = vector.extract_strided_slice %289 {offsets = [8, 0], sizes = [8, 8], strides = [1, 1]} : vector<16x8xf32> to vector<8x8xf32>
    %292 = vector.extract_strided_slice %288 {offsets = [0, 8], sizes = [16, 8], strides = [1, 1]} : vector<16x32xf32> to vector<16x8xf32>
    %293 = vector.extract_strided_slice %292 {offsets = [0, 0], sizes = [8, 8], strides = [1, 1]} : vector<16x8xf32> to vector<8x8xf32>
    %294 = vector.extract_strided_slice %292 {offsets = [8, 0], sizes = [8, 8], strides = [1, 1]} : vector<16x8xf32> to vector<8x8xf32>
    %295 = vector.extract_strided_slice %288 {offsets = [0, 16], sizes = [16, 8], strides = [1, 1]} : vector<16x32xf32> to vector<16x8xf32>
    %296 = vector.extract_strided_slice %295 {offsets = [0, 0], sizes = [8, 8], strides = [1, 1]} : vector<16x8xf32> to vector<8x8xf32>
    %297 = vector.extract_strided_slice %295 {offsets = [8, 0], sizes = [8, 8], strides = [1, 1]} : vector<16x8xf32> to vector<8x8xf32>
    %298 = vector.extract_strided_slice %288 {offsets = [0, 24], sizes = [16, 8], strides = [1, 1]} : vector<16x32xf32> to vector<16x8xf32>
    %299 = vector.extract_strided_slice %298 {offsets = [0, 0], sizes = [8, 8], strides = [1, 1]} : vector<16x8xf32> to vector<8x8xf32>
    %300 = vector.extract_strided_slice %298 {offsets = [8, 0], sizes = [8, 8], strides = [1, 1]} : vector<16x8xf32> to vector<8x8xf32>
    %301 = vector.shape_cast %290 : vector<8x8xf32> to vector<1x8x8xf32>
    %302 = vector.shape_cast %291 : vector<8x8xf32> to vector<1x8x8xf32>
    %303 = vector.shape_cast %293 : vector<8x8xf32> to vector<1x8x8xf32>
    %304 = vector.shape_cast %294 : vector<8x8xf32> to vector<1x8x8xf32>
    %305 = vector.shape_cast %296 : vector<8x8xf32> to vector<1x8x8xf32>
    %306 = vector.shape_cast %297 : vector<8x8xf32> to vector<1x8x8xf32>
    %307 = vector.shape_cast %299 : vector<8x8xf32> to vector<1x8x8xf32>
    %308 = vector.shape_cast %300 : vector<8x8xf32> to vector<1x8x8xf32>
    %309 = tpu.concatenate %301, %302, %303, %304, %305, %306, %307, %308 in 0 : vector<1x8x8xf32>, vector<1x8x8xf32>, vector<1x8x8xf32>, vector<1x8x8xf32>, vector<1x8x8xf32>, vector<1x8x8xf32>, vector<1x8x8xf32>, vector<1x8x8xf32> -> vector<8x8x8xf32>
    "tpu.trace_start"() <{level = 10 : i32, message = "zqd,zkd->zqk"}> : () -> ()
    %cst_76 = arith.constant dense<0.000000e+00> : vector<8x8x8xf32>
    %310 = tpu.matmul %259, %284, %cst_76 {dimension_numbers = #tpu.dot_dimension_numbers<[2], [2], [1], [1], [0, 0, 0, 1, 1, 1], [0], [0]>} : vector<8x8x8xf32>, vector<8x8x8xf32>, vector<8x8x8xf32> -> vector<8x8x8xf32>
    "tpu.trace_stop"() : () -> ()
    %cst_77 = arith.constant 0.353553385 : f32
    %311 = vector.broadcast %cst_77 : f32 to vector<8x8x8xf32>
    %312 = arith.mulf %310, %311 : vector<8x8x8xf32>
    %313 = arith.addf %312, %50 : vector<8x8x8xf32>
    %cst_78 = arith.constant dense<0xFF800000> : vector<8x8xf32>
    %314 = vector.multi_reduction <maximumf>, %313, %cst_78 [2] : vector<8x8x8xf32> to vector<8x8xf32>
    %315 = vector.shape_cast %314 : vector<8x8xf32> to vector<8x8x1xf32>
    %316 = vector.broadcast %315 : vector<8x8x1xf32> to vector<8x8x8xf32>
    %317 = arith.subf %313, %316 : vector<8x8x8xf32>
    %318 = math.exp %317 : vector<8x8x8xf32>
    %cst_79 = arith.constant dense<0.000000e+00> : vector<8x8xf32>
    %319 = vector.multi_reduction <add>, %318, %cst_79 [2] : vector<8x8x8xf32> to vector<8x8xf32>
    %320 = vector.shape_cast %319 : vector<8x8xf32> to vector<8x8x1xf32>
    %321 = vector.broadcast %320 : vector<8x8x1xf32> to vector<8x8x8xf32>
    %322 = arith.divf %318, %321 : vector<8x8x8xf32>
    "tpu.trace_start"() <{level = 10 : i32, message = "zqk,zkd->zqd"}> : () -> ()
    %cst_80 = arith.constant dense<0.000000e+00> : vector<8x8x8xf32>
    %323 = tpu.matmul %322, %309, %cst_80 {dimension_numbers = #tpu.dot_dimension_numbers<[2], [1], [1], [2], [0, 0, 0, 1, 1, 2], [0], [0]>} : vector<8x8x8xf32>, vector<8x8x8xf32>, vector<8x8x8xf32> -> vector<8x8x8xf32>
    "tpu.trace_stop"() : () -> ()
    %324 = vector.extract_strided_slice %323 {offsets = [0, 0, 0], sizes = [1, 8, 8], strides = [1, 1, 1]} : vector<8x8x8xf32> to vector<1x8x8xf32>
    %325 = vector.shape_cast %324 : vector<1x8x8xf32> to vector<8x8xf32>
    %326 = vector.extract_strided_slice %323 {offsets = [2, 0, 0], sizes = [1, 8, 8], strides = [1, 1, 1]} : vector<8x8x8xf32> to vector<1x8x8xf32>
    %327 = vector.shape_cast %326 : vector<1x8x8xf32> to vector<8x8xf32>
    %328 = vector.extract_strided_slice %323 {offsets = [4, 0, 0], sizes = [1, 8, 8], strides = [1, 1, 1]} : vector<8x8x8xf32> to vector<1x8x8xf32>
    %329 = vector.shape_cast %328 : vector<1x8x8xf32> to vector<8x8xf32>
    %330 = vector.extract_strided_slice %323 {offsets = [6, 0, 0], sizes = [1, 8, 8], strides = [1, 1, 1]} : vector<8x8x8xf32> to vector<1x8x8xf32>
    %331 = vector.shape_cast %330 : vector<1x8x8xf32> to vector<8x8xf32>
    %332 = tpu.concatenate %325, %327, %329, %331 in 1 : vector<8x8xf32>, vector<8x8xf32>, vector<8x8xf32>, vector<8x8xf32> -> vector<8x32xf32>
    %333 = vector.extract_strided_slice %323 {offsets = [1, 0, 0], sizes = [1, 8, 8], strides = [1, 1, 1]} : vector<8x8x8xf32> to vector<1x8x8xf32>
    %334 = vector.shape_cast %333 : vector<1x8x8xf32> to vector<8x8xf32>
    %335 = vector.extract_strided_slice %323 {offsets = [3, 0, 0], sizes = [1, 8, 8], strides = [1, 1, 1]} : vector<8x8x8xf32> to vector<1x8x8xf32>
    %336 = vector.shape_cast %335 : vector<1x8x8xf32> to vector<8x8xf32>
    %337 = vector.extract_strided_slice %323 {offsets = [5, 0, 0], sizes = [1, 8, 8], strides = [1, 1, 1]} : vector<8x8x8xf32> to vector<1x8x8xf32>
    %338 = vector.shape_cast %337 : vector<1x8x8xf32> to vector<8x8xf32>
    %339 = vector.extract_strided_slice %323 {offsets = [7, 0, 0], sizes = [1, 8, 8], strides = [1, 1, 1]} : vector<8x8x8xf32> to vector<1x8x8xf32>
    %340 = vector.shape_cast %339 : vector<1x8x8xf32> to vector<8x8xf32>
    %341 = tpu.concatenate %334, %336, %338, %340 in 1 : vector<8x8xf32>, vector<8x8xf32>, vector<8x8xf32>, vector<8x8xf32> -> vector<8x32xf32>
    %342 = tpu.concatenate %332, %341 in 0 : vector<8x32xf32>, vector<8x32xf32> -> vector<16x32xf32>
    %c5 = arith.constant 5 : index
    %c0_81 = arith.constant 0 : index
    %c0_82 = arith.constant 0 : index
    %343 = vector.load %arg5[%c5, %c0_81, %c0_82] : memref<8x32x32xf32, #tpu.memory_space<vmem>>, vector<1x32x32xf32>
    %344 = vector.shape_cast %343 : vector<1x32x32xf32> to vector<32x32xf32>
    %cst_83 = arith.constant dense<0.000000e+00> : vector<16x32xf32>
    %345 = tpu.matmul %342, %344, %cst_83 {dimension_numbers = #tpu.dot_dimension_numbers<[1], [0], [0], [1], [0, 0, 1, 1], [], []>} : vector<16x32xf32>, vector<32x32xf32>, vector<16x32xf32> -> vector<16x32xf32>
    %c20 = arith.constant 20 : index
    %c0_84 = arith.constant 0 : index
    %346 = vector.load %arg6[%c20, %c0_84] : memref<27x32xf32, #tpu.memory_space<vmem>>, vector<1x32xf32>
    %347 = vector.broadcast %346 : vector<1x32xf32> to vector<16x32xf32>
    %348 = arith.addf %345, %347 : vector<16x32xf32>
    %349 = arith.addf %231, %348 : vector<16x32xf32>
    %cst_85 = arith.constant dense<0.000000e+00> : vector<16xf32>
    %350 = vector.multi_reduction <add>, %349, %cst_85 [1] : vector<16x32xf32> to vector<16xf32>
    %351 = vector.shape_cast %350 : vector<16xf32> to vector<16x1xf32>
    %cst_86 = arith.constant 3.200000e+01 : f32
    %352 = vector.broadcast %cst_86 : f32 to vector<16x1xf32>
    %353 = arith.divf %351, %352 : vector<16x1xf32>
    %354 = vector.broadcast %353 : vector<16x1xf32> to vector<16x32xf32>
    %355 = arith.subf %349, %354 : vector<16x32xf32>
    %356 = arith.mulf %355, %355 : vector<16x32xf32>
    %cst_87 = arith.constant dense<0.000000e+00> : vector<16xf32>
    %357 = vector.multi_reduction <add>, %356, %cst_87 [1] : vector<16x32xf32> to vector<16xf32>
    %358 = vector.shape_cast %357 : vector<16xf32> to vector<16x1xf32>
    %cst_88 = arith.constant 3.200000e+01 : f32
    %359 = vector.broadcast %cst_88 : f32 to vector<16x1xf32>
    %360 = arith.divf %358, %359 : vector<16x1xf32>
    %361 = vector.broadcast %353 : vector<16x1xf32> to vector<16x32xf32>
    %362 = arith.subf %349, %361 : vector<16x32xf32>
    %cst_89 = arith.constant 9.99999974E-6 : f32
    %363 = vector.broadcast %cst_89 : f32 to vector<16x1xf32>
    %364 = arith.addf %360, %363 : vector<16x1xf32>
    %365 = math.rsqrt %364 : vector<16x1xf32>
    %366 = vector.broadcast %365 : vector<16x1xf32> to vector<16x32xf32>
    %367 = arith.mulf %362, %366 : vector<16x32xf32>
    %c21 = arith.constant 21 : index
    %c0_90 = arith.constant 0 : index
    %368 = vector.load %arg6[%c21, %c0_90] : memref<27x32xf32, #tpu.memory_space<vmem>>, vector<1x32xf32>
    %369 = vector.broadcast %368 : vector<1x32xf32> to vector<16x32xf32>
    %370 = arith.mulf %367, %369 : vector<16x32xf32>
    %c22 = arith.constant 22 : index
    %c0_91 = arith.constant 0 : index
    %371 = vector.load %arg6[%c22, %c0_91] : memref<27x32xf32, #tpu.memory_space<vmem>>, vector<1x32xf32>
    %372 = vector.broadcast %371 : vector<1x32xf32> to vector<16x32xf32>
    %373 = arith.addf %370, %372 : vector<16x32xf32>
    %c6 = arith.constant 6 : index
    %c0_92 = arith.constant 0 : index
    %c0_93 = arith.constant 0 : index
    %374 = vector.load %arg5[%c6, %c0_92, %c0_93] : memref<8x32x32xf32, #tpu.memory_space<vmem>>, vector<1x32x32xf32>
    %375 = vector.shape_cast %374 : vector<1x32x32xf32> to vector<32x32xf32>
    %cst_94 = arith.constant dense<0.000000e+00> : vector<16x32xf32>
    %376 = tpu.matmul %373, %375, %cst_94 {dimension_numbers = #tpu.dot_dimension_numbers<[1], [0], [0], [1], [0, 0, 1, 1], [], []>} : vector<16x32xf32>, vector<32x32xf32>, vector<16x32xf32> -> vector<16x32xf32>
    %c23 = arith.constant 23 : index
    %c0_95 = arith.constant 0 : index
    %377 = vector.load %arg6[%c23, %c0_95] : memref<27x32xf32, #tpu.memory_space<vmem>>, vector<1x32xf32>
    %378 = vector.broadcast %377 : vector<1x32xf32> to vector<16x32xf32>
    %379 = arith.addf %376, %378 : vector<16x32xf32>
    %cst_96 = arith.constant 0.000000e+00 : f32
    %380 = vector.broadcast %cst_96 : f32 to vector<16x32xf32>
    %381 = arith.maximumf %379, %380 : vector<16x32xf32>
    %c7_97 = arith.constant 7 : index
    %c0_98 = arith.constant 0 : index
    %c0_99 = arith.constant 0 : index
    %382 = vector.load %arg5[%c7_97, %c0_98, %c0_99] : memref<8x32x32xf32, #tpu.memory_space<vmem>>, vector<1x32x32xf32>
    %383 = vector.shape_cast %382 : vector<1x32x32xf32> to vector<32x32xf32>
    %cst_100 = arith.constant dense<0.000000e+00> : vector<16x32xf32>
    %384 = tpu.matmul %381, %383, %cst_100 {dimension_numbers = #tpu.dot_dimension_numbers<[1], [0], [0], [1], [0, 0, 1, 1], [], []>} : vector<16x32xf32>, vector<32x32xf32>, vector<16x32xf32> -> vector<16x32xf32>
    %c24 = arith.constant 24 : index
    %c0_101 = arith.constant 0 : index
    %385 = vector.load %arg6[%c24, %c0_101] : memref<27x32xf32, #tpu.memory_space<vmem>>, vector<1x32xf32>
    %386 = vector.broadcast %385 : vector<1x32xf32> to vector<16x32xf32>
    %387 = arith.addf %384, %386 : vector<16x32xf32>
    %388 = arith.addf %373, %387 : vector<16x32xf32>
    %cst_102 = arith.constant dense<0.000000e+00> : vector<16xf32>
    %389 = vector.multi_reduction <add>, %388, %cst_102 [1] : vector<16x32xf32> to vector<16xf32>
    %390 = vector.shape_cast %389 : vector<16xf32> to vector<16x1xf32>
    %cst_103 = arith.constant 3.200000e+01 : f32
    %391 = vector.broadcast %cst_103 : f32 to vector<16x1xf32>
    %392 = arith.divf %390, %391 : vector<16x1xf32>
    %393 = vector.broadcast %392 : vector<16x1xf32> to vector<16x32xf32>
    %394 = arith.subf %388, %393 : vector<16x32xf32>
    %395 = arith.mulf %394, %394 : vector<16x32xf32>
    %cst_104 = arith.constant dense<0.000000e+00> : vector<16xf32>
    %396 = vector.multi_reduction <add>, %395, %cst_104 [1] : vector<16x32xf32> to vector<16xf32>
    %397 = vector.shape_cast %396 : vector<16xf32> to vector<16x1xf32>
    %cst_105 = arith.constant 3.200000e+01 : f32
    %398 = vector.broadcast %cst_105 : f32 to vector<16x1xf32>
    %399 = arith.divf %397, %398 : vector<16x1xf32>
    %400 = vector.broadcast %392 : vector<16x1xf32> to vector<16x32xf32>
    %401 = arith.subf %388, %400 : vector<16x32xf32>
    %cst_106 = arith.constant 9.99999974E-6 : f32
    %402 = vector.broadcast %cst_106 : f32 to vector<16x1xf32>
    %403 = arith.addf %399, %402 : vector<16x1xf32>
    %404 = math.rsqrt %403 : vector<16x1xf32>
    %405 = vector.broadcast %404 : vector<16x1xf32> to vector<16x32xf32>
    %406 = arith.mulf %401, %405 : vector<16x32xf32>
    %c25 = arith.constant 25 : index
    %c0_107 = arith.constant 0 : index
    %407 = vector.load %arg6[%c25, %c0_107] : memref<27x32xf32, #tpu.memory_space<vmem>>, vector<1x32xf32>
    %408 = vector.broadcast %407 : vector<1x32xf32> to vector<16x32xf32>
    %409 = arith.mulf %406, %408 : vector<16x32xf32>
    %c26 = arith.constant 26 : index
    %c0_108 = arith.constant 0 : index
    %410 = vector.load %arg6[%c26, %c0_108] : memref<27x32xf32, #tpu.memory_space<vmem>>, vector<1x32xf32>
    %411 = vector.broadcast %410 : vector<1x32xf32> to vector<16x32xf32>
    %412 = arith.addf %409, %411 : vector<16x32xf32>
    %cst_109 = arith.constant dense<0.000000e+00> : vector<16xf32>
    %413 = vector.multi_reduction <add>, %412, %cst_109 [1] : vector<16x32xf32> to vector<16xf32>
    %414 = vector.shape_cast %413 : vector<16xf32> to vector<16x1xf32>
    %cst_110 = arith.constant 3.200000e+01 : f32
    %415 = vector.broadcast %cst_110 : f32 to vector<16x1xf32>
    %416 = arith.divf %414, %415 : vector<16x1xf32>
    %417 = vector.broadcast %416 : vector<16x1xf32> to vector<16x32xf32>
    %418 = arith.subf %412, %417 : vector<16x32xf32>
    %419 = arith.mulf %418, %418 : vector<16x32xf32>
    %cst_111 = arith.constant dense<0.000000e+00> : vector<16xf32>
    %420 = vector.multi_reduction <add>, %419, %cst_111 [1] : vector<16x32xf32> to vector<16xf32>
    %421 = vector.shape_cast %420 : vector<16xf32> to vector<16x1xf32>
    %cst_112 = arith.constant 3.200000e+01 : f32
    %422 = vector.broadcast %cst_112 : f32 to vector<16x1xf32>
    %423 = arith.divf %421, %422 : vector<16x1xf32>
    %424 = vector.broadcast %416 : vector<16x1xf32> to vector<16x32xf32>
    %425 = arith.subf %412, %424 : vector<16x32xf32>
    %cst_113 = arith.constant 9.99999974E-6 : f32
    %426 = vector.broadcast %cst_113 : f32 to vector<16x1xf32>
    %427 = arith.addf %423, %426 : vector<16x1xf32>
    %428 = math.rsqrt %427 : vector<16x1xf32>
    %429 = vector.broadcast %428 : vector<16x1xf32> to vector<16x32xf32>
    %430 = arith.mulf %425, %429 : vector<16x32xf32>
    %c5_114 = arith.constant 5 : index
    %c0_115 = arith.constant 0 : index
    %431 = vector.load %arg6[%c5_114, %c0_115] : memref<27x32xf32, #tpu.memory_space<vmem>>, vector<1x32xf32>
    %432 = vector.broadcast %431 : vector<1x32xf32> to vector<16x32xf32>
    %433 = arith.mulf %430, %432 : vector<16x32xf32>
    %c6_116 = arith.constant 6 : index
    %c0_117 = arith.constant 0 : index
    %434 = vector.load %arg6[%c6_116, %c0_117] : memref<27x32xf32, #tpu.memory_space<vmem>>, vector<1x32xf32>
    %435 = vector.broadcast %434 : vector<1x32xf32> to vector<16x32xf32>
    %436 = arith.addf %433, %435 : vector<16x32xf32>
    %c0_118 = arith.constant 0 : index
    %c0_119 = arith.constant 0 : index
    %437 = vector.load %arg7[%c0_118, %c0_119] : memref<16x32xf32, #tpu.memory_space<vmem>>, vector<16x32xf32>
    tpu.vector_store %arg7[%c0_118, %c0_119], %436 {strides = array<i32>} : memref<16x32xf32, #tpu.memory_space<vmem>>, vector<16x32xf32>,
    return
  }
  func.func @transform_0(%arg0: i32) -> (i32, i32, i32) {
    %c0_i32 = arith.constant 0 : i32
    %c0_i32_0 = arith.constant 0 : i32
    %c0_i32_1 = arith.constant 0 : i32
    %c0_i32_2 = arith.constant 0 : i32
    return %c0_i32, %c0_i32_0, %c0_i32_1 : i32, i32, i32
  }
  func.func @transform_1(%arg0: i32) -> (i32, i32, i32) {
    %c0_i32 = arith.constant 0 : i32
    %c0_i32_0 = arith.constant 0 : i32
    %c0_i32_1 = arith.constant 0 : i32
    %c0_i32_2 = arith.constant 0 : i32
    return %c0_i32, %c0_i32_0, %c0_i32_1 : i32, i32, i32
  }
  func.func @transform_2(%arg0: i32) -> (i32, i32) {
    %c0_i32 = arith.constant 0 : i32
    %c0_i32_0 = arith.constant 0 : i32
    %c0_i32_1 = arith.constant 0 : i32
    return %c0_i32, %c0_i32_0 : i32, i32
  }
  func.func @transform_3(%arg0: i32) -> (i32, i32, i32) {
    %c0_i32 = arith.constant 0 : i32
    %c0_i32_0 = arith.constant 0 : i32
    %c0_i32_1 = arith.constant 0 : i32
    %c0_i32_2 = arith.constant 0 : i32
    return %c0_i32, %c0_i32_0, %c0_i32_1 : i32, i32, i32
  }
  func.func @transform_4(%arg0: i32) -> (i32, i32, i32) {
    %c0_i32 = arith.constant 0 : i32
    %c0_i32_0 = arith.constant 0 : i32
    %c0_i32_1 = arith.constant 0 : i32
    %c0_i32_2 = arith.constant 0 : i32
    return %c0_i32, %c0_i32_0, %c0_i32_1 : i32, i32, i32
  }
  func.func @transform_5(%arg0: i32) -> (i32, i32) {
    %c0_i32 = arith.constant 0 : i32
    %c0_i32_0 = arith.constant 0 : i32
    %c0_i32_1 = arith.constant 0 : i32
    return %c0_i32, %c0_i32_0 : i32, i32
  }
  func.func @transform_6(%arg0: i32) -> (i32, i32) {
    %c0_i32 = arith.constant 0 : i32
    %c0_i32_0 = arith.constant 0 : i32
    %c0_i32_1 = arith.constant 0 : i32
    return %c0_i32, %c0_i32_0 : i32, i32
  }
}

</mosaic_0001>

<llo_original>
// kernel: transformer_encoder.1
$region0: #{transformer_encoder.1}
  #allocation0 [shape = 'u32[]', space=smem, size = 0x4, offset = 0x4, fixed_abs, tag = 'smem constant byte address 0x4 - core index']
  #allocation1 [shape = 'u32[144,128]{1,0:T(1,128)}', space=vmem, size = 0x12000, scoped, tag = 'internal scratch']
  %s0 = inlined_call_operand.vmem [shape: f32[2,16,8], index: 0, kind: input, shape index: {}]
  %s1 = inlined_call_operand.vmem [shape: f32[8,8,8], index: 1, kind: input, shape index: {}]
  %s2 = inlined_call_operand.vmem [shape: f32[16,32], index: 2, kind: input, shape index: {}]
  %s3 = inlined_call_operand.vmem [shape: f32[2,32,96], index: 3, kind: input, shape index: {}]
  %s4 = inlined_call_operand.hbm [shape: f32[8,32,32], index: 4, kind: input, shape index: {}]
  %s5 = inlined_call_operand.vmem [shape: f32[27,32], index: 5, kind: input, shape index: {}]
  %s6 = inlined_call_operand.hbm [shape: f32[16,32], index: 6, kind: output, shape index: {}]
  %s7 = sld [smem:[#allocation0]]
  $region38: #{transformer_encoder.1} parent=0
    _
  %s9 = ssub.s32 1, %s7
  %s10 = scalar_select 0, %s9, %s7
  $region1: #{transformer_encoder.1} parent=0
    #allocation2 [shape = 'u8[131072]{0}', space=vmem, size = 0x20000, scoped, tag = 'input window, operand 4, single buffered']
    #allocation3 [shape = 's32[1]{0}', space=sflag, size = 0x4, scoped, tag = 'scoped memory for transformer_encoder.1']
    #allocation4 [shape = 's32[1]{0}', space=sflag, size = 0x4, scoped, tag = 'scoped memory for transformer_encoder.1']
    #allocation5 [shape = 'u8[8192]{0}', space=vmem, size = 0x2000, scoped, tag = 'output window, operand 0, single buffered']
    %11 = vsyncpa [#allocation3], 0
    %12 = vsyncpa [#allocation4], 0
    // Predicated region
    $region2: #{transformer_encoder.1} parent=1 // pred_check
      _
    $region3: #{transformer_encoder.1} parent=1 // pred_check_branch
      %14 = sbr.rel (0) target = $region5
    $region4: #{transformer_encoder.1} parent=1 // pred_region
      _
    $region5: #{transformer_encoder.1} parent=1 // pred_fallthru
      _
    // Predicated region
    $region6: #{transformer_encoder.1} parent=1 // pred_check
      _
    $region7: #{transformer_encoder.1} parent=1 // pred_check_branch
      %16 = sbr.rel (0) target = $region9
    $region8: #{transformer_encoder.1} parent=1 // pred_region
      _
    $region9: #{transformer_encoder.1} parent=1 // pred_fallthru
      _
    // Predicated region
    $region10: #{transformer_encoder.1} parent=1 // pred_check
      _
    $region11: #{transformer_encoder.1} parent=1 // pred_check_branch
      %18 = sbr.rel (0) target = $region13
    $region12: #{transformer_encoder.1} parent=1 // pred_region
      _
    $region13: #{transformer_encoder.1} parent=1 // pred_fallthru
      _
    // Predicated region
    $region14: #{transformer_encoder.1} parent=1 // pred_check
      _
    $region15: #{transformer_encoder.1} parent=1 // pred_check_branch
      %20 = sbr.rel (0) target = $region17
    $region16: #{transformer_encoder.1} parent=1 // pred_region
      _
    $region17: #{transformer_encoder.1} parent=1 // pred_fallthru
      _
    // Predicated region
    $region18: #{transformer_encoder.1} parent=1 // pred_check
      _
    $region19: #{transformer_encoder.1} parent=1 // pred_check_branch
      %22 = sbr.rel (0) target = $region21
    $region20: #{transformer_encoder.1} parent=1 // pred_region
      %s24 = ssub.s32 4096, 4096
      %25 = vsyncadd [#allocation3], %s24
      %s26 = sshll.u32 [#allocation2], 4
      %s27 = int_to_ptr.vmem [resolvable:$true] %s26
      %32 = dma.hbm_to_vmem [thread:$0]  %s4, 4096, %s27, [#allocation3], 128, 128, 8
    $region21: #{transformer_encoder.1} parent=1 // pred_fallthru
      _
    // Predicated region
    $region22: #{transformer_encoder.1} parent=1 // pred_check
      _
    $region23: #{transformer_encoder.1} parent=1 // pred_check_branch
      %34 = sbr.rel (0) target = $region25
    $region24: #{transformer_encoder.1} parent=1 // pred_region
      _
    $region25: #{transformer_encoder.1} parent=1 // pred_fallthru
      _
    // Predicated region
    $region26: #{transformer_encoder.1} parent=1 // pred_check
      _
    $region27: #{transformer_encoder.1} parent=1 // pred_check_branch
      %36 = sbr.rel (0) target = $region29
    $region28: #{transformer_encoder.1} parent=1 // pred_region
      %37 = dma.done [#allocation3], 4096
    $region29: #{transformer_encoder.1} parent=1 // pred_fallthru
      _
    %v38 = vld [vmem:[%s0] sm:$0xff]
    %v39 = vld [vmem:[%s0 + $0x8] sm:$0xff]
    %v40 = vld [vmem:[%s0 + $0x10] sm:$0xff]
    %v41 = vld [vmem:[%s0 + $0x18] sm:$0xff]
    %42 = vxpose.xlu0.b32.start [1/16] %v38, 128
    %43 = vxpose.xlu0.b32.cont [2/16] %v39, 128
    %44 = vxpose.xlu0.b32.cont [3/16] 0.0, 128
    %45 = vxpose.xlu0.b32.cont [4/16] 0.0, 128
    %46 = vxpose.xlu0.b32.cont [5/16] 0.0, 128
    %47 = vxpose.xlu0.b32.cont [6/16] 0.0, 128
    %48 = vxpose.xlu0.b32.cont [7/16] 0.0, 128
    %49 = vxpose.xlu0.b32.cont [8/16] 0.0, 128
    %50 = vxpose.xlu0.b32.cont [9/16] 0.0, 128
    %51 = vxpose.xlu0.b32.cont [10/16] 0.0, 128
    %52 = vxpose.xlu0.b32.cont [11/16] 0.0, 128
    %53 = vxpose.xlu0.b32.cont [12/16] 0.0, 128
    %54 = vxpose.xlu0.b32.cont [13/16] 0.0, 128
    %55 = vxpose.xlu0.b32.cont [14/16] 0.0, 128
    %56 = vxpose.xlu0.b32.cont [15/16] 0.0, 128
    %57 = vxpose.xlu0.b32.end [16/16] 0.0, 128
    %v58 = vpop.trf.xlu0
    %v59 = vpop.trf.xlu0
    %v60 = vpop.trf.xlu0
    %v61 = vpop.trf.xlu0
    %v62 = vpop.trf.xlu0
    %v63 = vpop.trf.xlu0
    %v64 = vpop.trf.xlu0
    %v65 = vpop.trf.xlu0
    %v66 = vpop.trf.xlu0
    %v67 = vpop.trf.xlu0
    %v68 = vpop.trf.xlu0
    %v69 = vpop.trf.xlu0
    %v70 = vpop.trf.xlu0
    %v71 = vpop.trf.xlu0
    %v72 = vpop.trf.xlu0
    %v73 = vpop.trf.xlu0
    %74 = vxpose.xlu0.b32.start [1/16] %v40, 128
    %75 = vxpose.xlu0.b32.cont [2/16] %v41, 128
    %76 = vxpose.xlu0.b32.cont [3/16] 0.0, 128
    %77 = vxpose.xlu0.b32.cont [4/16] 0.0, 128
    %78 = vxpose.xlu0.b32.cont [5/16] 0.0, 128
    %79 = vxpose.xlu0.b32.cont [6/16] 0.0, 128
    %80 = vxpose.xlu0.b32.cont [7/16] 0.0, 128
    %81 = vxpose.xlu0.b32.cont [8/16] 0.0, 128
    %82 = vxpose.xlu0.b32.cont [9/16] 0.0, 128
    %83 = vxpose.xlu0.b32.cont [10/16] 0.0, 128
    %84 = vxpose.xlu0.b32.cont [11/16] 0.0, 128
    %85 = vxpose.xlu0.b32.cont [12/16] 0.0, 128
    %86 = vxpose.xlu0.b32.cont [13/16] 0.0, 128
    %87 = vxpose.xlu0.b32.cont [14/16] 0.0, 128
    %88 = vxpose.xlu0.b32.cont [15/16] 0.0, 128
    %89 = vxpose.xlu0.b32.end [16/16] 0.0, 128
    %v90 = vpop.trf.xlu0
    %v91 = vpop.trf.xlu0
    %v92 = vpop.trf.xlu0
    %v93 = vpop.trf.xlu0
    %v94 = vpop.trf.xlu0
    %v95 = vpop.trf.xlu0
    %v96 = vpop.trf.xlu0
    %v97 = vpop.trf.xlu0
    %v98 = vpop.trf.xlu0
    %v99 = vpop.trf.xlu0
    %v100 = vpop.trf.xlu0
    %v101 = vpop.trf.xlu0
    %v102 = vpop.trf.xlu0
    %v103 = vpop.trf.xlu0
    %v104 = vpop.trf.xlu0
    %v105 = vpop.trf.xlu0
    %v106 = vld [vmem:[%s2] sm:$0xff]
    %v107 = vld [vmem:[%s2 + $0x8] sm:$0xff]
    %v108 = vld [vmem:[%s5] sm:$0x1]
    %v109 = vlaneseq
    %v110 = vshrl.u32 %v109, 7
    %v111 = vsub.s32 0, %v110
    %v112 = vrot.slane %v108, %v111
    %vm113 = vcmask 130048
    %v115 = vsel %vm113, %v58, 0
    %v118 = vsel %vm113, %v90, 0
    %120 = vmatprep.subr.mxu0 0.0
    %121 = vmatpush1.msra.mxu0 0.0
    %122 = vmatprep.subr.mxu0 0.0
    %123 = vmatpush1.msra.mxu0 0.0
    %124 = vmatprep.subr.mxu0 0.0
    %125 = vmatpush1.msra.mxu0 0.0
    %126 = vmatprep.subr.mxu0 0.0
    %127 = vmatpush1.msra.mxu0 0.0
    %128 = vmatprep.subr.mxu0 0.0
    %129 = vmatpush1.msra.mxu0 0.0
    %130 = vmatprep.subr.mxu0 0.0
    %131 = vmatpush1.msra.mxu0 0.0
    %132 = vmatprep.subr.mxu0 0.0
    %133 = vmatpush1.msra.mxu0 0.0
    %134 = vmatprep.subr.mxu0 0.0
    %135 = vmatpush1.msra.mxu0 0.0
    %136 = vmatprep.subr.mxu0 0.0
    %137 = vmatpush1.msra.mxu0 0.0
    %138 = vmatprep.subr.mxu0 0.0
    %139 = vmatpush1.msra.mxu0 0.0
    %140 = vmatprep.subr.mxu0 0.0
    %141 = vmatpush1.msra.mxu0 0.0
    %142 = vmatprep.subr.mxu0 0.0
    %143 = vmatpush1.msra.mxu0 0.0
    %144 = vmatprep.subr.mxu0 0.0
    %145 = vmatpush1.msra.mxu0 0.0
    %146 = vmatprep.subr.mxu0 0.0
    %147 = vmatpush1.msra.mxu0 0.0
    %148 = vmatprep.subr.mxu0 0.0
    %149 = vmatpush1.msra.mxu0 %v107
    %150 = vmatprep.subr.mxu0 0.0
    %151 = vmatpush1.msra.mxu0 %v106
    %152 = vmatprep.subr.mxu0 0.0
    %153 = vmatpush2.msra.mxu0 0.0
    %154 = vmatprep.subr.mxu0 0.0
    %155 = vmatpush2.msra.mxu0 0.0
    %156 = vmatprep.subr.mxu0 0.0
    %157 = vmatpush2.msra.mxu0 0.0
    %158 = vmatprep.subr.mxu0 0.0
    %159 = vmatpush2.msra.mxu0 0.0
    %160 = vmatprep.subr.mxu0 0.0
    %161 = vmatpush2.msra.mxu0 0.0
    %162 = vmatprep.subr.mxu0 0.0
    %163 = vmatpush2.msra.mxu0 0.0
    %164 = vmatprep.subr.mxu0 0.0
    %165 = vmatpush2.msra.mxu0 0.0
    %166 = vmatprep.subr.mxu0 0.0
    %167 = vmatpush2.msra.mxu0 0.0
    %168 = vmatprep.subr.mxu0 0.0
    %169 = vmatpush2.msra.mxu0 0.0
    %170 = vmatprep.subr.mxu0 0.0
    %171 = vmatpush2.msra.mxu0 0.0
    %172 = vmatprep.subr.mxu0 0.0
    %173 = vmatpush2.msra.mxu0 0.0
    %174 = vmatprep.subr.mxu0 0.0
    %175 = vmatpush2.msra.mxu0 0.0
    %176 = vmatprep.subr.mxu0 0.0
    %177 = vmatpush2.msra.mxu0 0.0
    %178 = vmatprep.subr.mxu0 0.0
    %179 = vmatpush2.msra.mxu0 0.0
    %180 = vmatprep.subr.mxu0 0.0
    %181 = vmatpush2.msra.mxu0 0.0
    %182 = vmatprep.subr.mxu0 0.0
    %183 = vmatpush2.msra.mxu0 0.0
    %184 = vmatprep.mubr.f32.mxu0 0.0
    %185 = vmatmul.mubr.f32.gmra.mxu0 %v115
    %v186 = vpop.f32.mrf.mxu0
    %v187 = vadd.f32 %v112, %v186
    %v188 = vpop.f32.mrf.mxu0
    %189 = vmatprep.mubr.f32.mxu0 0.0
    %190 = vmatmul.mubr.f32.gmra.mxu0 %v118
    %v191 = vpop.f32.mrf.mxu0
    %v192 = vadd.f32 %v112, %v191
    %v193 = vpop.f32.mrf.mxu0
    %194 = vdwg.mxu0
    %vm195 = vcmask 261120
    %v196 = vsel %vm195, %v187, 0.0
    %197 = vadd.xlane.f32.xlu0 %v196
    %v198 = vpop.xlane.xlu0 %197
    %v199 = vsel %vm195, %v192, 0.0
    %200 = vadd.xlane.f32.xlu0 %v199
    %v201 = vpop.xlane.xlu0 %200
    %v202 = vrcp.pop 32.0
    %v203 = vmul.f32 %v198, %v202
    %v204 = vmul.f32 %v201, %v202
    %v205 = vsub.f32 %v187, %v203
    %v206 = vsub.f32 %v192, %v204
    %v207 = vmul.f32 %v205, %v205
    %v208 = vmul.f32 %v206, %v206
    %v209 = vsel %vm195, %v207, 0.0
    %210 = vadd.xlane.f32.xlu0 %v209
    %v211 = vpop.xlane.xlu0 %210
    %v212 = vsel %vm195, %v208, 0.0
    %213 = vadd.xlane.f32.xlu0 %v212
    %v214 = vpop.xlane.xlu0 %213
    %v215 = vmul.f32 %v211, %v202
    %v216 = vmul.f32 %v214, %v202
    %v217 = vadd.f32 %v215, 1e-05
    %v218 = vadd.f32 %v216, 1e-05
    %v219 = vrsqrt.pop %v217
    %v220 = vrsqrt.pop %v218
    %v221 = vmul.f32 %v205, %v219
    %v222 = vmul.f32 %v206, %v220
    %v223 = vld [vmem:[%s5 + $0x1] sm:$0x1]
    %v224 = vlaneseq
    %v225 = vshrl.u32 %v224, 7
    %v226 = vsub.s32 0, %v225
    %v227 = vrot.slane %v223, %v226
    %v228 = vmul.f32 %v221, %v227
    %v229 = vmul.f32 %v222, %v227
    %v230 = vld [vmem:[%s5 + $0x2] sm:$0x1]
    %v231 = vlaneseq
    %v232 = vshrl.u32 %v231, 7
    %v233 = vsub.s32 0, %v232
    %v234 = vrot.slane %v230, %v233
    %v235 = vadd.f32 %v228, %v234
    %v236 = vadd.f32 %v229, %v234
    %v237 = vld [vmem:[#allocation2] sm:$0xff]
    %v238 = vld [vmem:[#allocation2 + $0x8] sm:$0xff]
    %v239 = vld [vmem:[#allocation2 + $0x10] sm:$0xff]
    %v240 = vld [vmem:[#allocation2 + $0x18] sm:$0xff]
    %v241 = vld [vmem:[%s5 + $0x3] sm:$0x1]
    %v242 = vlaneseq
    %v243 = vshrl.u32 %v242, 7
    %v244 = vsub.s32 0, %v243
    %v245 = vrot.slane %v241, %v244
    %v247 = vsel %vm195, %v235, 0
    %v250 = vsel %vm195, %v236, 0
    %252 = vmatprep.subr.mxu0 0.0
    %253 = vmatpush1.msra.mxu0 0.0
    %254 = vmatprep.subr.mxu0 0.0
    %255 = vmatpush1.msra.mxu0 0.0
    %256 = vmatprep.subr.mxu0 0.0
    %257 = vmatpush1.msra.mxu0 0.0
    %258 = vmatprep.subr.mxu0 0.0
    %259 = vmatpush1.msra.mxu0 0.0
    %260 = vmatprep.subr.mxu0 0.0
    %261 = vmatpush1.msra.mxu0 0.0
    %262 = vmatprep.subr.mxu0 0.0
    %263 = vmatpush1.msra.mxu0 0.0
    %264 = vmatprep.subr.mxu0 0.0
    %265 = vmatpush1.msra.mxu0 0.0
    %266 = vmatprep.subr.mxu0 0.0
    %267 = vmatpush1.msra.mxu0 0.0
    %268 = vmatprep.subr.mxu0 0.0
    %269 = vmatpush1.msra.mxu0 0.0
    %270 = vmatprep.subr.mxu0 0.0
    %271 = vmatpush1.msra.mxu0 0.0
    %272 = vmatprep.subr.mxu0 0.0
    %273 = vmatpush1.msra.mxu0 0.0
    %274 = vmatprep.subr.mxu0 0.0
    %275 = vmatpush1.msra.mxu0 0.0
    %276 = vmatprep.subr.mxu0 0.0
    %277 = vmatpush1.msra.mxu0 %v240
    %278 = vmatprep.subr.mxu0 0.0
    %279 = vmatpush1.msra.mxu0 %v239
    %280 = vmatprep.subr.mxu0 0.0
    %281 = vmatpush1.msra.mxu0 %v238
    %282 = vmatprep.subr.mxu0 0.0
    %283 = vmatpush1.msra.mxu0 %v237
    %284 = vmatprep.subr.mxu0 0.0
    %285 = vmatpush2.msra.mxu0 0.0
    %286 = vmatprep.subr.mxu0 0.0
    %287 = vmatpush2.msra.mxu0 0.0
    %288 = vmatprep.subr.mxu0 0.0
    %289 = vmatpush2.msra.mxu0 0.0
    %290 = vmatprep.subr.mxu0 0.0
    %291 = vmatpush2.msra.mxu0 0.0
    %292 = vmatprep.subr.mxu0 0.0
    %293 = vmatpush2.msra.mxu0 0.0
    %294 = vmatprep.subr.mxu0 0.0
    %295 = vmatpush2.msra.mxu0 0.0
    %296 = vmatprep.subr.mxu0 0.0
    %297 = vmatpush2.msra.mxu0 0.0
    %298 = vmatprep.subr.mxu0 0.0
    %299 = vmatpush2.msra.mxu0 0.0
    %300 = vmatprep.subr.mxu0 0.0
    %301 = vmatpush2.msra.mxu0 0.0
    %302 = vmatprep.subr.mxu0 0.0
    %303 = vmatpush2.msra.mxu0 0.0
    %304 = vmatprep.subr.mxu0 0.0
    %305 = vmatpush2.msra.mxu0 0.0
    %306 = vmatprep.subr.mxu0 0.0
    %307 = vmatpush2.msra.mxu0 0.0
    %308 = vmatprep.subr.mxu0 0.0
    %309 = vmatpush2.msra.mxu0 0.0
    %310 = vmatprep.subr.mxu0 0.0
    %311 = vmatpush2.msra.mxu0 0.0
    %312 = vmatprep.subr.mxu0 0.0
    %313 = vmatpush2.msra.mxu0 0.0
    %314 = vmatprep.subr.mxu0 0.0
    %315 = vmatpush2.msra.mxu0 0.0
    %316 = vmatprep.mubr.f32.mxu0 0.0
    %317 = vmatmul.mubr.f32.gmra.mxu0 %v247
    %v318 = vpop.f32.mrf.mxu0
    %v319 = vadd.f32 %v245, %v318
    %v320 = vpop.f32.mrf.mxu0
    %321 = vmatprep.mubr.f32.mxu0 0.0
    %322 = vmatmul.mubr.f32.gmra.mxu0 %v250
    %v323 = vpop.f32.mrf.mxu0
    %v324 = vadd.f32 %v245, %v323
    %v325 = vpop.f32.mrf.mxu0
    %326 = vdwg.mxu0
    %v327 = vmax.f32 %v319, 0.0
    %v328 = vmax.f32 %v324, 0.0
    %s329 = scalar_lea.vmem [#allocation2], 32
    %v330 = vld [vmem:[%s329] sm:$0xff]
    %v331 = vld [vmem:[%s329 + $0x8] sm:$0xff]
    %v332 = vld [vmem:[%s329 + $0x10] sm:$0xff]
    %v333 = vld [vmem:[%s329 + $0x18] sm:$0xff]
    %v334 = vld [vmem:[%s5 + $0x4] sm:$0x1]
    %v335 = vlaneseq
    %v336 = vshrl.u32 %v335, 7
    %v337 = vsub.s32 0, %v336
    %v338 = vrot.slane %v334, %v337
    %v340 = vsel %vm195, %v327, 0
    %v343 = vsel %vm195, %v328, 0
    %345 = vmatprep.subr.mxu0 0.0
    %346 = vmatpush1.msra.mxu0 0.0
    %347 = vmatprep.subr.mxu0 0.0
    %348 = vmatpush1.msra.mxu0 0.0
    %349 = vmatprep.subr.mxu0 0.0
    %350 = vmatpush1.msra.mxu0 0.0
    %351 = vmatprep.subr.mxu0 0.0
    %352 = vmatpush1.msra.mxu0 0.0
    %353 = vmatprep.subr.mxu0 0.0
    %354 = vmatpush1.msra.mxu0 0.0
    %355 = vmatprep.subr.mxu0 0.0
    %356 = vmatpush1.msra.mxu0 0.0
    %357 = vmatprep.subr.mxu0 0.0
    %358 = vmatpush1.msra.mxu0 0.0
    %359 = vmatprep.subr.mxu0 0.0
    %360 = vmatpush1.msra.mxu0 0.0
    %361 = vmatprep.subr.mxu0 0.0
    %362 = vmatpush1.msra.mxu0 0.0
    %363 = vmatprep.subr.mxu0 0.0
    %364 = vmatpush1.msra.mxu0 0.0
    %365 = vmatprep.subr.mxu0 0.0
    %366 = vmatpush1.msra.mxu0 0.0
    %367 = vmatprep.subr.mxu0 0.0
    %368 = vmatpush1.msra.mxu0 0.0
    %369 = vmatprep.subr.mxu0 0.0
    %370 = vmatpush1.msra.mxu0 %v333
    %371 = vmatprep.subr.mxu0 0.0
    %372 = vmatpush1.msra.mxu0 %v332
    %373 = vmatprep.subr.mxu0 0.0
    %374 = vmatpush1.msra.mxu0 %v331
    %375 = vmatprep.subr.mxu0 0.0
    %376 = vmatpush1.msra.mxu0 %v330
    %377 = vmatprep.subr.mxu0 0.0
    %378 = vmatpush2.msra.mxu0 0.0
    %379 = vmatprep.subr.mxu0 0.0
    %380 = vmatpush2.msra.mxu0 0.0
    %381 = vmatprep.subr.mxu0 0.0
    %382 = vmatpush2.msra.mxu0 0.0
    %383 = vmatprep.subr.mxu0 0.0
    %384 = vmatpush2.msra.mxu0 0.0
    %385 = vmatprep.subr.mxu0 0.0
    %386 = vmatpush2.msra.mxu0 0.0
    %387 = vmatprep.subr.mxu0 0.0
    %388 = vmatpush2.msra.mxu0 0.0
    %389 = vmatprep.subr.mxu0 0.0
    %390 = vmatpush2.msra.mxu0 0.0
    %391 = vmatprep.subr.mxu0 0.0
    %392 = vmatpush2.msra.mxu0 0.0
    %393 = vmatprep.subr.mxu0 0.0
    %394 = vmatpush2.msra.mxu0 0.0
    %395 = vmatprep.subr.mxu0 0.0
    %396 = vmatpush2.msra.mxu0 0.0
    %397 = vmatprep.subr.mxu0 0.0
    %398 = vmatpush2.msra.mxu0 0.0
    %399 = vmatprep.subr.mxu0 0.0
    %400 = vmatpush2.msra.mxu0 0.0
    %401 = vmatprep.subr.mxu0 0.0
    %402 = vmatpush2.msra.mxu0 0.0
    %403 = vmatprep.subr.mxu0 0.0
    %404 = vmatpush2.msra.mxu0 0.0
    %405 = vmatprep.subr.mxu0 0.0
    %406 = vmatpush2.msra.mxu0 0.0
    %407 = vmatprep.subr.mxu0 0.0
    %408 = vmatpush2.msra.mxu0 0.0
    %409 = vmatprep.mubr.f32.mxu0 0.0
    %410 = vmatmul.mubr.f32.gmra.mxu0 %v340
    %v411 = vpop.f32.mrf.mxu0
    %v412 = vadd.f32 %v338, %v411
    %v413 = vpop.f32.mrf.mxu0
    %414 = vmatprep.mubr.f32.mxu0 0.0
    %415 = vmatmul.mubr.f32.gmra.mxu0 %v343
    %v416 = vpop.f32.mrf.mxu0
    %v417 = vadd.f32 %v338, %v416
    %v418 = vpop.f32.mrf.mxu0
    %419 = vdwg.mxu0
    %v420 = vld [vmem:[%s1] sm:$0xff]
    %v421 = vld [vmem:[%s1 + $0x8] sm:$0xff]
    %v422 = vld [vmem:[%s1 + $0x10] sm:$0xff]
    %v423 = vld [vmem:[%s1 + $0x18] sm:$0xff]
    %v424 = vld [vmem:[%s1 + $0x20] sm:$0xff]
    %v425 = vld [vmem:[%s1 + $0x28] sm:$0xff]
    %v426 = vld [vmem:[%s1 + $0x30] sm:$0xff]
    %v427 = vld [vmem:[%s1 + $0x38] sm:$0xff]
    %v428 = vld [vmem:[%s3] sm:$0xff]
    %v429 = vld [vmem:[%s3 + $0x8] sm:$0xff]
    %v430 = vld [vmem:[%s3 + $0x10] sm:$0xff]
    %v431 = vld [vmem:[%s3 + $0x18] sm:$0xff]
    %v433 = vsel %vm195, %v412, 0
    %v436 = vsel %vm195, %v417, 0
    %438 = vmatprep.subr.mxu0 0.0
    %439 = vmatpush1.msra.mxu0 0.0
    %440 = vmatprep.subr.mxu0 0.0
    %441 = vmatpush1.msra.mxu0 0.0
    %442 = vmatprep.subr.mxu0 0.0
    %443 = vmatpush1.msra.mxu0 0.0
    %444 = vmatprep.subr.mxu0 0.0
    %445 = vmatpush1.msra.mxu0 0.0
    %446 = vmatprep.subr.mxu0 0.0
    %447 = vmatpush1.msra.mxu0 0.0
    %448 = vmatprep.subr.mxu0 0.0
    %449 = vmatpush1.msra.mxu0 0.0
    %450 = vmatprep.subr.mxu0 0.0
    %451 = vmatpush1.msra.mxu0 0.0
    %452 = vmatprep.subr.mxu0 0.0
    %453 = vmatpush1.msra.mxu0 0.0
    %454 = vmatprep.subr.mxu0 0.0
    %455 = vmatpush1.msra.mxu0 0.0
    %456 = vmatprep.subr.mxu0 0.0
    %457 = vmatpush1.msra.mxu0 0.0
    %458 = vmatprep.subr.mxu0 0.0
    %459 = vmatpush1.msra.mxu0 0.0
    %460 = vmatprep.subr.mxu0 0.0
    %461 = vmatpush1.msra.mxu0 0.0
    %462 = vmatprep.subr.mxu0 0.0
    %463 = vmatpush1.msra.mxu0 %v431
    %464 = vmatprep.subr.mxu0 0.0
    %465 = vmatpush1.msra.mxu0 %v430
    %466 = vmatprep.subr.mxu0 0.0
    %467 = vmatpush1.msra.mxu0 %v429
    %468 = vmatprep.subr.mxu0 0.0
    %469 = vmatpush1.msra.mxu0 %v428
    %470 = vmatprep.subr.mxu0 0.0
    %471 = vmatpush2.msra.mxu0 0.0
    %472 = vmatprep.subr.mxu0 0.0
    %473 = vmatpush2.msra.mxu0 0.0
    %474 = vmatprep.subr.mxu0 0.0
    %475 = vmatpush2.msra.mxu0 0.0
    %476 = vmatprep.subr.mxu0 0.0
    %477 = vmatpush2.msra.mxu0 0.0
    %478 = vmatprep.subr.mxu0 0.0
    %479 = vmatpush2.msra.mxu0 0.0
    %480 = vmatprep.subr.mxu0 0.0
    %481 = vmatpush2.msra.mxu0 0.0
    %482 = vmatprep.subr.mxu0 0.0
    %483 = vmatpush2.msra.mxu0 0.0
    %484 = vmatprep.subr.mxu0 0.0
    %485 = vmatpush2.msra.mxu0 0.0
    %486 = vmatprep.subr.mxu0 0.0
    %487 = vmatpush2.msra.mxu0 0.0
    %488 = vmatprep.subr.mxu0 0.0
    %489 = vmatpush2.msra.mxu0 0.0
    %490 = vmatprep.subr.mxu0 0.0
    %491 = vmatpush2.msra.mxu0 0.0
    %492 = vmatprep.subr.mxu0 0.0
    %493 = vmatpush2.msra.mxu0 0.0
    %494 = vmatprep.subr.mxu0 0.0
    %495 = vmatpush2.msra.mxu0 0.0
    %496 = vmatprep.subr.mxu0 0.0
    %497 = vmatpush2.msra.mxu0 0.0
    %498 = vmatprep.subr.mxu0 0.0
    %499 = vmatpush2.msra.mxu0 0.0
    %500 = vmatprep.subr.mxu0 0.0
    %501 = vmatpush2.msra.mxu0 0.0
    %502 = vmatprep.mubr.f32.mxu0 0.0
    %503 = vmatmul.mubr.f32.gmra.mxu0 %v433
    %v504 = vpop.f32.mrf.mxu0
    %v505 = vadd.f32 0.0, %v504
    %v506 = vpop.f32.mrf.mxu0
    %507 = vmatprep.mubr.f32.mxu0 0.0
    %508 = vmatmul.mubr.f32.gmra.mxu0 %v436
    %v509 = vpop.f32.mrf.mxu0
    %v510 = vadd.f32 0.0, %v509
    %v511 = vpop.f32.mrf.mxu0
    %512 = vdwg.mxu0
    %v513 = vld [vmem:[%s5 + $0x7] sm:$0x1]
    %v514 = vlaneseq
    %v515 = vshrl.u32 %v514, 7
    %v516 = vsub.s32 0, %v515
    %v517 = vrot.slane %v513, %v516
    %v518 = vadd.f32 %v505, %v517
    %v519 = vadd.f32 %v510, %v517
    %521 = vrot.lane.b32.xlu0 %v518, 120
    %v522 = vpop.permute.xlu0 %521
    %524 = vrot.lane.b32.xlu0 %v519, 120
    %v525 = vpop.permute.xlu0 %524
    %526 = vrot.lane.b32.xlu0 %v518, 112
    %v527 = vpop.permute.xlu0 %526
    %528 = vrot.lane.b32.xlu0 %v519, 112
    %v529 = vpop.permute.xlu0 %528
    %530 = vrot.lane.b32.xlu0 %v518, 104
    %v531 = vpop.permute.xlu0 %530
    %532 = vrot.lane.b32.xlu0 %v519, 104
    %v533 = vpop.permute.xlu0 %532
    %v534 = vld [vmem:[%s5 + $0x8] sm:$0x1]
    %v535 = vlaneseq
    %v536 = vshrl.u32 %v535, 7
    %v537 = vsub.s32 0, %v536
    %v538 = vrot.slane %v534, %v537
    %540 = vrot.lane.b32.xlu0 %v538, 32
    %v541 = vpop.permute.xlu0 %540
    %v543 = vadd.f32 %v505, %v541
    %v544 = vadd.f32 %v510, %v541
    %546 = vrot.lane.b32.xlu0 %v543, 120
    %v547 = vpop.permute.xlu0 %546
    %549 = vrot.lane.b32.xlu0 %v544, 120
    %v550 = vpop.permute.xlu0 %549
    %551 = vrot.lane.b32.xlu0 %v543, 112
    %v552 = vpop.permute.xlu0 %551
    %553 = vrot.lane.b32.xlu0 %v544, 112
    %v554 = vpop.permute.xlu0 %553
    %555 = vrot.lane.b32.xlu0 %v543, 104
    %v556 = vpop.permute.xlu0 %555
    %557 = vrot.lane.b32.xlu0 %v544, 104
    %v558 = vpop.permute.xlu0 %557
    %v559 = vld [vmem:[%s5 + $0x9] sm:$0x1]
    %v560 = vlaneseq
    %v561 = vshrl.u32 %v560, 7
    %v562 = vsub.s32 0, %v561
    %v563 = vrot.slane %v559, %v562
    %565 = vrot.lane.b32.xlu0 %v563, 64
    %v566 = vpop.permute.xlu0 %565
    %v568 = vadd.f32 %v505, %v566
    %v569 = vadd.f32 %v510, %v566
    %571 = vrot.lane.b32.xlu0 %v568, 120
    %v572 = vpop.permute.xlu0 %571
    %574 = vrot.lane.b32.xlu0 %v569, 120
    %v575 = vpop.permute.xlu0 %574
    %576 = vrot.lane.b32.xlu0 %v568, 112
    %v577 = vpop.permute.xlu0 %576
    %578 = vrot.lane.b32.xlu0 %v569, 112
    %v579 = vpop.permute.xlu0 %578
    %580 = vrot.lane.b32.xlu0 %v568, 104
    %v581 = vpop.permute.xlu0 %580
    %582 = vrot.lane.b32.xlu0 %v569, 104
    %v583 = vpop.permute.xlu0 %582
    %584 = vrot.lane.b32.xlu0 %v543, 96
    %v585 = vpop.permute.xlu0 %584
    %vm586 = vcmask 64512
    %v587 = vsel %vm586, %v518, 0
    %v589 = vsel %vm586, %v585, 0
    %591 = vmatprep.subr.mxu0 0.0
    %592 = vmatpush1.xpose.msra.mxu0 0.0
    %593 = vmatprep.subr.mxu0 0.0
    %594 = vmatpush1.xpose.msra.mxu0 0.0
    %595 = vmatprep.subr.mxu0 0.0
    %596 = vmatpush1.xpose.msra.mxu0 0.0
    %597 = vmatprep.subr.mxu0 0.0
    %598 = vmatpush1.xpose.msra.mxu0 0.0
    %599 = vmatprep.subr.mxu0 0.0
    %600 = vmatpush1.xpose.msra.mxu0 0.0
    %601 = vmatprep.subr.mxu0 0.0
    %602 = vmatpush1.xpose.msra.mxu0 0.0
    %603 = vmatprep.subr.mxu0 0.0
    %604 = vmatpush1.xpose.msra.mxu0 0.0
    %605 = vmatprep.subr.mxu0 0.0
    %606 = vmatpush1.xpose.msra.mxu0 0.0
    %607 = vmatprep.subr.mxu0 0.0
    %608 = vmatpush1.xpose.msra.mxu0 0.0
    %609 = vmatprep.subr.mxu0 0.0
    %610 = vmatpush1.xpose.msra.mxu0 0.0
    %611 = vmatprep.subr.mxu0 0.0
    %612 = vmatpush1.xpose.msra.mxu0 0.0
    %613 = vmatprep.subr.mxu0 0.0
    %614 = vmatpush1.xpose.msra.mxu0 0.0
    %615 = vmatprep.subr.mxu0 0.0
    %616 = vmatpush1.xpose.msra.mxu0 0.0
    %617 = vmatprep.subr.mxu0 0.0
    %618 = vmatpush1.xpose.msra.mxu0 0.0
    %619 = vmatprep.subr.mxu0 0.0
    %620 = vmatpush1.xpose.msra.mxu0 0.0
    %621 = vmatprep.subr.mxu0 0.0
    %622 = vmatpush1.xpose.msra.mxu0 %v589
    %623 = vmatprep.subr.mxu0 0.0
    %624 = vmatpush2.xpose.msra.mxu0 0.0
    %625 = vmatprep.subr.mxu0 0.0
    %626 = vmatpush2.xpose.msra.mxu0 0.0
    %627 = vmatprep.subr.mxu0 0.0
    %628 = vmatpush2.xpose.msra.mxu0 0.0
    %629 = vmatprep.subr.mxu0 0.0
    %630 = vmatpush2.xpose.msra.mxu0 0.0
    %631 = vmatprep.subr.mxu0 0.0
    %632 = vmatpush2.xpose.msra.mxu0 0.0
    %633 = vmatprep.subr.mxu0 0.0
    %634 = vmatpush2.xpose.msra.mxu0 0.0
    %635 = vmatprep.subr.mxu0 0.0
    %636 = vmatpush2.xpose.msra.mxu0 0.0
    %637 = vmatprep.subr.mxu0 0.0
    %638 = vmatpush2.xpose.msra.mxu0 0.0
    %639 = vmatprep.subr.mxu0 0.0
    %640 = vmatpush2.xpose.msra.mxu0 0.0
    %641 = vmatprep.subr.mxu0 0.0
    %642 = vmatpush2.xpose.msra.mxu0 0.0
    %643 = vmatprep.subr.mxu0 0.0
    %644 = vmatpush2.xpose.msra.mxu0 0.0
    %645 = vmatprep.subr.mxu0 0.0
    %646 = vmatpush2.xpose.msra.mxu0 0.0
    %647 = vmatprep.subr.mxu0 0.0
    %648 = vmatpush2.xpose.msra.mxu0 0.0
    %649 = vmatprep.subr.mxu0 0.0
    %650 = vmatpush2.xpose.msra.mxu0 0.0
    %651 = vmatprep.subr.mxu0 0.0
    %652 = vmatpush2.xpose.msra.mxu0 0.0
    %653 = vmatprep.subr.mxu0 0.0
    %654 = vmatpush2.xpose.msra.mxu0 0.0
    %655 = vmatprep.mubr.f32.mxu0 0.0
    %656 = vmatmul.mubr.f32.gmra.mxu0 %v587
    %v657 = vpop.f32.mrf.mxu0
    %v658 = vadd.f32 0.0, %v657
    %v659 = vpop.f32.mrf.mxu0
    %660 = vdwg.mxu0
    %661 = vrot.lane.b32.xlu0 %v544, 96
    %v662 = vpop.permute.xlu0 %661
    %v663 = vsel %vm586, %v519, 0
    %v665 = vsel %vm586, %v662, 0
    %667 = vmatprep.subr.mxu0 0.0
    %668 = vmatpush1.xpose.msra.mxu0 0.0
    %669 = vmatprep.subr.mxu0 0.0
    %670 = vmatpush1.xpose.msra.mxu0 0.0
    %671 = vmatprep.subr.mxu0 0.0
    %672 = vmatpush1.xpose.msra.mxu0 0.0
    %673 = vmatprep.subr.mxu0 0.0
    %674 = vmatpush1.xpose.msra.mxu0 0.0
    %675 = vmatprep.subr.mxu0 0.0
    %676 = vmatpush1.xpose.msra.mxu0 0.0
    %677 = vmatprep.subr.mxu0 0.0
    %678 = vmatpush1.xpose.msra.mxu0 0.0
    %679 = vmatprep.subr.mxu0 0.0
    %680 = vmatpush1.xpose.msra.mxu0 0.0
    %681 = vmatprep.subr.mxu0 0.0
    %682 = vmatpush1.xpose.msra.mxu0 0.0
    %683 = vmatprep.subr.mxu0 0.0
    %684 = vmatpush1.xpose.msra.mxu0 0.0
    %685 = vmatprep.subr.mxu0 0.0
    %686 = vmatpush1.xpose.msra.mxu0 0.0
    %687 = vmatprep.subr.mxu0 0.0
    %688 = vmatpush1.xpose.msra.mxu0 0.0
    %689 = vmatprep.subr.mxu0 0.0
    %690 = vmatpush1.xpose.msra.mxu0 0.0
    %691 = vmatprep.subr.mxu0 0.0
    %692 = vmatpush1.xpose.msra.mxu0 0.0
    %693 = vmatprep.subr.mxu0 0.0
    %694 = vmatpush1.xpose.msra.mxu0 0.0
    %695 = vmatprep.subr.mxu0 0.0
    %696 = vmatpush1.xpose.msra.mxu0 0.0
    %697 = vmatprep.subr.mxu0 0.0
    %698 = vmatpush1.xpose.msra.mxu0 %v665
    %699 = vmatprep.subr.mxu0 0.0
    %700 = vmatpush2.xpose.msra.mxu0 0.0
    %701 = vmatprep.subr.mxu0 0.0
    %702 = vmatpush2.xpose.msra.mxu0 0.0
    %703 = vmatprep.subr.mxu0 0.0
    %704 = vmatpush2.xpose.msra.mxu0 0.0
    %705 = vmatprep.subr.mxu0 0.0
    %706 = vmatpush2.xpose.msra.mxu0 0.0
    %707 = vmatprep.subr.mxu0 0.0
    %708 = vmatpush2.xpose.msra.mxu0 0.0
    %709 = vmatprep.subr.mxu0 0.0
    %710 = vmatpush2.xpose.msra.mxu0 0.0
    %711 = vmatprep.subr.mxu0 0.0
    %712 = vmatpush2.xpose.msra.mxu0 0.0
    %713 = vmatprep.subr.mxu0 0.0
    %714 = vmatpush2.xpose.msra.mxu0 0.0
    %715 = vmatprep.subr.mxu0 0.0
    %716 = vmatpush2.xpose.msra.mxu0 0.0
    %717 = vmatprep.subr.mxu0 0.0
    %718 = vmatpush2.xpose.msra.mxu0 0.0
    %719 = vmatprep.subr.mxu0 0.0
    %720 = vmatpush2.xpose.msra.mxu0 0.0
    %721 = vmatprep.subr.mxu0 0.0
    %722 = vmatpush2.xpose.msra.mxu0 0.0
    %723 = vmatprep.subr.mxu0 0.0
    %724 = vmatpush2.xpose.msra.mxu0 0.0
    %725 = vmatprep.subr.mxu0 0.0
    %726 = vmatpush2.xpose.msra.mxu0 0.0
    %727 = vmatprep.subr.mxu0 0.0
    %728 = vmatpush2.xpose.msra.mxu0 0.0
    %729 = vmatprep.subr.mxu0 0.0
    %730 = vmatpush2.xpose.msra.mxu0 0.0
    %731 = vmatprep.mubr.f32.mxu0 0.0
    %732 = vmatmul.mubr.f32.gmra.mxu0 %v663
    %v733 = vpop.f32.mrf.mxu0
    %v734 = vadd.f32 0.0, %v733
    %v735 = vpop.f32.mrf.mxu0
    %736 = vdwg.mxu0
    %737 = vrot.lane.b32.xlu0 %v547, 96
    %v738 = vpop.permute.xlu0 %737
    %v739 = vsel %vm586, %v522, 0
    %v741 = vsel %vm586, %v738, 0
    %743 = vmatprep.subr.mxu0 0.0
    %744 = vmatpush1.xpose.msra.mxu0 0.0
    %745 = vmatprep.subr.mxu0 0.0
    %746 = vmatpush1.xpose.msra.mxu0 0.0
    %747 = vmatprep.subr.mxu0 0.0
    %748 = vmatpush1.xpose.msra.mxu0 0.0
    %749 = vmatprep.subr.mxu0 0.0
    %750 = vmatpush1.xpose.msra.mxu0 0.0
    %751 = vmatprep.subr.mxu0 0.0
    %752 = vmatpush1.xpose.msra.mxu0 0.0
    %753 = vmatprep.subr.mxu0 0.0
    %754 = vmatpush1.xpose.msra.mxu0 0.0
    %755 = vmatprep.subr.mxu0 0.0
    %756 = vmatpush1.xpose.msra.mxu0 0.0
    %757 = vmatprep.subr.mxu0 0.0
    %758 = vmatpush1.xpose.msra.mxu0 0.0
    %759 = vmatprep.subr.mxu0 0.0
    %760 = vmatpush1.xpose.msra.mxu0 0.0
    %761 = vmatprep.subr.mxu0 0.0
    %762 = vmatpush1.xpose.msra.mxu0 0.0
    %763 = vmatprep.subr.mxu0 0.0
    %764 = vmatpush1.xpose.msra.mxu0 0.0
    %765 = vmatprep.subr.mxu0 0.0
    %766 = vmatpush1.xpose.msra.mxu0 0.0
    %767 = vmatprep.subr.mxu0 0.0
    %768 = vmatpush1.xpose.msra.mxu0 0.0
    %769 = vmatprep.subr.mxu0 0.0
    %770 = vmatpush1.xpose.msra.mxu0 0.0
    %771 = vmatprep.subr.mxu0 0.0
    %772 = vmatpush1.xpose.msra.mxu0 0.0
    %773 = vmatprep.subr.mxu0 0.0
    %774 = vmatpush1.xpose.msra.mxu0 %v741
    %775 = vmatprep.subr.mxu0 0.0
    %776 = vmatpush2.xpose.msra.mxu0 0.0
    %777 = vmatprep.subr.mxu0 0.0
    %778 = vmatpush2.xpose.msra.mxu0 0.0
    %779 = vmatprep.subr.mxu0 0.0
    %780 = vmatpush2.xpose.msra.mxu0 0.0
    %781 = vmatprep.subr.mxu0 0.0
    %782 = vmatpush2.xpose.msra.mxu0 0.0
    %783 = vmatprep.subr.mxu0 0.0
    %784 = vmatpush2.xpose.msra.mxu0 0.0
    %785 = vmatprep.subr.mxu0 0.0
    %786 = vmatpush2.xpose.msra.mxu0 0.0
    %787 = vmatprep.subr.mxu0 0.0
    %788 = vmatpush2.xpose.msra.mxu0 0.0
    %789 = vmatprep.subr.mxu0 0.0
    %790 = vmatpush2.xpose.msra.mxu0 0.0
    %791 = vmatprep.subr.mxu0 0.0
    %792 = vmatpush2.xpose.msra.mxu0 0.0
    %793 = vmatprep.subr.mxu0 0.0
    %794 = vmatpush2.xpose.msra.mxu0 0.0
    %795 = vmatprep.subr.mxu0 0.0
    %796 = vmatpush2.xpose.msra.mxu0 0.0
    %797 = vmatprep.subr.mxu0 0.0
    %798 = vmatpush2.xpose.msra.mxu0 0.0
    %799 = vmatprep.subr.mxu0 0.0
    %800 = vmatpush2.xpose.msra.mxu0 0.0
    %801 = vmatprep.subr.mxu0 0.0
    %802 = vmatpush2.xpose.msra.mxu0 0.0
    %803 = vmatprep.subr.mxu0 0.0
    %804 = vmatpush2.xpose.msra.mxu0 0.0
    %805 = vmatprep.subr.mxu0 0.0
    %806 = vmatpush2.xpose.msra.mxu0 0.0
    %807 = vmatprep.mubr.f32.mxu0 0.0
    %808 = vmatmul.mubr.f32.gmra.mxu0 %v739
    %v809 = vpop.f32.mrf.mxu0
    %v810 = vadd.f32 0.0, %v809
    %v811 = vpop.f32.mrf.mxu0
    %812 = vdwg.mxu0
    %813 = vrot.lane.b32.xlu0 %v550, 96
    %v814 = vpop.permute.xlu0 %813
    %v815 = vsel %vm586, %v525, 0
    %v817 = vsel %vm586, %v814, 0
    %819 = vmatprep.subr.mxu0 0.0
    %820 = vmatpush1.xpose.msra.mxu0 0.0
    %821 = vmatprep.subr.mxu0 0.0
    %822 = vmatpush1.xpose.msra.mxu0 0.0
    %823 = vmatprep.subr.mxu0 0.0
    %824 = vmatpush1.xpose.msra.mxu0 0.0
    %825 = vmatprep.subr.mxu0 0.0
    %826 = vmatpush1.xpose.msra.mxu0 0.0
    %827 = vmatprep.subr.mxu0 0.0
    %828 = vmatpush1.xpose.msra.mxu0 0.0
    %829 = vmatprep.subr.mxu0 0.0
    %830 = vmatpush1.xpose.msra.mxu0 0.0
    %831 = vmatprep.subr.mxu0 0.0
    %832 = vmatpush1.xpose.msra.mxu0 0.0
    %833 = vmatprep.subr.mxu0 0.0
    %834 = vmatpush1.xpose.msra.mxu0 0.0
    %835 = vmatprep.subr.mxu0 0.0
    %836 = vmatpush1.xpose.msra.mxu0 0.0
    %837 = vmatprep.subr.mxu0 0.0
    %838 = vmatpush1.xpose.msra.mxu0 0.0
    %839 = vmatprep.subr.mxu0 0.0
    %840 = vmatpush1.xpose.msra.mxu0 0.0
    %841 = vmatprep.subr.mxu0 0.0
    %842 = vmatpush1.xpose.msra.mxu0 0.0
    %843 = vmatprep.subr.mxu0 0.0
    %844 = vmatpush1.xpose.msra.mxu0 0.0
    %845 = vmatprep.subr.mxu0 0.0
    %846 = vmatpush1.xpose.msra.mxu0 0.0
    %847 = vmatprep.subr.mxu0 0.0
    %848 = vmatpush1.xpose.msra.mxu0 0.0
    %849 = vmatprep.subr.mxu0 0.0
    %850 = vmatpush1.xpose.msra.mxu0 %v817
    %851 = vmatprep.subr.mxu0 0.0
    %852 = vmatpush2.xpose.msra.mxu0 0.0
    %853 = vmatprep.subr.mxu0 0.0
    %854 = vmatpush2.xpose.msra.mxu0 0.0
    %855 = vmatprep.subr.mxu0 0.0
    %856 = vmatpush2.xpose.msra.mxu0 0.0
    %857 = vmatprep.subr.mxu0 0.0
    %858 = vmatpush2.xpose.msra.mxu0 0.0
    %859 = vmatprep.subr.mxu0 0.0
    %860 = vmatpush2.xpose.msra.mxu0 0.0
    %861 = vmatprep.subr.mxu0 0.0
    %862 = vmatpush2.xpose.msra.mxu0 0.0
    %863 = vmatprep.subr.mxu0 0.0
    %864 = vmatpush2.xpose.msra.mxu0 0.0
    %865 = vmatprep.subr.mxu0 0.0
    %866 = vmatpush2.xpose.msra.mxu0 0.0
    %867 = vmatprep.subr.mxu0 0.0
    %868 = vmatpush2.xpose.msra.mxu0 0.0
    %869 = vmatprep.subr.mxu0 0.0
    %870 = vmatpush2.xpose.msra.mxu0 0.0
    %871 = vmatprep.subr.mxu0 0.0
    %872 = vmatpush2.xpose.msra.mxu0 0.0
    %873 = vmatprep.subr.mxu0 0.0
    %874 = vmatpush2.xpose.msra.mxu0 0.0
    %875 = vmatprep.subr.mxu0 0.0
    %876 = vmatpush2.xpose.msra.mxu0 0.0
    %877 = vmatprep.subr.mxu0 0.0
    %878 = vmatpush2.xpose.msra.mxu0 0.0
    %879 = vmatprep.subr.mxu0 0.0
    %880 = vmatpush2.xpose.msra.mxu0 0.0
    %881 = vmatprep.subr.mxu0 0.0
    %882 = vmatpush2.xpose.msra.mxu0 0.0
    %883 = vmatprep.mubr.f32.mxu0 0.0
    %884 = vmatmul.mubr.f32.gmra.mxu0 %v815
    %v885 = vpop.f32.mrf.mxu0
    %v886 = vadd.f32 0.0, %v885
    %v887 = vpop.f32.mrf.mxu0
    %888 = vdwg.mxu0
    %889 = vrot.lane.b32.xlu0 %v552, 96
    %v890 = vpop.permute.xlu0 %889
    %v891 = vsel %vm586, %v527, 0
    %v893 = vsel %vm586, %v890, 0
    %895 = vmatprep.subr.mxu0 0.0
    %896 = vmatpush1.xpose.msra.mxu0 0.0
    %897 = vmatprep.subr.mxu0 0.0
    %898 = vmatpush1.xpose.msra.mxu0 0.0
    %899 = vmatprep.subr.mxu0 0.0
    %900 = vmatpush1.xpose.msra.mxu0 0.0
    %901 = vmatprep.subr.mxu0 0.0
    %902 = vmatpush1.xpose.msra.mxu0 0.0
    %903 = vmatprep.subr.mxu0 0.0
    %904 = vmatpush1.xpose.msra.mxu0 0.0
    %905 = vmatprep.subr.mxu0 0.0
    %906 = vmatpush1.xpose.msra.mxu0 0.0
    %907 = vmatprep.subr.mxu0 0.0
    %908 = vmatpush1.xpose.msra.mxu0 0.0
    %909 = vmatprep.subr.mxu0 0.0
    %910 = vmatpush1.xpose.msra.mxu0 0.0
    %911 = vmatprep.subr.mxu0 0.0
    %912 = vmatpush1.xpose.msra.mxu0 0.0
    %913 = vmatprep.subr.mxu0 0.0
    %914 = vmatpush1.xpose.msra.mxu0 0.0
    %915 = vmatprep.subr.mxu0 0.0
    %916 = vmatpush1.xpose.msra.mxu0 0.0
    %917 = vmatprep.subr.mxu0 0.0
    %918 = vmatpush1.xpose.msra.mxu0 0.0
    %919 = vmatprep.subr.mxu0 0.0
    %920 = vmatpush1.xpose.msra.mxu0 0.0
    %921 = vmatprep.subr.mxu0 0.0
    %922 = vmatpush1.xpose.msra.mxu0 0.0
    %923 = vmatprep.subr.mxu0 0.0
    %924 = vmatpush1.xpose.msra.mxu0 0.0
    %925 = vmatprep.subr.mxu0 0.0
    %926 = vmatpush1.xpose.msra.mxu0 %v893
    %927 = vmatprep.subr.mxu0 0.0
    %928 = vmatpush2.xpose.msra.mxu0 0.0
    %929 = vmatprep.subr.mxu0 0.0
    %930 = vmatpush2.xpose.msra.mxu0 0.0
    %931 = vmatprep.subr.mxu0 0.0
    %932 = vmatpush2.xpose.msra.mxu0 0.0
    %933 = vmatprep.subr.mxu0 0.0
    %934 = vmatpush2.xpose.msra.mxu0 0.0
    %935 = vmatprep.subr.mxu0 0.0
    %936 = vmatpush2.xpose.msra.mxu0 0.0
    %937 = vmatprep.subr.mxu0 0.0
    %938 = vmatpush2.xpose.msra.mxu0 0.0
    %939 = vmatprep.subr.mxu0 0.0
    %940 = vmatpush2.xpose.msra.mxu0 0.0
    %941 = vmatprep.subr.mxu0 0.0
    %942 = vmatpush2.xpose.msra.mxu0 0.0
    %943 = vmatprep.subr.mxu0 0.0
    %944 = vmatpush2.xpose.msra.mxu0 0.0
    %945 = vmatprep.subr.mxu0 0.0
    %946 = vmatpush2.xpose.msra.mxu0 0.0
    %947 = vmatprep.subr.mxu0 0.0
    %948 = vmatpush2.xpose.msra.mxu0 0.0
    %949 = vmatprep.subr.mxu0 0.0
    %950 = vmatpush2.xpose.msra.mxu0 0.0
    %951 = vmatprep.subr.mxu0 0.0
    %952 = vmatpush2.xpose.msra.mxu0 0.0
    %953 = vmatprep.subr.mxu0 0.0
    %954 = vmatpush2.xpose.msra.mxu0 0.0
    %955 = vmatprep.subr.mxu0 0.0
    %956 = vmatpush2.xpose.msra.mxu0 0.0
    %957 = vmatprep.subr.mxu0 0.0
    %958 = vmatpush2.xpose.msra.mxu0 0.0
    %959 = vmatprep.mubr.f32.mxu0 0.0
    %960 = vmatmul.mubr.f32.gmra.mxu0 %v891
    %v961 = vpop.f32.mrf.mxu0
    %v962 = vadd.f32 0.0, %v961
    %v963 = vpop.f32.mrf.mxu0
    %964 = vdwg.mxu0
    %965 = vrot.lane.b32.xlu0 %v554, 96
    %v966 = vpop.permute.xlu0 %965
    %v967 = vsel %vm586, %v529, 0
    %v969 = vsel %vm586, %v966, 0
    %971 = vmatprep.subr.mxu0 0.0
    %972 = vmatpush1.xpose.msra.mxu0 0.0
    %973 = vmatprep.subr.mxu0 0.0
    %974 = vmatpush1.xpose.msra.mxu0 0.0
    %975 = vmatprep.subr.mxu0 0.0
    %976 = vmatpush1.xpose.msra.mxu0 0.0
    %977 = vmatprep.subr.mxu0 0.0
    %978 = vmatpush1.xpose.msra.mxu0 0.0
    %979 = vmatprep.subr.mxu0 0.0
    %980 = vmatpush1.xpose.msra.mxu0 0.0
    %981 = vmatprep.subr.mxu0 0.0
    %982 = vmatpush1.xpose.msra.mxu0 0.0
    %983 = vmatprep.subr.mxu0 0.0
    %984 = vmatpush1.xpose.msra.mxu0 0.0
    %985 = vmatprep.subr.mxu0 0.0
    %986 = vmatpush1.xpose.msra.mxu0 0.0
    %987 = vmatprep.subr.mxu0 0.0
    %988 = vmatpush1.xpose.msra.mxu0 0.0
    %989 = vmatprep.subr.mxu0 0.0
    %990 = vmatpush1.xpose.msra.mxu0 0.0
    %991 = vmatprep.subr.mxu0 0.0
    %992 = vmatpush1.xpose.msra.mxu0 0.0
    %993 = vmatprep.subr.mxu0 0.0
    %994 = vmatpush1.xpose.msra.mxu0 0.0
    %995 = vmatprep.subr.mxu0 0.0
    %996 = vmatpush1.xpose.msra.mxu0 0.0
    %997 = vmatprep.subr.mxu0 0.0
    %998 = vmatpush1.xpose.msra.mxu0 0.0
    %999 = vmatprep.subr.mxu0 0.0
    %1000 = vmatpush1.xpose.msra.mxu0 0.0
    %1001 = vmatprep.subr.mxu0 0.0
    %1002 = vmatpush1.xpose.msra.mxu0 %v969
    %1003 = vmatprep.subr.mxu0 0.0
    %1004 = vmatpush2.xpose.msra.mxu0 0.0
    %1005 = vmatprep.subr.mxu0 0.0
    %1006 = vmatpush2.xpose.msra.mxu0 0.0
    %1007 = vmatprep.subr.mxu0 0.0
    %1008 = vmatpush2.xpose.msra.mxu0 0.0
    %1009 = vmatprep.subr.mxu0 0.0
    %1010 = vmatpush2.xpose.msra.mxu0 0.0
    %1011 = vmatprep.subr.mxu0 0.0
    %1012 = vmatpush2.xpose.msra.mxu0 0.0
    %1013 = vmatprep.subr.mxu0 0.0
    %1014 = vmatpush2.xpose.msra.mxu0 0.0
    %1015 = vmatprep.subr.mxu0 0.0
    %1016 = vmatpush2.xpose.msra.mxu0 0.0
    %1017 = vmatprep.subr.mxu0 0.0
    %1018 = vmatpush2.xpose.msra.mxu0 0.0
    %1019 = vmatprep.subr.mxu0 0.0
    %1020 = vmatpush2.xpose.msra.mxu0 0.0
    %1021 = vmatprep.subr.mxu0 0.0
    %1022 = vmatpush2.xpose.msra.mxu0 0.0
    %1023 = vmatprep.subr.mxu0 0.0
    %1024 = vmatpush2.xpose.msra.mxu0 0.0
    %1025 = vmatprep.subr.mxu0 0.0
    %1026 = vmatpush2.xpose.msra.mxu0 0.0
    %1027 = vmatprep.subr.mxu0 0.0
    %1028 = vmatpush2.xpose.msra.mxu0 0.0
    %1029 = vmatprep.subr.mxu0 0.0
    %1030 = vmatpush2.xpose.msra.mxu0 0.0
    %1031 = vmatprep.subr.mxu0 0.0
    %1032 = vmatpush2.xpose.msra.mxu0 0.0
    %1033 = vmatprep.subr.mxu0 0.0
    %1034 = vmatpush2.xpose.msra.mxu0 0.0
    %1035 = vmatprep.mubr.f32.mxu0 0.0
    %1036 = vmatmul.mubr.f32.gmra.mxu0 %v967
    %v1037 = vpop.f32.mrf.mxu0
    %v1038 = vadd.f32 0.0, %v1037
    %v1039 = vpop.f32.mrf.mxu0
    %1040 = vdwg.mxu0
    %1041 = vrot.lane.b32.xlu0 %v556, 96
    %v1042 = vpop.permute.xlu0 %1041
    %v1043 = vsel %vm586, %v531, 0
    %v1045 = vsel %vm586, %v1042, 0
    %1047 = vmatprep.subr.mxu0 0.0
    %1048 = vmatpush1.xpose.msra.mxu0 0.0
    %1049 = vmatprep.subr.mxu0 0.0
    %1050 = vmatpush1.xpose.msra.mxu0 0.0
    %1051 = vmatprep.subr.mxu0 0.0
    %1052 = vmatpush1.xpose.msra.mxu0 0.0
    %1053 = vmatprep.subr.mxu0 0.0
    %1054 = vmatpush1.xpose.msra.mxu0 0.0
    %1055 = vmatprep.subr.mxu0 0.0
    %1056 = vmatpush1.xpose.msra.mxu0 0.0
    %1057 = vmatprep.subr.mxu0 0.0
    %1058 = vmatpush1.xpose.msra.mxu0 0.0
    %1059 = vmatprep.subr.mxu0 0.0
    %1060 = vmatpush1.xpose.msra.mxu0 0.0
    %1061 = vmatprep.subr.mxu0 0.0
    %1062 = vmatpush1.xpose.msra.mxu0 0.0
    %1063 = vmatprep.subr.mxu0 0.0
    %1064 = vmatpush1.xpose.msra.mxu0 0.0
    %1065 = vmatprep.subr.mxu0 0.0
    %1066 = vmatpush1.xpose.msra.mxu0 0.0
    %1067 = vmatprep.subr.mxu0 0.0
    %1068 = vmatpush1.xpose.msra.mxu0 0.0
    %1069 = vmatprep.subr.mxu0 0.0
    %1070 = vmatpush1.xpose.msra.mxu0 0.0
    %1071 = vmatprep.subr.mxu0 0.0
    %1072 = vmatpush1.xpose.msra.mxu0 0.0
    %1073 = vmatprep.subr.mxu0 0.0
    %1074 = vmatpush1.xpose.msra.mxu0 0.0
    %1075 = vmatprep.subr.mxu0 0.0
    %1076 = vmatpush1.xpose.msra.mxu0 0.0
    %1077 = vmatprep.subr.mxu0 0.0
    %1078 = vmatpush1.xpose.msra.mxu0 %v1045
    %1079 = vmatprep.subr.mxu0 0.0
    %1080 = vmatpush2.xpose.msra.mxu0 0.0
    %1081 = vmatprep.subr.mxu0 0.0
    %1082 = vmatpush2.xpose.msra.mxu0 0.0
    %1083 = vmatprep.subr.mxu0 0.0
    %1084 = vmatpush2.xpose.msra.mxu0 0.0
    %1085 = vmatprep.subr.mxu0 0.0
    %1086 = vmatpush2.xpose.msra.mxu0 0.0
    %1087 = vmatprep.subr.mxu0 0.0
    %1088 = vmatpush2.xpose.msra.mxu0 0.0
    %1089 = vmatprep.subr.mxu0 0.0
    %1090 = vmatpush2.xpose.msra.mxu0 0.0
    %1091 = vmatprep.subr.mxu0 0.0
    %1092 = vmatpush2.xpose.msra.mxu0 0.0
    %1093 = vmatprep.subr.mxu0 0.0
    %1094 = vmatpush2.xpose.msra.mxu0 0.0
    %1095 = vmatprep.subr.mxu0 0.0
    %1096 = vmatpush2.xpose.msra.mxu0 0.0
    %1097 = vmatprep.subr.mxu0 0.0
    %1098 = vmatpush2.xpose.msra.mxu0 0.0
    %1099 = vmatprep.subr.mxu0 0.0
    %1100 = vmatpush2.xpose.msra.mxu0 0.0
    %1101 = vmatprep.subr.mxu0 0.0
    %1102 = vmatpush2.xpose.msra.mxu0 0.0
    %1103 = vmatprep.subr.mxu0 0.0
    %1104 = vmatpush2.xpose.msra.mxu0 0.0
    %1105 = vmatprep.subr.mxu0 0.0
    %1106 = vmatpush2.xpose.msra.mxu0 0.0
    %1107 = vmatprep.subr.mxu0 0.0
    %1108 = vmatpush2.xpose.msra.mxu0 0.0
    %1109 = vmatprep.subr.mxu0 0.0
    %1110 = vmatpush2.xpose.msra.mxu0 0.0
    %1111 = vmatprep.mubr.f32.mxu0 0.0
    %1112 = vmatmul.mubr.f32.gmra.mxu0 %v1043
    %v1113 = vpop.f32.mrf.mxu0
    %v1114 = vadd.f32 0.0, %v1113
    %v1115 = vpop.f32.mrf.mxu0
    %1116 = vdwg.mxu0
    %1117 = vrot.lane.b32.xlu0 %v558, 96
    %v1118 = vpop.permute.xlu0 %1117
    %v1119 = vsel %vm586, %v533, 0
    %v1121 = vsel %vm586, %v1118, 0
    %1123 = vmatprep.subr.mxu0 0.0
    %1124 = vmatpush1.xpose.msra.mxu0 0.0
    %1125 = vmatprep.subr.mxu0 0.0
    %1126 = vmatpush1.xpose.msra.mxu0 0.0
    %1127 = vmatprep.subr.mxu0 0.0
    %1128 = vmatpush1.xpose.msra.mxu0 0.0
    %1129 = vmatprep.subr.mxu0 0.0
    %1130 = vmatpush1.xpose.msra.mxu0 0.0
    %1131 = vmatprep.subr.mxu0 0.0
    %1132 = vmatpush1.xpose.msra.mxu0 0.0
    %1133 = vmatprep.subr.mxu0 0.0
    %1134 = vmatpush1.xpose.msra.mxu0 0.0
    %1135 = vmatprep.subr.mxu0 0.0
    %1136 = vmatpush1.xpose.msra.mxu0 0.0
    %1137 = vmatprep.subr.mxu0 0.0
    %1138 = vmatpush1.xpose.msra.mxu0 0.0
    %1139 = vmatprep.subr.mxu0 0.0
    %1140 = vmatpush1.xpose.msra.mxu0 0.0
    %1141 = vmatprep.subr.mxu0 0.0
    %1142 = vmatpush1.xpose.msra.mxu0 0.0
    %1143 = vmatprep.subr.mxu0 0.0
    %1144 = vmatpush1.xpose.msra.mxu0 0.0
    %1145 = vmatprep.subr.mxu0 0.0
    %1146 = vmatpush1.xpose.msra.mxu0 0.0
    %1147 = vmatprep.subr.mxu0 0.0
    %1148 = vmatpush1.xpose.msra.mxu0 0.0
    %1149 = vmatprep.subr.mxu0 0.0
    %1150 = vmatpush1.xpose.msra.mxu0 0.0
    %1151 = vmatprep.subr.mxu0 0.0
    %1152 = vmatpush1.xpose.msra.mxu0 0.0
    %1153 = vmatprep.subr.mxu0 0.0
    %1154 = vmatpush1.xpose.msra.mxu0 %v1121
    %1155 = vmatprep.subr.mxu0 0.0
    %1156 = vmatpush2.xpose.msra.mxu0 0.0
    %1157 = vmatprep.subr.mxu0 0.0
    %1158 = vmatpush2.xpose.msra.mxu0 0.0
    %1159 = vmatprep.subr.mxu0 0.0
    %1160 = vmatpush2.xpose.msra.mxu0 0.0
    %1161 = vmatprep.subr.mxu0 0.0
    %1162 = vmatpush2.xpose.msra.mxu0 0.0
    %1163 = vmatprep.subr.mxu0 0.0
    %1164 = vmatpush2.xpose.msra.mxu0 0.0
    %1165 = vmatprep.subr.mxu0 0.0
    %1166 = vmatpush2.xpose.msra.mxu0 0.0
    %1167 = vmatprep.subr.mxu0 0.0
    %1168 = vmatpush2.xpose.msra.mxu0 0.0
    %1169 = vmatprep.subr.mxu0 0.0
    %1170 = vmatpush2.xpose.msra.mxu0 0.0
    %1171 = vmatprep.subr.mxu0 0.0
    %1172 = vmatpush2.xpose.msra.mxu0 0.0
    %1173 = vmatprep.subr.mxu0 0.0
    %1174 = vmatpush2.xpose.msra.mxu0 0.0
    %1175 = vmatprep.subr.mxu0 0.0
    %1176 = vmatpush2.xpose.msra.mxu0 0.0
    %1177 = vmatprep.subr.mxu0 0.0
    %1178 = vmatpush2.xpose.msra.mxu0 0.0
    %1179 = vmatprep.subr.mxu0 0.0
    %1180 = vmatpush2.xpose.msra.mxu0 0.0
    %1181 = vmatprep.subr.mxu0 0.0
    %1182 = vmatpush2.xpose.msra.mxu0 0.0
    %1183 = vmatprep.subr.mxu0 0.0
    %1184 = vmatpush2.xpose.msra.mxu0 0.0
    %1185 = vmatprep.subr.mxu0 0.0
    %1186 = vmatpush2.xpose.msra.mxu0 0.0
    %1187 = vmatprep.mubr.f32.mxu0 0.0
    %1188 = vmatmul.mubr.f32.gmra.mxu0 %v1119
    %v1189 = vpop.f32.mrf.mxu0
    %v1190 = vadd.f32 0.0, %v1189
    %v1191 = vpop.f32.mrf.mxu0
    %1192 = vdwg.mxu0
    %v1193 = vmul.f32 %v658, 0.35355338
    %v1194 = vmul.f32 %v734, 0.35355338
    %v1195 = vmul.f32 %v810, 0.35355338
    %v1196 = vmul.f32 %v886, 0.35355338
    %v1197 = vmul.f32 %v962, 0.35355338
    %v1198 = vmul.f32 %v1038, 0.35355338
    %v1199 = vmul.f32 %v1114, 0.35355338
    %v1200 = vmul.f32 %v1190, 0.35355338
    %v1201 = vadd.f32 %v1193, %v420
    %v1202 = vadd.f32 %v1194, %v421
    %v1203 = vadd.f32 %v1195, %v422
    %v1204 = vadd.f32 %v1196, %v423
    %v1205 = vadd.f32 %v1197, %v424
    %v1206 = vadd.f32 %v1198, %v425
    %v1207 = vadd.f32 %v1199, %v426
    %v1208 = vadd.f32 %v1200, %v427
    %v1209 = vsel %vm586, %v1201, -inf
    %1210 = vmax.xlane.f32.xlu0 %v1209
    %v1211 = vpop.xlane.xlu0 %1210
    %v1212 = vsel %vm586, %v1202, -inf
    %1213 = vmax.xlane.f32.xlu0 %v1212
    %v1214 = vpop.xlane.xlu0 %1213
    %v1215 = vsel %vm586, %v1203, -inf
    %1216 = vmax.xlane.f32.xlu0 %v1215
    %v1217 = vpop.xlane.xlu0 %1216
    %v1218 = vsel %vm586, %v1204, -inf
    %1219 = vmax.xlane.f32.xlu0 %v1218
    %v1220 = vpop.xlane.xlu0 %1219
    %v1221 = vsel %vm586, %v1205, -inf
    %1222 = vmax.xlane.f32.xlu0 %v1221
    %v1223 = vpop.xlane.xlu0 %1222
    %v1224 = vsel %vm586, %v1206, -inf
    %1225 = vmax.xlane.f32.xlu0 %v1224
    %v1226 = vpop.xlane.xlu0 %1225
    %v1227 = vsel %vm586, %v1207, -inf
    %1228 = vmax.xlane.f32.xlu0 %v1227
    %v1229 = vpop.xlane.xlu0 %1228
    %v1230 = vsel %vm586, %v1208, -inf
    %1231 = vmax.xlane.f32.xlu0 %v1230
    %v1232 = vpop.xlane.xlu0 %1231
    %v1233 = vsub.f32 %v1201, %v1211
    %v1234 = vsub.f32 %v1202, %v1214
    %v1235 = vsub.f32 %v1203, %v1217
    %v1236 = vsub.f32 %v1204, %v1220
    %v1237 = vsub.f32 %v1205, %v1223
    %v1238 = vsub.f32 %v1206, %v1226
    %v1239 = vsub.f32 %v1207, %v1229
    %v1240 = vsub.f32 %v1208, %v1232
    %v1241 = vmul.f32 %v1233, 1.442695
    %v1242 = vpow.pop %v1241
    %v1243 = vmul.f32 %v1234, 1.442695
    %v1244 = vpow.pop %v1243
    %v1245 = vmul.f32 %v1235, 1.442695
    %v1246 = vpow.pop %v1245
    %v1247 = vmul.f32 %v1236, 1.442695
    %v1248 = vpow.pop %v1247
    %v1249 = vmul.f32 %v1237, 1.442695
    %v1250 = vpow.pop %v1249
    %v1251 = vmul.f32 %v1238, 1.442695
    %v1252 = vpow.pop %v1251
    %v1253 = vmul.f32 %v1239, 1.442695
    %v1254 = vpow.pop %v1253
    %v1255 = vmul.f32 %v1240, 1.442695
    %v1256 = vpow.pop %v1255
    %v1257 = vsel %vm586, %v1242, 0.0
    %1258 = vadd.xlane.f32.xlu0 %v1257
    %v1259 = vpop.xlane.xlu0 %1258
    %v1260 = vsel %vm586, %v1244, 0.0
    %1261 = vadd.xlane.f32.xlu0 %v1260
    %v1262 = vpop.xlane.xlu0 %1261
    %v1263 = vsel %vm586, %v1246, 0.0
    %1264 = vadd.xlane.f32.xlu0 %v1263
    %v1265 = vpop.xlane.xlu0 %1264
    %v1266 = vsel %vm586, %v1248, 0.0
    %1267 = vadd.xlane.f32.xlu0 %v1266
    %v1268 = vpop.xlane.xlu0 %1267
    %v1269 = vsel %vm586, %v1250, 0.0
    %1270 = vadd.xlane.f32.xlu0 %v1269
    %v1271 = vpop.xlane.xlu0 %1270
    %v1272 = vsel %vm586, %v1252, 0.0
    %1273 = vadd.xlane.f32.xlu0 %v1272
    %v1274 = vpop.xlane.xlu0 %1273
    %v1275 = vsel %vm586, %v1254, 0.0
    %1276 = vadd.xlane.f32.xlu0 %v1275
    %v1277 = vpop.xlane.xlu0 %1276
    %v1278 = vsel %vm586, %v1256, 0.0
    %1279 = vadd.xlane.f32.xlu0 %v1278
    %v1280 = vpop.xlane.xlu0 %1279
    %v1281 = vrcp.pop %v1259
    %v1282 = vmul.f32 %v1242, %v1281
    %v1283 = vrcp.pop %v1262
    %v1284 = vmul.f32 %v1244, %v1283
    %v1285 = vrcp.pop %v1265
    %v1286 = vmul.f32 %v1246, %v1285
    %v1287 = vrcp.pop %v1268
    %v1288 = vmul.f32 %v1248, %v1287
    %v1289 = vrcp.pop %v1271
    %v1290 = vmul.f32 %v1250, %v1289
    %v1291 = vrcp.pop %v1274
    %v1292 = vmul.f32 %v1252, %v1291
    %v1293 = vrcp.pop %v1277
    %v1294 = vmul.f32 %v1254, %v1293
    %v1295 = vrcp.pop %v1280
    %v1296 = vmul.f32 %v1256, %v1295
    %1297 = vrot.lane.b32.xlu0 %v568, 64
    %v1298 = vpop.permute.xlu0 %1297
    %v1301 = vsel %vm586, %v1282, 0
    %1303 = vmatprep.subr.mxu0 0.0
    %1304 = vmatpush1.msra.mxu0 0.0
    %1305 = vmatprep.subr.mxu0 0.0
    %1306 = vmatpush1.msra.mxu0 0.0
    %1307 = vmatprep.subr.mxu0 0.0
    %1308 = vmatpush1.msra.mxu0 0.0
    %1309 = vmatprep.subr.mxu0 0.0
    %1310 = vmatpush1.msra.mxu0 0.0
    %1311 = vmatprep.subr.mxu0 0.0
    %1312 = vmatpush1.msra.mxu0 0.0
    %1313 = vmatprep.subr.mxu0 0.0
    %1314 = vmatpush1.msra.mxu0 0.0
    %1315 = vmatprep.subr.mxu0 0.0
    %1316 = vmatpush1.msra.mxu0 0.0
    %1317 = vmatprep.subr.mxu0 0.0
    %1318 = vmatpush1.msra.mxu0 0.0
    %1319 = vmatprep.subr.mxu0 0.0
    %1320 = vmatpush1.msra.mxu0 0.0
    %1321 = vmatprep.subr.mxu0 0.0
    %1322 = vmatpush1.msra.mxu0 0.0
    %1323 = vmatprep.subr.mxu0 0.0
    %1324 = vmatpush1.msra.mxu0 0.0
    %1325 = vmatprep.subr.mxu0 0.0
    %1326 = vmatpush1.msra.mxu0 0.0
    %1327 = vmatprep.subr.mxu0 0.0
    %1328 = vmatpush1.msra.mxu0 0.0
    %1329 = vmatprep.subr.mxu0 0.0
    %1330 = vmatpush1.msra.mxu0 0.0
    %1331 = vmatprep.subr.mxu0 0.0
    %1332 = vmatpush1.msra.mxu0 0.0
    %1333 = vmatprep.subr.mxu0 0.0
    %1334 = vmatpush1.msra.mxu0 %v1298
    %1335 = vmatprep.subr.mxu0 0.0
    %1336 = vmatpush2.msra.mxu0 0.0
    %1337 = vmatprep.subr.mxu0 0.0
    %1338 = vmatpush2.msra.mxu0 0.0
    %1339 = vmatprep.subr.mxu0 0.0
    %1340 = vmatpush2.msra.mxu0 0.0
    %1341 = vmatprep.subr.mxu0 0.0
    %1342 = vmatpush2.msra.mxu0 0.0
    %1343 = vmatprep.subr.mxu0 0.0
    %1344 = vmatpush2.msra.mxu0 0.0
    %1345 = vmatprep.subr.mxu0 0.0
    %1346 = vmatpush2.msra.mxu0 0.0
    %1347 = vmatprep.subr.mxu0 0.0
    %1348 = vmatpush2.msra.mxu0 0.0
    %1349 = vmatprep.subr.mxu0 0.0
    %1350 = vmatpush2.msra.mxu0 0.0
    %1351 = vmatprep.subr.mxu0 0.0
    %1352 = vmatpush2.msra.mxu0 0.0
    %1353 = vmatprep.subr.mxu0 0.0
    %1354 = vmatpush2.msra.mxu0 0.0
    %1355 = vmatprep.subr.mxu0 0.0
    %1356 = vmatpush2.msra.mxu0 0.0
    %1357 = vmatprep.subr.mxu0 0.0
    %1358 = vmatpush2.msra.mxu0 0.0
    %1359 = vmatprep.subr.mxu0 0.0
    %1360 = vmatpush2.msra.mxu0 0.0
    %1361 = vmatprep.subr.mxu0 0.0
    %1362 = vmatpush2.msra.mxu0 0.0
    %1363 = vmatprep.subr.mxu0 0.0
    %1364 = vmatpush2.msra.mxu0 0.0
    %1365 = vmatprep.subr.mxu0 0.0
    %1366 = vmatpush2.msra.mxu0 0.0
    %1367 = vmatprep.mubr.f32.mxu0 0.0
    %1368 = vmatmul.mubr.f32.gmra.mxu0 %v1301
    %v1369 = vpop.f32.mrf.mxu0
    %v1370 = vadd.f32 0.0, %v1369
    %v1371 = vpop.f32.mrf.mxu0
    %1372 = vdwg.mxu0
    %1373 = vrot.lane.b32.xlu0 %v569, 64
    %v1374 = vpop.permute.xlu0 %1373
    %v1377 = vsel %vm586, %v1284, 0
    %1379 = vmatprep.subr.mxu0 0.0
    %1380 = vmatpush1.msra.mxu0 0.0
    %1381 = vmatprep.subr.mxu0 0.0
    %1382 = vmatpush1.msra.mxu0 0.0
    %1383 = vmatprep.subr.mxu0 0.0
    %1384 = vmatpush1.msra.mxu0 0.0
    %1385 = vmatprep.subr.mxu0 0.0
    %1386 = vmatpush1.msra.mxu0 0.0
    %1387 = vmatprep.subr.mxu0 0.0
    %1388 = vmatpush1.msra.mxu0 0.0
    %1389 = vmatprep.subr.mxu0 0.0
    %1390 = vmatpush1.msra.mxu0 0.0
    %1391 = vmatprep.subr.mxu0 0.0
    %1392 = vmatpush1.msra.mxu0 0.0
    %1393 = vmatprep.subr.mxu0 0.0
    %1394 = vmatpush1.msra.mxu0 0.0
    %1395 = vmatprep.subr.mxu0 0.0
    %1396 = vmatpush1.msra.mxu0 0.0
    %1397 = vmatprep.subr.mxu0 0.0
    %1398 = vmatpush1.msra.mxu0 0.0
    %1399 = vmatprep.subr.mxu0 0.0
    %1400 = vmatpush1.msra.mxu0 0.0
    %1401 = vmatprep.subr.mxu0 0.0
    %1402 = vmatpush1.msra.mxu0 0.0
    %1403 = vmatprep.subr.mxu0 0.0
    %1404 = vmatpush1.msra.mxu0 0.0
    %1405 = vmatprep.subr.mxu0 0.0
    %1406 = vmatpush1.msra.mxu0 0.0
    %1407 = vmatprep.subr.mxu0 0.0
    %1408 = vmatpush1.msra.mxu0 0.0
    %1409 = vmatprep.subr.mxu0 0.0
    %1410 = vmatpush1.msra.mxu0 %v1374
    %1411 = vmatprep.subr.mxu0 0.0
    %1412 = vmatpush2.msra.mxu0 0.0
    %1413 = vmatprep.subr.mxu0 0.0
    %1414 = vmatpush2.msra.mxu0 0.0
    %1415 = vmatprep.subr.mxu0 0.0
    %1416 = vmatpush2.msra.mxu0 0.0
    %1417 = vmatprep.subr.mxu0 0.0
    %1418 = vmatpush2.msra.mxu0 0.0
    %1419 = vmatprep.subr.mxu0 0.0
    %1420 = vmatpush2.msra.mxu0 0.0
    %1421 = vmatprep.subr.mxu0 0.0
    %1422 = vmatpush2.msra.mxu0 0.0
    %1423 = vmatprep.subr.mxu0 0.0
    %1424 = vmatpush2.msra.mxu0 0.0
    %1425 = vmatprep.subr.mxu0 0.0
    %1426 = vmatpush2.msra.mxu0 0.0
    %1427 = vmatprep.subr.mxu0 0.0
    %1428 = vmatpush2.msra.mxu0 0.0
    %1429 = vmatprep.subr.mxu0 0.0
    %1430 = vmatpush2.msra.mxu0 0.0
    %1431 = vmatprep.subr.mxu0 0.0
    %1432 = vmatpush2.msra.mxu0 0.0
    %1433 = vmatprep.subr.mxu0 0.0
    %1434 = vmatpush2.msra.mxu0 0.0
    %1435 = vmatprep.subr.mxu0 0.0
    %1436 = vmatpush2.msra.mxu0 0.0
    %1437 = vmatprep.subr.mxu0 0.0
    %1438 = vmatpush2.msra.mxu0 0.0
    %1439 = vmatprep.subr.mxu0 0.0
    %1440 = vmatpush2.msra.mxu0 0.0
    %1441 = vmatprep.subr.mxu0 0.0
    %1442 = vmatpush2.msra.mxu0 0.0
    %1443 = vmatprep.mubr.f32.mxu0 0.0
    %1444 = vmatmul.mubr.f32.gmra.mxu0 %v1377
    %v1445 = vpop.f32.mrf.mxu0
    %v1446 = vadd.f32 0.0, %v1445
    %v1447 = vpop.f32.mrf.mxu0
    %1448 = vdwg.mxu0
    %1449 = vrot.lane.b32.xlu0 %v572, 64
    %v1450 = vpop.permute.xlu0 %1449
    %v1453 = vsel %vm586, %v1286, 0
    %1455 = vmatprep.subr.mxu0 0.0
    %1456 = vmatpush1.msra.mxu0 0.0
    %1457 = vmatprep.subr.mxu0 0.0
    %1458 = vmatpush1.msra.mxu0 0.0
    %1459 = vmatprep.subr.mxu0 0.0
    %1460 = vmatpush1.msra.mxu0 0.0
    %1461 = vmatprep.subr.mxu0 0.0
    %1462 = vmatpush1.msra.mxu0 0.0
    %1463 = vmatprep.subr.mxu0 0.0
    %1464 = vmatpush1.msra.mxu0 0.0
    %1465 = vmatprep.subr.mxu0 0.0
    %1466 = vmatpush1.msra.mxu0 0.0
    %1467 = vmatprep.subr.mxu0 0.0
    %1468 = vmatpush1.msra.mxu0 0.0
    %1469 = vmatprep.subr.mxu0 0.0
    %1470 = vmatpush1.msra.mxu0 0.0
    %1471 = vmatprep.subr.mxu0 0.0
    %1472 = vmatpush1.msra.mxu0 0.0
    %1473 = vmatprep.subr.mxu0 0.0
    %1474 = vmatpush1.msra.mxu0 0.0
    %1475 = vmatprep.subr.mxu0 0.0
    %1476 = vmatpush1.msra.mxu0 0.0
    %1477 = vmatprep.subr.mxu0 0.0
    %1478 = vmatpush1.msra.mxu0 0.0
    %1479 = vmatprep.subr.mxu0 0.0
    %1480 = vmatpush1.msra.mxu0 0.0
    %1481 = vmatprep.subr.mxu0 0.0
    %1482 = vmatpush1.msra.mxu0 0.0
    %1483 = vmatprep.subr.mxu0 0.0
    %1484 = vmatpush1.msra.mxu0 0.0
    %1485 = vmatprep.subr.mxu0 0.0
    %1486 = vmatpush1.msra.mxu0 %v1450
    %1487 = vmatprep.subr.mxu0 0.0
    %1488 = vmatpush2.msra.mxu0 0.0
    %1489 = vmatprep.subr.mxu0 0.0
    %1490 = vmatpush2.msra.mxu0 0.0
    %1491 = vmatprep.subr.mxu0 0.0
    %1492 = vmatpush2.msra.mxu0 0.0
    %1493 = vmatprep.subr.mxu0 0.0
    %1494 = vmatpush2.msra.mxu0 0.0
    %1495 = vmatprep.subr.mxu0 0.0
    %1496 = vmatpush2.msra.mxu0 0.0
    %1497 = vmatprep.subr.mxu0 0.0
    %1498 = vmatpush2.msra.mxu0 0.0
    %1499 = vmatprep.subr.mxu0 0.0
    %1500 = vmatpush2.msra.mxu0 0.0
    %1501 = vmatprep.subr.mxu0 0.0
    %1502 = vmatpush2.msra.mxu0 0.0
    %1503 = vmatprep.subr.mxu0 0.0
    %1504 = vmatpush2.msra.mxu0 0.0
    %1505 = vmatprep.subr.mxu0 0.0
    %1506 = vmatpush2.msra.mxu0 0.0
    %1507 = vmatprep.subr.mxu0 0.0
    %1508 = vmatpush2.msra.mxu0 0.0
    %1509 = vmatprep.subr.mxu0 0.0
    %1510 = vmatpush2.msra.mxu0 0.0
    %1511 = vmatprep.subr.mxu0 0.0
    %1512 = vmatpush2.msra.mxu0 0.0
    %1513 = vmatprep.subr.mxu0 0.0
    %1514 = vmatpush2.msra.mxu0 0.0
    %1515 = vmatprep.subr.mxu0 0.0
    %1516 = vmatpush2.msra.mxu0 0.0
    %1517 = vmatprep.subr.mxu0 0.0
    %1518 = vmatpush2.msra.mxu0 0.0
    %1519 = vmatprep.mubr.f32.mxu0 0.0
    %1520 = vmatmul.mubr.f32.gmra.mxu0 %v1453
    %v1521 = vpop.f32.mrf.mxu0
    %v1522 = vadd.f32 0.0, %v1521
    %v1523 = vpop.f32.mrf.mxu0
    %1524 = vdwg.mxu0
    %1525 = vrot.lane.b32.xlu0 %v575, 64
    %v1526 = vpop.permute.xlu0 %1525
    %v1529 = vsel %vm586, %v1288, 0
    %1531 = vmatprep.subr.mxu0 0.0
    %1532 = vmatpush1.msra.mxu0 0.0
    %1533 = vmatprep.subr.mxu0 0.0
    %1534 = vmatpush1.msra.mxu0 0.0
    %1535 = vmatprep.subr.mxu0 0.0
    %1536 = vmatpush1.msra.mxu0 0.0
    %1537 = vmatprep.subr.mxu0 0.0
    %1538 = vmatpush1.msra.mxu0 0.0
    %1539 = vmatprep.subr.mxu0 0.0
    %1540 = vmatpush1.msra.mxu0 0.0
    %1541 = vmatprep.subr.mxu0 0.0
    %1542 = vmatpush1.msra.mxu0 0.0
    %1543 = vmatprep.subr.mxu0 0.0
    %1544 = vmatpush1.msra.mxu0 0.0
    %1545 = vmatprep.subr.mxu0 0.0
    %1546 = vmatpush1.msra.mxu0 0.0
    %1547 = vmatprep.subr.mxu0 0.0
    %1548 = vmatpush1.msra.mxu0 0.0
    %1549 = vmatprep.subr.mxu0 0.0
    %1550 = vmatpush1.msra.mxu0 0.0
    %1551 = vmatprep.subr.mxu0 0.0
    %1552 = vmatpush1.msra.mxu0 0.0
    %1553 = vmatprep.subr.mxu0 0.0
    %1554 = vmatpush1.msra.mxu0 0.0
    %1555 = vmatprep.subr.mxu0 0.0
    %1556 = vmatpush1.msra.mxu0 0.0
    %1557 = vmatprep.subr.mxu0 0.0
    %1558 = vmatpush1.msra.mxu0 0.0
    %1559 = vmatprep.subr.mxu0 0.0
    %1560 = vmatpush1.msra.mxu0 0.0
    %1561 = vmatprep.subr.mxu0 0.0
    %1562 = vmatpush1.msra.mxu0 %v1526
    %1563 = vmatprep.subr.mxu0 0.0
    %1564 = vmatpush2.msra.mxu0 0.0
    %1565 = vmatprep.subr.mxu0 0.0
    %1566 = vmatpush2.msra.mxu0 0.0
    %1567 = vmatprep.subr.mxu0 0.0
    %1568 = vmatpush2.msra.mxu0 0.0
    %1569 = vmatprep.subr.mxu0 0.0
    %1570 = vmatpush2.msra.mxu0 0.0
    %1571 = vmatprep.subr.mxu0 0.0
    %1572 = vmatpush2.msra.mxu0 0.0
    %1573 = vmatprep.subr.mxu0 0.0
    %1574 = vmatpush2.msra.mxu0 0.0
    %1575 = vmatprep.subr.mxu0 0.0
    %1576 = vmatpush2.msra.mxu0 0.0
    %1577 = vmatprep.subr.mxu0 0.0
    %1578 = vmatpush2.msra.mxu0 0.0
    %1579 = vmatprep.subr.mxu0 0.0
    %1580 = vmatpush2.msra.mxu0 0.0
    %1581 = vmatprep.subr.mxu0 0.0
    %1582 = vmatpush2.msra.mxu0 0.0
    %1583 = vmatprep.subr.mxu0 0.0
    %1584 = vmatpush2.msra.mxu0 0.0
    %1585 = vmatprep.subr.mxu0 0.0
    %1586 = vmatpush2.msra.mxu0 0.0
    %1587 = vmatprep.subr.mxu0 0.0
    %1588 = vmatpush2.msra.mxu0 0.0
    %1589 = vmatprep.subr.mxu0 0.0
    %1590 = vmatpush2.msra.mxu0 0.0
    %1591 = vmatprep.subr.mxu0 0.0
    %1592 = vmatpush2.msra.mxu0 0.0
    %1593 = vmatprep.subr.mxu0 0.0
    %1594 = vmatpush2.msra.mxu0 0.0
    %1595 = vmatprep.mubr.f32.mxu0 0.0
    %1596 = vmatmul.mubr.f32.gmra.mxu0 %v1529
    %v1597 = vpop.f32.mrf.mxu0
    %v1598 = vadd.f32 0.0, %v1597
    %v1599 = vpop.f32.mrf.mxu0
    %1600 = vdwg.mxu0
    %1601 = vrot.lane.b32.xlu0 %v577, 64
    %v1602 = vpop.permute.xlu0 %1601
    %v1605 = vsel %vm586, %v1290, 0
    %1607 = vmatprep.subr.mxu0 0.0
    %1608 = vmatpush1.msra.mxu0 0.0
    %1609 = vmatprep.subr.mxu0 0.0
    %1610 = vmatpush1.msra.mxu0 0.0
    %1611 = vmatprep.subr.mxu0 0.0
    %1612 = vmatpush1.msra.mxu0 0.0
    %1613 = vmatprep.subr.mxu0 0.0
    %1614 = vmatpush1.msra.mxu0 0.0
    %1615 = vmatprep.subr.mxu0 0.0
    %1616 = vmatpush1.msra.mxu0 0.0
    %1617 = vmatprep.subr.mxu0 0.0
    %1618 = vmatpush1.msra.mxu0 0.0
    %1619 = vmatprep.subr.mxu0 0.0
    %1620 = vmatpush1.msra.mxu0 0.0
    %1621 = vmatprep.subr.mxu0 0.0
    %1622 = vmatpush1.msra.mxu0 0.0
    %1623 = vmatprep.subr.mxu0 0.0
    %1624 = vmatpush1.msra.mxu0 0.0
    %1625 = vmatprep.subr.mxu0 0.0
    %1626 = vmatpush1.msra.mxu0 0.0
    %1627 = vmatprep.subr.mxu0 0.0
    %1628 = vmatpush1.msra.mxu0 0.0
    %1629 = vmatprep.subr.mxu0 0.0
    %1630 = vmatpush1.msra.mxu0 0.0
    %1631 = vmatprep.subr.mxu0 0.0
    %1632 = vmatpush1.msra.mxu0 0.0
    %1633 = vmatprep.subr.mxu0 0.0
    %1634 = vmatpush1.msra.mxu0 0.0
    %1635 = vmatprep.subr.mxu0 0.0
    %1636 = vmatpush1.msra.mxu0 0.0
    %1637 = vmatprep.subr.mxu0 0.0
    %1638 = vmatpush1.msra.mxu0 %v1602
    %1639 = vmatprep.subr.mxu0 0.0
    %1640 = vmatpush2.msra.mxu0 0.0
    %1641 = vmatprep.subr.mxu0 0.0
    %1642 = vmatpush2.msra.mxu0 0.0
    %1643 = vmatprep.subr.mxu0 0.0
    %1644 = vmatpush2.msra.mxu0 0.0
    %1645 = vmatprep.subr.mxu0 0.0
    %1646 = vmatpush2.msra.mxu0 0.0
    %1647 = vmatprep.subr.mxu0 0.0
    %1648 = vmatpush2.msra.mxu0 0.0
    %1649 = vmatprep.subr.mxu0 0.0
    %1650 = vmatpush2.msra.mxu0 0.0
    %1651 = vmatprep.subr.mxu0 0.0
    %1652 = vmatpush2.msra.mxu0 0.0
    %1653 = vmatprep.subr.mxu0 0.0
    %1654 = vmatpush2.msra.mxu0 0.0
    %1655 = vmatprep.subr.mxu0 0.0
    %1656 = vmatpush2.msra.mxu0 0.0
    %1657 = vmatprep.subr.mxu0 0.0
    %1658 = vmatpush2.msra.mxu0 0.0
    %1659 = vmatprep.subr.mxu0 0.0
    %1660 = vmatpush2.msra.mxu0 0.0
    %1661 = vmatprep.subr.mxu0 0.0
    %1662 = vmatpush2.msra.mxu0 0.0
    %1663 = vmatprep.subr.mxu0 0.0
    %1664 = vmatpush2.msra.mxu0 0.0
    %1665 = vmatprep.subr.mxu0 0.0
    %1666 = vmatpush2.msra.mxu0 0.0
    %1667 = vmatprep.subr.mxu0 0.0
    %1668 = vmatpush2.msra.mxu0 0.0
    %1669 = vmatprep.subr.mxu0 0.0
    %1670 = vmatpush2.msra.mxu0 0.0
    %1671 = vmatprep.mubr.f32.mxu0 0.0
    %1672 = vmatmul.mubr.f32.gmra.mxu0 %v1605
    %v1673 = vpop.f32.mrf.mxu0
    %v1674 = vadd.f32 0.0, %v1673
    %v1675 = vpop.f32.mrf.mxu0
    %1676 = vdwg.mxu0
    %1677 = vrot.lane.b32.xlu0 %v579, 64
    %v1678 = vpop.permute.xlu0 %1677
    %v1681 = vsel %vm586, %v1292, 0
    %1683 = vmatprep.subr.mxu0 0.0
    %1684 = vmatpush1.msra.mxu0 0.0
    %1685 = vmatprep.subr.mxu0 0.0
    %1686 = vmatpush1.msra.mxu0 0.0
    %1687 = vmatprep.subr.mxu0 0.0
    %1688 = vmatpush1.msra.mxu0 0.0
    %1689 = vmatprep.subr.mxu0 0.0
    %1690 = vmatpush1.msra.mxu0 0.0
    %1691 = vmatprep.subr.mxu0 0.0
    %1692 = vmatpush1.msra.mxu0 0.0
    %1693 = vmatprep.subr.mxu0 0.0
    %1694 = vmatpush1.msra.mxu0 0.0
    %1695 = vmatprep.subr.mxu0 0.0
    %1696 = vmatpush1.msra.mxu0 0.0
    %1697 = vmatprep.subr.mxu0 0.0
    %1698 = vmatpush1.msra.mxu0 0.0
    %1699 = vmatprep.subr.mxu0 0.0
    %1700 = vmatpush1.msra.mxu0 0.0
    %1701 = vmatprep.subr.mxu0 0.0
    %1702 = vmatpush1.msra.mxu0 0.0
    %1703 = vmatprep.subr.mxu0 0.0
    %1704 = vmatpush1.msra.mxu0 0.0
    %1705 = vmatprep.subr.mxu0 0.0
    %1706 = vmatpush1.msra.mxu0 0.0
    %1707 = vmatprep.subr.mxu0 0.0
    %1708 = vmatpush1.msra.mxu0 0.0
    %1709 = vmatprep.subr.mxu0 0.0
    %1710 = vmatpush1.msra.mxu0 0.0
    %1711 = vmatprep.subr.mxu0 0.0
    %1712 = vmatpush1.msra.mxu0 0.0
    %1713 = vmatprep.subr.mxu0 0.0
    %1714 = vmatpush1.msra.mxu0 %v1678
    %1715 = vmatprep.subr.mxu0 0.0
    %1716 = vmatpush2.msra.mxu0 0.0
    %1717 = vmatprep.subr.mxu0 0.0
    %1718 = vmatpush2.msra.mxu0 0.0
    %1719 = vmatprep.subr.mxu0 0.0
    %1720 = vmatpush2.msra.mxu0 0.0
    %1721 = vmatprep.subr.mxu0 0.0
    %1722 = vmatpush2.msra.mxu0 0.0
    %1723 = vmatprep.subr.mxu0 0.0
    %1724 = vmatpush2.msra.mxu0 0.0
    %1725 = vmatprep.subr.mxu0 0.0
    %1726 = vmatpush2.msra.mxu0 0.0
    %1727 = vmatprep.subr.mxu0 0.0
    %1728 = vmatpush2.msra.mxu0 0.0
    %1729 = vmatprep.subr.mxu0 0.0
    %1730 = vmatpush2.msra.mxu0 0.0
    %1731 = vmatprep.subr.mxu0 0.0
    %1732 = vmatpush2.msra.mxu0 0.0
    %1733 = vmatprep.subr.mxu0 0.0
    %1734 = vmatpush2.msra.mxu0 0.0
    %1735 = vmatprep.subr.mxu0 0.0
    %1736 = vmatpush2.msra.mxu0 0.0
    %1737 = vmatprep.subr.mxu0 0.0
    %1738 = vmatpush2.msra.mxu0 0.0
    %1739 = vmatprep.subr.mxu0 0.0
    %1740 = vmatpush2.msra.mxu0 0.0
    %1741 = vmatprep.subr.mxu0 0.0
    %1742 = vmatpush2.msra.mxu0 0.0
    %1743 = vmatprep.subr.mxu0 0.0
    %1744 = vmatpush2.msra.mxu0 0.0
    %1745 = vmatprep.subr.mxu0 0.0
    %1746 = vmatpush2.msra.mxu0 0.0
    %1747 = vmatprep.mubr.f32.mxu0 0.0
    %1748 = vmatmul.mubr.f32.gmra.mxu0 %v1681
    %v1749 = vpop.f32.mrf.mxu0
    %v1750 = vadd.f32 0.0, %v1749
    %v1751 = vpop.f32.mrf.mxu0
    %1752 = vdwg.mxu0
    %1753 = vrot.lane.b32.xlu0 %v581, 64
    %v1754 = vpop.permute.xlu0 %1753
    %v1757 = vsel %vm586, %v1294, 0
    %1759 = vmatprep.subr.mxu0 0.0
    %1760 = vmatpush1.msra.mxu0 0.0
    %1761 = vmatprep.subr.mxu0 0.0
    %1762 = vmatpush1.msra.mxu0 0.0
    %1763 = vmatprep.subr.mxu0 0.0
    %1764 = vmatpush1.msra.mxu0 0.0
    %1765 = vmatprep.subr.mxu0 0.0
    %1766 = vmatpush1.msra.mxu0 0.0
    %1767 = vmatprep.subr.mxu0 0.0
    %1768 = vmatpush1.msra.mxu0 0.0
    %1769 = vmatprep.subr.mxu0 0.0
    %1770 = vmatpush1.msra.mxu0 0.0
    %1771 = vmatprep.subr.mxu0 0.0
    %1772 = vmatpush1.msra.mxu0 0.0
    %1773 = vmatprep.subr.mxu0 0.0
    %1774 = vmatpush1.msra.mxu0 0.0
    %1775 = vmatprep.subr.mxu0 0.0
    %1776 = vmatpush1.msra.mxu0 0.0
    %1777 = vmatprep.subr.mxu0 0.0
    %1778 = vmatpush1.msra.mxu0 0.0
    %1779 = vmatprep.subr.mxu0 0.0
    %1780 = vmatpush1.msra.mxu0 0.0
    %1781 = vmatprep.subr.mxu0 0.0
    %1782 = vmatpush1.msra.mxu0 0.0
    %1783 = vmatprep.subr.mxu0 0.0
    %1784 = vmatpush1.msra.mxu0 0.0
    %1785 = vmatprep.subr.mxu0 0.0
    %1786 = vmatpush1.msra.mxu0 0.0
    %1787 = vmatprep.subr.mxu0 0.0
    %1788 = vmatpush1.msra.mxu0 0.0
    %1789 = vmatprep.subr.mxu0 0.0
    %1790 = vmatpush1.msra.mxu0 %v1754
    %1791 = vmatprep.subr.mxu0 0.0
    %1792 = vmatpush2.msra.mxu0 0.0
    %1793 = vmatprep.subr.mxu0 0.0
    %1794 = vmatpush2.msra.mxu0 0.0
    %1795 = vmatprep.subr.mxu0 0.0
    %1796 = vmatpush2.msra.mxu0 0.0
    %1797 = vmatprep.subr.mxu0 0.0
    %1798 = vmatpush2.msra.mxu0 0.0
    %1799 = vmatprep.subr.mxu0 0.0
    %1800 = vmatpush2.msra.mxu0 0.0
    %1801 = vmatprep.subr.mxu0 0.0
    %1802 = vmatpush2.msra.mxu0 0.0
    %1803 = vmatprep.subr.mxu0 0.0
    %1804 = vmatpush2.msra.mxu0 0.0
    %1805 = vmatprep.subr.mxu0 0.0
    %1806 = vmatpush2.msra.mxu0 0.0
    %1807 = vmatprep.subr.mxu0 0.0
    %1808 = vmatpush2.msra.mxu0 0.0
    %1809 = vmatprep.subr.mxu0 0.0
    %1810 = vmatpush2.msra.mxu0 0.0
    %1811 = vmatprep.subr.mxu0 0.0
    %1812 = vmatpush2.msra.mxu0 0.0
    %1813 = vmatprep.subr.mxu0 0.0
    %1814 = vmatpush2.msra.mxu0 0.0
    %1815 = vmatprep.subr.mxu0 0.0
    %1816 = vmatpush2.msra.mxu0 0.0
    %1817 = vmatprep.subr.mxu0 0.0
    %1818 = vmatpush2.msra.mxu0 0.0
    %1819 = vmatprep.subr.mxu0 0.0
    %1820 = vmatpush2.msra.mxu0 0.0
    %1821 = vmatprep.subr.mxu0 0.0
    %1822 = vmatpush2.msra.mxu0 0.0
    %1823 = vmatprep.mubr.f32.mxu0 0.0
    %1824 = vmatmul.mubr.f32.gmra.mxu0 %v1757
    %v1825 = vpop.f32.mrf.mxu0
    %v1826 = vadd.f32 0.0, %v1825
    %v1827 = vpop.f32.mrf.mxu0
    %1828 = vdwg.mxu0
    %1829 = vrot.lane.b32.xlu0 %v583, 64
    %v1830 = vpop.permute.xlu0 %1829
    %v1833 = vsel %vm586, %v1296, 0
    %1835 = vmatprep.subr.mxu0 0.0
    %1836 = vmatpush1.msra.mxu0 0.0
    %1837 = vmatprep.subr.mxu0 0.0
    %1838 = vmatpush1.msra.mxu0 0.0
    %1839 = vmatprep.subr.mxu0 0.0
    %1840 = vmatpush1.msra.mxu0 0.0
    %1841 = vmatprep.subr.mxu0 0.0
    %1842 = vmatpush1.msra.mxu0 0.0
    %1843 = vmatprep.subr.mxu0 0.0
    %1844 = vmatpush1.msra.mxu0 0.0
    %1845 = vmatprep.subr.mxu0 0.0
    %1846 = vmatpush1.msra.mxu0 0.0
    %1847 = vmatprep.subr.mxu0 0.0
    %1848 = vmatpush1.msra.mxu0 0.0
    %1849 = vmatprep.subr.mxu0 0.0
    %1850 = vmatpush1.msra.mxu0 0.0
    %1851 = vmatprep.subr.mxu0 0.0
    %1852 = vmatpush1.msra.mxu0 0.0
    %1853 = vmatprep.subr.mxu0 0.0
    %1854 = vmatpush1.msra.mxu0 0.0
    %1855 = vmatprep.subr.mxu0 0.0
    %1856 = vmatpush1.msra.mxu0 0.0
    %1857 = vmatprep.subr.mxu0 0.0
    %1858 = vmatpush1.msra.mxu0 0.0
    %1859 = vmatprep.subr.mxu0 0.0
    %1860 = vmatpush1.msra.mxu0 0.0
    %1861 = vmatprep.subr.mxu0 0.0
    %1862 = vmatpush1.msra.mxu0 0.0
    %1863 = vmatprep.subr.mxu0 0.0
    %1864 = vmatpush1.msra.mxu0 0.0
    %1865 = vmatprep.subr.mxu0 0.0
    %1866 = vmatpush1.msra.mxu0 %v1830
    %1867 = vmatprep.subr.mxu0 0.0
    %1868 = vmatpush2.msra.mxu0 0.0
    %1869 = vmatprep.subr.mxu0 0.0
    %1870 = vmatpush2.msra.mxu0 0.0
    %1871 = vmatprep.subr.mxu0 0.0
    %1872 = vmatpush2.msra.mxu0 0.0
    %1873 = vmatprep.subr.mxu0 0.0
    %1874 = vmatpush2.msra.mxu0 0.0
    %1875 = vmatprep.subr.mxu0 0.0
    %1876 = vmatpush2.msra.mxu0 0.0
    %1877 = vmatprep.subr.mxu0 0.0
    %1878 = vmatpush2.msra.mxu0 0.0
    %1879 = vmatprep.subr.mxu0 0.0
    %1880 = vmatpush2.msra.mxu0 0.0
    %1881 = vmatprep.subr.mxu0 0.0
    %1882 = vmatpush2.msra.mxu0 0.0
    %1883 = vmatprep.subr.mxu0 0.0
    %1884 = vmatpush2.msra.mxu0 0.0
    %1885 = vmatprep.subr.mxu0 0.0
    %1886 = vmatpush2.msra.mxu0 0.0
    %1887 = vmatprep.subr.mxu0 0.0
    %1888 = vmatpush2.msra.mxu0 0.0
    %1889 = vmatprep.subr.mxu0 0.0
    %1890 = vmatpush2.msra.mxu0 0.0
    %1891 = vmatprep.subr.mxu0 0.0
    %1892 = vmatpush2.msra.mxu0 0.0
    %1893 = vmatprep.subr.mxu0 0.0
    %1894 = vmatpush2.msra.mxu0 0.0
    %1895 = vmatprep.subr.mxu0 0.0
    %1896 = vmatpush2.msra.mxu0 0.0
    %1897 = vmatprep.subr.mxu0 0.0
    %1898 = vmatpush2.msra.mxu0 0.0
    %1899 = vmatprep.mubr.f32.mxu0 0.0
    %1900 = vmatmul.mubr.f32.gmra.mxu0 %v1833
    %v1901 = vpop.f32.mrf.mxu0
    %v1902 = vadd.f32 0.0, %v1901
    %v1903 = vpop.f32.mrf.mxu0
    %1904 = vdwg.mxu0
    %1906 = vrot.lane.b32.xlu0 %v1522, 8
    %v1907 = vpop.permute.xlu0 %1906
    %1910 = vrot.lane.b32.xlu0 %v1674, 16
    %v1911 = vpop.permute.xlu0 %1910
    %1914 = vrot.lane.b32.xlu0 %v1826, 24
    %v1915 = vpop.permute.xlu0 %1914
    %v1917 = vsel %vm586, %v1370, %v1907
    %v1918 = vsel %vm113, %v1917, %v1911
    %vm1919 = vcmask 195584
    %v1920 = vsel %vm1919, %v1918, %v1915
    %1922 = vrot.lane.b32.xlu0 %v1598, 8
    %v1923 = vpop.permute.xlu0 %1922
    %1926 = vrot.lane.b32.xlu0 %v1750, 16
    %v1927 = vpop.permute.xlu0 %1926
    %1930 = vrot.lane.b32.xlu0 %v1902, 24
    %v1931 = vpop.permute.xlu0 %1930
    %v1933 = vsel %vm586, %v1446, %v1923
    %v1934 = vsel %vm113, %v1933, %v1927
    %v1935 = vsel %vm1919, %v1934, %v1931
    %s1936 = scalar_lea.vmem [#allocation2], 64
    %v1937 = vld [vmem:[%s1936] sm:$0xff]
    %v1938 = vld [vmem:[%s1936 + $0x8] sm:$0xff]
    %v1939 = vld [vmem:[%s1936 + $0x10] sm:$0xff]
    %v1940 = vld [vmem:[%s1936 + $0x18] sm:$0xff]
    %v1941 = vld [vmem:[%s5 + $0xa] sm:$0x1]
    %v1942 = vlaneseq
    %v1943 = vshrl.u32 %v1942, 7
    %v1944 = vsub.s32 0, %v1943
    %v1945 = vrot.slane %v1941, %v1944
    %v1947 = vsel %vm195, %v1920, 0
    %v1950 = vsel %vm195, %v1935, 0
    %1952 = vmatprep.subr.mxu0 0.0
    %1953 = vmatpush1.msra.mxu0 0.0
    %1954 = vmatprep.subr.mxu0 0.0
    %1955 = vmatpush1.msra.mxu0 0.0
    %1956 = vmatprep.subr.mxu0 0.0
    %1957 = vmatpush1.msra.mxu0 0.0
    %1958 = vmatprep.subr.mxu0 0.0
    %1959 = vmatpush1.msra.mxu0 0.0
    %1960 = vmatprep.subr.mxu0 0.0
    %1961 = vmatpush1.msra.mxu0 0.0
    %1962 = vmatprep.subr.mxu0 0.0
    %1963 = vmatpush1.msra.mxu0 0.0
    %1964 = vmatprep.subr.mxu0 0.0
    %1965 = vmatpush1.msra.mxu0 0.0
    %1966 = vmatprep.subr.mxu0 0.0
    %1967 = vmatpush1.msra.mxu0 0.0
    %1968 = vmatprep.subr.mxu0 0.0
    %1969 = vmatpush1.msra.mxu0 0.0
    %1970 = vmatprep.subr.mxu0 0.0
    %1971 = vmatpush1.msra.mxu0 0.0
    %1972 = vmatprep.subr.mxu0 0.0
    %1973 = vmatpush1.msra.mxu0 0.0
    %1974 = vmatprep.subr.mxu0 0.0
    %1975 = vmatpush1.msra.mxu0 0.0
    %1976 = vmatprep.subr.mxu0 0.0
    %1977 = vmatpush1.msra.mxu0 %v1940
    %1978 = vmatprep.subr.mxu0 0.0
    %1979 = vmatpush1.msra.mxu0 %v1939
    %1980 = vmatprep.subr.mxu0 0.0
    %1981 = vmatpush1.msra.mxu0 %v1938
    %1982 = vmatprep.subr.mxu0 0.0
    %1983 = vmatpush1.msra.mxu0 %v1937
    %1984 = vmatprep.subr.mxu0 0.0
    %1985 = vmatpush2.msra.mxu0 0.0
    %1986 = vmatprep.subr.mxu0 0.0
    %1987 = vmatpush2.msra.mxu0 0.0
    %1988 = vmatprep.subr.mxu0 0.0
    %1989 = vmatpush2.msra.mxu0 0.0
    %1990 = vmatprep.subr.mxu0 0.0
    %1991 = vmatpush2.msra.mxu0 0.0
    %1992 = vmatprep.subr.mxu0 0.0
    %1993 = vmatpush2.msra.mxu0 0.0
    %1994 = vmatprep.subr.mxu0 0.0
    %1995 = vmatpush2.msra.mxu0 0.0
    %1996 = vmatprep.subr.mxu0 0.0
    %1997 = vmatpush2.msra.mxu0 0.0
    %1998 = vmatprep.subr.mxu0 0.0
    %1999 = vmatpush2.msra.mxu0 0.0
    %2000 = vmatprep.subr.mxu0 0.0
    %2001 = vmatpush2.msra.mxu0 0.0
    %2002 = vmatprep.subr.mxu0 0.0
    %2003 = vmatpush2.msra.mxu0 0.0
    %2004 = vmatprep.subr.mxu0 0.0
    %2005 = vmatpush2.msra.mxu0 0.0
    %2006 = vmatprep.subr.mxu0 0.0
    %2007 = vmatpush2.msra.mxu0 0.0
    %2008 = vmatprep.subr.mxu0 0.0
    %2009 = vmatpush2.msra.mxu0 0.0
    %2010 = vmatprep.subr.mxu0 0.0
    %2011 = vmatpush2.msra.mxu0 0.0
    %2012 = vmatprep.subr.mxu0 0.0
    %2013 = vmatpush2.msra.mxu0 0.0
    %2014 = vmatprep.subr.mxu0 0.0
    %2015 = vmatpush2.msra.mxu0 0.0
    %2016 = vmatprep.mubr.f32.mxu0 0.0
    %2017 = vmatmul.mubr.f32.gmra.mxu0 %v1947
    %v2018 = vpop.f32.mrf.mxu0
    %v2019 = vadd.f32 %v1945, %v2018
    %v2020 = vpop.f32.mrf.mxu0
    %2021 = vmatprep.mubr.f32.mxu0 0.0
    %2022 = vmatmul.mubr.f32.gmra.mxu0 %v1950
    %v2023 = vpop.f32.mrf.mxu0
    %v2024 = vadd.f32 %v1945, %v2023
    %v2025 = vpop.f32.mrf.mxu0
    %2026 = vdwg.mxu0
    %v2027 = vadd.f32 %v412, %v2019
    %v2028 = vadd.f32 %v417, %v2024
    %v2029 = vsel %vm195, %v2027, 0.0
    %2030 = vadd.xlane.f32.xlu0 %v2029
    %v2031 = vpop.xlane.xlu0 %2030
    %v2032 = vsel %vm195, %v2028, 0.0
    %2033 = vadd.xlane.f32.xlu0 %v2032
    %v2034 = vpop.xlane.xlu0 %2033
    %v2035 = vmul.f32 %v2031, %v202
    %v2036 = vmul.f32 %v2034, %v202
    %v2037 = vsub.f32 %v2027, %v2035
    %v2038 = vsub.f32 %v2028, %v2036
    %v2039 = vmul.f32 %v2037, %v2037
    %v2040 = vmul.f32 %v2038, %v2038
    %v2041 = vsel %vm195, %v2039, 0.0
    %2042 = vadd.xlane.f32.xlu0 %v2041
    %v2043 = vpop.xlane.xlu0 %2042
    %v2044 = vsel %vm195, %v2040, 0.0
    %2045 = vadd.xlane.f32.xlu0 %v2044
    %v2046 = vpop.xlane.xlu0 %2045
    %v2047 = vmul.f32 %v2043, %v202
    %v2048 = vmul.f32 %v2046, %v202
    %v2049 = vadd.f32 %v2047, 1e-05
    %v2050 = vadd.f32 %v2048, 1e-05
    %v2051 = vrsqrt.pop %v2049
    %v2052 = vrsqrt.pop %v2050
    %v2053 = vmul.f32 %v2037, %v2051
    %v2054 = vmul.f32 %v2038, %v2052
    %v2055 = vld [vmem:[%s5 + $0xb] sm:$0x1]
    %v2056 = vlaneseq
    %v2057 = vshrl.u32 %v2056, 7
    %v2058 = vsub.s32 0, %v2057
    %v2059 = vrot.slane %v2055, %v2058
    %v2060 = vmul.f32 %v2053, %v2059
    %v2061 = vmul.f32 %v2054, %v2059
    %v2062 = vld [vmem:[%s5 + $0xc] sm:$0x1]
    %v2063 = vlaneseq
    %v2064 = vshrl.u32 %v2063, 7
    %v2065 = vsub.s32 0, %v2064
    %v2066 = vrot.slane %v2062, %v2065
    %v2067 = vadd.f32 %v2060, %v2066
    %v2068 = vadd.f32 %v2061, %v2066
    %s2069 = scalar_lea.vmem [#allocation2], 96
    %v2070 = vld [vmem:[%s2069] sm:$0xff]
    %v2071 = vld [vmem:[%s2069 + $0x8] sm:$0xff]
    %v2072 = vld [vmem:[%s2069 + $0x10] sm:$0xff]
    %v2073 = vld [vmem:[%s2069 + $0x18] sm:$0xff]
    %v2074 = vld [vmem:[%s5 + $0xd] sm:$0x1]
    %v2075 = vlaneseq
    %v2076 = vshrl.u32 %v2075, 7
    %v2077 = vsub.s32 0, %v2076
    %v2078 = vrot.slane %v2074, %v2077
    %v2080 = vsel %vm195, %v2067, 0
    %v2083 = vsel %vm195, %v2068, 0
    %2085 = vmatprep.subr.mxu0 0.0
    %2086 = vmatpush1.msra.mxu0 0.0
    %2087 = vmatprep.subr.mxu0 0.0
    %2088 = vmatpush1.msra.mxu0 0.0
    %2089 = vmatprep.subr.mxu0 0.0
    %2090 = vmatpush1.msra.mxu0 0.0
    %2091 = vmatprep.subr.mxu0 0.0
    %2092 = vmatpush1.msra.mxu0 0.0
    %2093 = vmatprep.subr.mxu0 0.0
    %2094 = vmatpush1.msra.mxu0 0.0
    %2095 = vmatprep.subr.mxu0 0.0
    %2096 = vmatpush1.msra.mxu0 0.0
    %2097 = vmatprep.subr.mxu0 0.0
    %2098 = vmatpush1.msra.mxu0 0.0
    %2099 = vmatprep.subr.mxu0 0.0
    %2100 = vmatpush1.msra.mxu0 0.0
    %2101 = vmatprep.subr.mxu0 0.0
    %2102 = vmatpush1.msra.mxu0 0.0
    %2103 = vmatprep.subr.mxu0 0.0
    %2104 = vmatpush1.msra.mxu0 0.0
    %2105 = vmatprep.subr.mxu0 0.0
    %2106 = vmatpush1.msra.mxu0 0.0
    %2107 = vmatprep.subr.mxu0 0.0
    %2108 = vmatpush1.msra.mxu0 0.0
    %2109 = vmatprep.subr.mxu0 0.0
    %2110 = vmatpush1.msra.mxu0 %v2073
    %2111 = vmatprep.subr.mxu0 0.0
    %2112 = vmatpush1.msra.mxu0 %v2072
    %2113 = vmatprep.subr.mxu0 0.0
    %2114 = vmatpush1.msra.mxu0 %v2071
    %2115 = vmatprep.subr.mxu0 0.0
    %2116 = vmatpush1.msra.mxu0 %v2070
    %2117 = vmatprep.subr.mxu0 0.0
    %2118 = vmatpush2.msra.mxu0 0.0
    %2119 = vmatprep.subr.mxu0 0.0
    %2120 = vmatpush2.msra.mxu0 0.0
    %2121 = vmatprep.subr.mxu0 0.0
    %2122 = vmatpush2.msra.mxu0 0.0
    %2123 = vmatprep.subr.mxu0 0.0
    %2124 = vmatpush2.msra.mxu0 0.0
    %2125 = vmatprep.subr.mxu0 0.0
    %2126 = vmatpush2.msra.mxu0 0.0
    %2127 = vmatprep.subr.mxu0 0.0
    %2128 = vmatpush2.msra.mxu0 0.0
    %2129 = vmatprep.subr.mxu0 0.0
    %2130 = vmatpush2.msra.mxu0 0.0
    %2131 = vmatprep.subr.mxu0 0.0
    %2132 = vmatpush2.msra.mxu0 0.0
    %2133 = vmatprep.subr.mxu0 0.0
    %2134 = vmatpush2.msra.mxu0 0.0
    %2135 = vmatprep.subr.mxu0 0.0
    %2136 = vmatpush2.msra.mxu0 0.0
    %2137 = vmatprep.subr.mxu0 0.0
    %2138 = vmatpush2.msra.mxu0 0.0
    %2139 = vmatprep.subr.mxu0 0.0
    %2140 = vmatpush2.msra.mxu0 0.0
    %2141 = vmatprep.subr.mxu0 0.0
    %2142 = vmatpush2.msra.mxu0 0.0
    %2143 = vmatprep.subr.mxu0 0.0
    %2144 = vmatpush2.msra.mxu0 0.0
    %2145 = vmatprep.subr.mxu0 0.0
    %2146 = vmatpush2.msra.mxu0 0.0
    %2147 = vmatprep.subr.mxu0 0.0
    %2148 = vmatpush2.msra.mxu0 0.0
    %2149 = vmatprep.mubr.f32.mxu0 0.0
    %2150 = vmatmul.mubr.f32.gmra.mxu0 %v2080
    %v2151 = vpop.f32.mrf.mxu0
    %v2152 = vadd.f32 %v2078, %v2151
    %v2153 = vpop.f32.mrf.mxu0
    %2154 = vmatprep.mubr.f32.mxu0 0.0
    %2155 = vmatmul.mubr.f32.gmra.mxu0 %v2083
    %v2156 = vpop.f32.mrf.mxu0
    %v2157 = vadd.f32 %v2078, %v2156
    %v2158 = vpop.f32.mrf.mxu0
    %2159 = vdwg.mxu0
    %v2160 = vmax.f32 %v2152, 0.0
    %v2161 = vmax.f32 %v2157, 0.0
    %s2162 = scalar_lea.vmem [#allocation2], 128
    %v2163 = vld [vmem:[%s2162] sm:$0xff]
    %v2164 = vld [vmem:[%s2162 + $0x8] sm:$0xff]
    %v2165 = vld [vmem:[%s2162 + $0x10] sm:$0xff]
    %v2166 = vld [vmem:[%s2162 + $0x18] sm:$0xff]
    %v2167 = vld [vmem:[%s5 + $0xe] sm:$0x1]
    %v2168 = vlaneseq
    %v2169 = vshrl.u32 %v2168, 7
    %v2170 = vsub.s32 0, %v2169
    %v2171 = vrot.slane %v2167, %v2170
    %v2173 = vsel %vm195, %v2160, 0
    %v2176 = vsel %vm195, %v2161, 0
    %2178 = vmatprep.subr.mxu0 0.0
    %2179 = vmatpush1.msra.mxu0 0.0
    %2180 = vmatprep.subr.mxu0 0.0
    %2181 = vmatpush1.msra.mxu0 0.0
    %2182 = vmatprep.subr.mxu0 0.0
    %2183 = vmatpush1.msra.mxu0 0.0
    %2184 = vmatprep.subr.mxu0 0.0
    %2185 = vmatpush1.msra.mxu0 0.0
    %2186 = vmatprep.subr.mxu0 0.0
    %2187 = vmatpush1.msra.mxu0 0.0
    %2188 = vmatprep.subr.mxu0 0.0
    %2189 = vmatpush1.msra.mxu0 0.0
    %2190 = vmatprep.subr.mxu0 0.0
    %2191 = vmatpush1.msra.mxu0 0.0
    %2192 = vmatprep.subr.mxu0 0.0
    %2193 = vmatpush1.msra.mxu0 0.0
    %2194 = vmatprep.subr.mxu0 0.0
    %2195 = vmatpush1.msra.mxu0 0.0
    %2196 = vmatprep.subr.mxu0 0.0
    %2197 = vmatpush1.msra.mxu0 0.0
    %2198 = vmatprep.subr.mxu0 0.0
    %2199 = vmatpush1.msra.mxu0 0.0
    %2200 = vmatprep.subr.mxu0 0.0
    %2201 = vmatpush1.msra.mxu0 0.0
    %2202 = vmatprep.subr.mxu0 0.0
    %2203 = vmatpush1.msra.mxu0 %v2166
    %2204 = vmatprep.subr.mxu0 0.0
    %2205 = vmatpush1.msra.mxu0 %v2165
    %2206 = vmatprep.subr.mxu0 0.0
    %2207 = vmatpush1.msra.mxu0 %v2164
    %2208 = vmatprep.subr.mxu0 0.0
    %2209 = vmatpush1.msra.mxu0 %v2163
    %2210 = vmatprep.subr.mxu0 0.0
    %2211 = vmatpush2.msra.mxu0 0.0
    %2212 = vmatprep.subr.mxu0 0.0
    %2213 = vmatpush2.msra.mxu0 0.0
    %2214 = vmatprep.subr.mxu0 0.0
    %2215 = vmatpush2.msra.mxu0 0.0
    %2216 = vmatprep.subr.mxu0 0.0
    %2217 = vmatpush2.msra.mxu0 0.0
    %2218 = vmatprep.subr.mxu0 0.0
    %2219 = vmatpush2.msra.mxu0 0.0
    %2220 = vmatprep.subr.mxu0 0.0
    %2221 = vmatpush2.msra.mxu0 0.0
    %2222 = vmatprep.subr.mxu0 0.0
    %2223 = vmatpush2.msra.mxu0 0.0
    %2224 = vmatprep.subr.mxu0 0.0
    %2225 = vmatpush2.msra.mxu0 0.0
    %2226 = vmatprep.subr.mxu0 0.0
    %2227 = vmatpush2.msra.mxu0 0.0
    %2228 = vmatprep.subr.mxu0 0.0
    %2229 = vmatpush2.msra.mxu0 0.0
    %2230 = vmatprep.subr.mxu0 0.0
    %2231 = vmatpush2.msra.mxu0 0.0
    %2232 = vmatprep.subr.mxu0 0.0
    %2233 = vmatpush2.msra.mxu0 0.0
    %2234 = vmatprep.subr.mxu0 0.0
    %2235 = vmatpush2.msra.mxu0 0.0
    %2236 = vmatprep.subr.mxu0 0.0
    %2237 = vmatpush2.msra.mxu0 0.0
    %2238 = vmatprep.subr.mxu0 0.0
    %2239 = vmatpush2.msra.mxu0 0.0
    %2240 = vmatprep.subr.mxu0 0.0
    %2241 = vmatpush2.msra.mxu0 0.0
    %2242 = vmatprep.mubr.f32.mxu0 0.0
    %2243 = vmatmul.mubr.f32.gmra.mxu0 %v2173
    %v2244 = vpop.f32.mrf.mxu0
    %v2245 = vadd.f32 %v2171, %v2244
    %v2246 = vpop.f32.mrf.mxu0
    %2247 = vmatprep.mubr.f32.mxu0 0.0
    %2248 = vmatmul.mubr.f32.gmra.mxu0 %v2176
    %v2249 = vpop.f32.mrf.mxu0
    %v2250 = vadd.f32 %v2171, %v2249
    %v2251 = vpop.f32.mrf.mxu0
    %2252 = vdwg.mxu0
    %v2253 = vadd.f32 %v2067, %v2245
    %v2254 = vadd.f32 %v2068, %v2250
    %v2255 = vsel %vm195, %v2253, 0.0
    %2256 = vadd.xlane.f32.xlu0 %v2255
    %v2257 = vpop.xlane.xlu0 %2256
    %v2258 = vsel %vm195, %v2254, 0.0
    %2259 = vadd.xlane.f32.xlu0 %v2258
    %v2260 = vpop.xlane.xlu0 %2259
    %v2261 = vmul.f32 %v2257, %v202
    %v2262 = vmul.f32 %v2260, %v202
    %v2263 = vsub.f32 %v2253, %v2261
    %v2264 = vsub.f32 %v2254, %v2262
    %v2265 = vmul.f32 %v2263, %v2263
    %v2266 = vmul.f32 %v2264, %v2264
    %v2267 = vsel %vm195, %v2265, 0.0
    %2268 = vadd.xlane.f32.xlu0 %v2267
    %v2269 = vpop.xlane.xlu0 %2268
    %v2270 = vsel %vm195, %v2266, 0.0
    %2271 = vadd.xlane.f32.xlu0 %v2270
    %v2272 = vpop.xlane.xlu0 %2271
    %v2273 = vmul.f32 %v2269, %v202
    %v2274 = vmul.f32 %v2272, %v202
    %v2275 = vadd.f32 %v2273, 1e-05
    %v2276 = vadd.f32 %v2274, 1e-05
    %v2277 = vrsqrt.pop %v2275
    %v2278 = vrsqrt.pop %v2276
    %v2279 = vmul.f32 %v2263, %v2277
    %v2280 = vmul.f32 %v2264, %v2278
    %v2281 = vld [vmem:[%s5 + $0xf] sm:$0x1]
    %v2282 = vlaneseq
    %v2283 = vshrl.u32 %v2282, 7
    %v2284 = vsub.s32 0, %v2283
    %v2285 = vrot.slane %v2281, %v2284
    %v2286 = vmul.f32 %v2279, %v2285
    %v2287 = vmul.f32 %v2280, %v2285
    %v2288 = vld [vmem:[%s5 + $0x10] sm:$0x1]
    %v2289 = vlaneseq
    %v2290 = vshrl.u32 %v2289, 7
    %v2291 = vsub.s32 0, %v2290
    %v2292 = vrot.slane %v2288, %v2291
    %v2293 = vadd.f32 %v2286, %v2292
    %v2294 = vadd.f32 %v2287, %v2292
    %s2295 = scalar_lea.vmem %s3, 32
    %v2296 = vld [vmem:[%s2295] sm:$0xff]
    %v2297 = vld [vmem:[%s2295 + $0x8] sm:$0xff]
    %v2298 = vld [vmem:[%s2295 + $0x10] sm:$0xff]
    %v2299 = vld [vmem:[%s2295 + $0x18] sm:$0xff]
    %v2301 = vsel %vm195, %v2293, 0
    %v2304 = vsel %vm195, %v2294, 0
    %2306 = vmatprep.subr.mxu0 0.0
    %2307 = vmatpush1.msra.mxu0 0.0
    %2308 = vmatprep.subr.mxu0 0.0
    %2309 = vmatpush1.msra.mxu0 0.0
    %2310 = vmatprep.subr.mxu0 0.0
    %2311 = vmatpush1.msra.mxu0 0.0
    %2312 = vmatprep.subr.mxu0 0.0
    %2313 = vmatpush1.msra.mxu0 0.0
    %2314 = vmatprep.subr.mxu0 0.0
    %2315 = vmatpush1.msra.mxu0 0.0
    %2316 = vmatprep.subr.mxu0 0.0
    %2317 = vmatpush1.msra.mxu0 0.0
    %2318 = vmatprep.subr.mxu0 0.0
    %2319 = vmatpush1.msra.mxu0 0.0
    %2320 = vmatprep.subr.mxu0 0.0
    %2321 = vmatpush1.msra.mxu0 0.0
    %2322 = vmatprep.subr.mxu0 0.0
    %2323 = vmatpush1.msra.mxu0 0.0
    %2324 = vmatprep.subr.mxu0 0.0
    %2325 = vmatpush1.msra.mxu0 0.0
    %2326 = vmatprep.subr.mxu0 0.0
    %2327 = vmatpush1.msra.mxu0 0.0
    %2328 = vmatprep.subr.mxu0 0.0
    %2329 = vmatpush1.msra.mxu0 0.0
    %2330 = vmatprep.subr.mxu0 0.0
    %2331 = vmatpush1.msra.mxu0 %v2299
    %2332 = vmatprep.subr.mxu0 0.0
    %2333 = vmatpush1.msra.mxu0 %v2298
    %2334 = vmatprep.subr.mxu0 0.0
    %2335 = vmatpush1.msra.mxu0 %v2297
    %2336 = vmatprep.subr.mxu0 0.0
    %2337 = vmatpush1.msra.mxu0 %v2296
    %2338 = vmatprep.subr.mxu0 0.0
    %2339 = vmatpush2.msra.mxu0 0.0
    %2340 = vmatprep.subr.mxu0 0.0
    %2341 = vmatpush2.msra.mxu0 0.0
    %2342 = vmatprep.subr.mxu0 0.0
    %2343 = vmatpush2.msra.mxu0 0.0
    %2344 = vmatprep.subr.mxu0 0.0
    %2345 = vmatpush2.msra.mxu0 0.0
    %2346 = vmatprep.subr.mxu0 0.0
    %2347 = vmatpush2.msra.mxu0 0.0
    %2348 = vmatprep.subr.mxu0 0.0
    %2349 = vmatpush2.msra.mxu0 0.0
    %2350 = vmatprep.subr.mxu0 0.0
    %2351 = vmatpush2.msra.mxu0 0.0
    %2352 = vmatprep.subr.mxu0 0.0
    %2353 = vmatpush2.msra.mxu0 0.0
    %2354 = vmatprep.subr.mxu0 0.0
    %2355 = vmatpush2.msra.mxu0 0.0
    %2356 = vmatprep.subr.mxu0 0.0
    %2357 = vmatpush2.msra.mxu0 0.0
    %2358 = vmatprep.subr.mxu0 0.0
    %2359 = vmatpush2.msra.mxu0 0.0
    %2360 = vmatprep.subr.mxu0 0.0
    %2361 = vmatpush2.msra.mxu0 0.0
    %2362 = vmatprep.subr.mxu0 0.0
    %2363 = vmatpush2.msra.mxu0 0.0
    %2364 = vmatprep.subr.mxu0 0.0
    %2365 = vmatpush2.msra.mxu0 0.0
    %2366 = vmatprep.subr.mxu0 0.0
    %2367 = vmatpush2.msra.mxu0 0.0
    %2368 = vmatprep.subr.mxu0 0.0
    %2369 = vmatpush2.msra.mxu0 0.0
    %2370 = vmatprep.mubr.f32.mxu0 0.0
    %2371 = vmatmul.mubr.f32.gmra.mxu0 %v2301
    %v2372 = vpop.f32.mrf.mxu0
    %v2373 = vadd.f32 0.0, %v2372
    %v2374 = vpop.f32.mrf.mxu0
    %2375 = vmatprep.mubr.f32.mxu0 0.0
    %2376 = vmatmul.mubr.f32.gmra.mxu0 %v2304
    %v2377 = vpop.f32.mrf.mxu0
    %v2378 = vadd.f32 0.0, %v2377
    %v2379 = vpop.f32.mrf.mxu0
    %2380 = vdwg.mxu0
    %v2381 = vld [vmem:[%s5 + $0x11] sm:$0x1]
    %v2382 = vlaneseq
    %v2383 = vshrl.u32 %v2382, 7
    %v2384 = vsub.s32 0, %v2383
    %v2385 = vrot.slane %v2381, %v2384
    %v2386 = vadd.f32 %v2373, %v2385
    %v2387 = vadd.f32 %v2378, %v2385
    %2389 = vrot.lane.b32.xlu0 %v2386, 120
    %v2390 = vpop.permute.xlu0 %2389
    %2392 = vrot.lane.b32.xlu0 %v2387, 120
    %v2393 = vpop.permute.xlu0 %2392
    %2394 = vrot.lane.b32.xlu0 %v2386, 112
    %v2395 = vpop.permute.xlu0 %2394
    %2396 = vrot.lane.b32.xlu0 %v2387, 112
    %v2397 = vpop.permute.xlu0 %2396
    %2398 = vrot.lane.b32.xlu0 %v2386, 104
    %v2399 = vpop.permute.xlu0 %2398
    %2400 = vrot.lane.b32.xlu0 %v2387, 104
    %v2401 = vpop.permute.xlu0 %2400
    %v2402 = vld [vmem:[%s5 + $0x12] sm:$0x1]
    %v2403 = vlaneseq
    %v2404 = vshrl.u32 %v2403, 7
    %v2405 = vsub.s32 0, %v2404
    %v2406 = vrot.slane %v2402, %v2405
    %2408 = vrot.lane.b32.xlu0 %v2406, 32
    %v2409 = vpop.permute.xlu0 %2408
    %v2411 = vadd.f32 %v2373, %v2409
    %v2412 = vadd.f32 %v2378, %v2409
    %2414 = vrot.lane.b32.xlu0 %v2411, 120
    %v2415 = vpop.permute.xlu0 %2414
    %2417 = vrot.lane.b32.xlu0 %v2412, 120
    %v2418 = vpop.permute.xlu0 %2417
    %2419 = vrot.lane.b32.xlu0 %v2411, 112
    %v2420 = vpop.permute.xlu0 %2419
    %2421 = vrot.lane.b32.xlu0 %v2412, 112
    %v2422 = vpop.permute.xlu0 %2421
    %2423 = vrot.lane.b32.xlu0 %v2411, 104
    %v2424 = vpop.permute.xlu0 %2423
    %2425 = vrot.lane.b32.xlu0 %v2412, 104
    %v2426 = vpop.permute.xlu0 %2425
    %v2427 = vld [vmem:[%s5 + $0x13] sm:$0x1]
    %v2428 = vlaneseq
    %v2429 = vshrl.u32 %v2428, 7
    %v2430 = vsub.s32 0, %v2429
    %v2431 = vrot.slane %v2427, %v2430
    %2433 = vrot.lane.b32.xlu0 %v2431, 64
    %v2434 = vpop.permute.xlu0 %2433
    %v2436 = vadd.f32 %v2373, %v2434
    %v2437 = vadd.f32 %v2378, %v2434
    %2439 = vrot.lane.b32.xlu0 %v2436, 120
    %v2440 = vpop.permute.xlu0 %2439
    %2442 = vrot.lane.b32.xlu0 %v2437, 120
    %v2443 = vpop.permute.xlu0 %2442
    %2444 = vrot.lane.b32.xlu0 %v2436, 112
    %v2445 = vpop.permute.xlu0 %2444
    %2446 = vrot.lane.b32.xlu0 %v2437, 112
    %v2447 = vpop.permute.xlu0 %2446
    %2448 = vrot.lane.b32.xlu0 %v2436, 104
    %v2449 = vpop.permute.xlu0 %2448
    %2450 = vrot.lane.b32.xlu0 %v2437, 104
    %v2451 = vpop.permute.xlu0 %2450
    %2452 = vrot.lane.b32.xlu0 %v2411, 96
    %v2453 = vpop.permute.xlu0 %2452
    %v2454 = vsel %vm586, %v2386, 0
    %v2456 = vsel %vm586, %v2453, 0
    %2458 = vmatprep.subr.mxu0 0.0
    %2459 = vmatpush1.xpose.msra.mxu0 0.0
    %2460 = vmatprep.subr.mxu0 0.0
    %2461 = vmatpush1.xpose.msra.mxu0 0.0
    %2462 = vmatprep.subr.mxu0 0.0
    %2463 = vmatpush1.xpose.msra.mxu0 0.0
    %2464 = vmatprep.subr.mxu0 0.0
    %2465 = vmatpush1.xpose.msra.mxu0 0.0
    %2466 = vmatprep.subr.mxu0 0.0
    %2467 = vmatpush1.xpose.msra.mxu0 0.0
    %2468 = vmatprep.subr.mxu0 0.0
    %2469 = vmatpush1.xpose.msra.mxu0 0.0
    %2470 = vmatprep.subr.mxu0 0.0
    %2471 = vmatpush1.xpose.msra.mxu0 0.0
    %2472 = vmatprep.subr.mxu0 0.0
    %2473 = vmatpush1.xpose.msra.mxu0 0.0
    %2474 = vmatprep.subr.mxu0 0.0
    %2475 = vmatpush1.xpose.msra.mxu0 0.0
    %2476 = vmatprep.subr.mxu0 0.0
    %2477 = vmatpush1.xpose.msra.mxu0 0.0
    %2478 = vmatprep.subr.mxu0 0.0
    %2479 = vmatpush1.xpose.msra.mxu0 0.0
    %2480 = vmatprep.subr.mxu0 0.0
    %2481 = vmatpush1.xpose.msra.mxu0 0.0
    %2482 = vmatprep.subr.mxu0 0.0
    %2483 = vmatpush1.xpose.msra.mxu0 0.0
    %2484 = vmatprep.subr.mxu0 0.0
    %2485 = vmatpush1.xpose.msra.mxu0 0.0
    %2486 = vmatprep.subr.mxu0 0.0
    %2487 = vmatpush1.xpose.msra.mxu0 0.0
    %2488 = vmatprep.subr.mxu0 0.0
    %2489 = vmatpush1.xpose.msra.mxu0 %v2456
    %2490 = vmatprep.subr.mxu0 0.0
    %2491 = vmatpush2.xpose.msra.mxu0 0.0
    %2492 = vmatprep.subr.mxu0 0.0
    %2493 = vmatpush2.xpose.msra.mxu0 0.0
    %2494 = vmatprep.subr.mxu0 0.0
    %2495 = vmatpush2.xpose.msra.mxu0 0.0
    %2496 = vmatprep.subr.mxu0 0.0
    %2497 = vmatpush2.xpose.msra.mxu0 0.0
    %2498 = vmatprep.subr.mxu0 0.0
    %2499 = vmatpush2.xpose.msra.mxu0 0.0
    %2500 = vmatprep.subr.mxu0 0.0
    %2501 = vmatpush2.xpose.msra.mxu0 0.0
    %2502 = vmatprep.subr.mxu0 0.0
    %2503 = vmatpush2.xpose.msra.mxu0 0.0
    %2504 = vmatprep.subr.mxu0 0.0
    %2505 = vmatpush2.xpose.msra.mxu0 0.0
    %2506 = vmatprep.subr.mxu0 0.0
    %2507 = vmatpush2.xpose.msra.mxu0 0.0
    %2508 = vmatprep.subr.mxu0 0.0
    %2509 = vmatpush2.xpose.msra.mxu0 0.0
    %2510 = vmatprep.subr.mxu0 0.0
    %2511 = vmatpush2.xpose.msra.mxu0 0.0
    %2512 = vmatprep.subr.mxu0 0.0
    %2513 = vmatpush2.xpose.msra.mxu0 0.0
    %2514 = vmatprep.subr.mxu0 0.0
    %2515 = vmatpush2.xpose.msra.mxu0 0.0
    %2516 = vmatprep.subr.mxu0 0.0
    %2517 = vmatpush2.xpose.msra.mxu0 0.0
    %2518 = vmatprep.subr.mxu0 0.0
    %2519 = vmatpush2.xpose.msra.mxu0 0.0
    %2520 = vmatprep.subr.mxu0 0.0
    %2521 = vmatpush2.xpose.msra.mxu0 0.0
    %2522 = vmatprep.mubr.f32.mxu0 0.0
    %2523 = vmatmul.mubr.f32.gmra.mxu0 %v2454
    %v2524 = vpop.f32.mrf.mxu0
    %v2525 = vadd.f32 0.0, %v2524
    %v2526 = vpop.f32.mrf.mxu0
    %2527 = vdwg.mxu0
    %2528 = vrot.lane.b32.xlu0 %v2412, 96
    %v2529 = vpop.permute.xlu0 %2528
    %v2530 = vsel %vm586, %v2387, 0
    %v2532 = vsel %vm586, %v2529, 0
    %2534 = vmatprep.subr.mxu0 0.0
    %2535 = vmatpush1.xpose.msra.mxu0 0.0
    %2536 = vmatprep.subr.mxu0 0.0
    %2537 = vmatpush1.xpose.msra.mxu0 0.0
    %2538 = vmatprep.subr.mxu0 0.0
    %2539 = vmatpush1.xpose.msra.mxu0 0.0
    %2540 = vmatprep.subr.mxu0 0.0
    %2541 = vmatpush1.xpose.msra.mxu0 0.0
    %2542 = vmatprep.subr.mxu0 0.0
    %2543 = vmatpush1.xpose.msra.mxu0 0.0
    %2544 = vmatprep.subr.mxu0 0.0
    %2545 = vmatpush1.xpose.msra.mxu0 0.0
    %2546 = vmatprep.subr.mxu0 0.0
    %2547 = vmatpush1.xpose.msra.mxu0 0.0
    %2548 = vmatprep.subr.mxu0 0.0
    %2549 = vmatpush1.xpose.msra.mxu0 0.0
    %2550 = vmatprep.subr.mxu0 0.0
    %2551 = vmatpush1.xpose.msra.mxu0 0.0
    %2552 = vmatprep.subr.mxu0 0.0
    %2553 = vmatpush1.xpose.msra.mxu0 0.0
    %2554 = vmatprep.subr.mxu0 0.0
    %2555 = vmatpush1.xpose.msra.mxu0 0.0
    %2556 = vmatprep.subr.mxu0 0.0
    %2557 = vmatpush1.xpose.msra.mxu0 0.0
    %2558 = vmatprep.subr.mxu0 0.0
    %2559 = vmatpush1.xpose.msra.mxu0 0.0
    %2560 = vmatprep.subr.mxu0 0.0
    %2561 = vmatpush1.xpose.msra.mxu0 0.0
    %2562 = vmatprep.subr.mxu0 0.0
    %2563 = vmatpush1.xpose.msra.mxu0 0.0
    %2564 = vmatprep.subr.mxu0 0.0
    %2565 = vmatpush1.xpose.msra.mxu0 %v2532
    %2566 = vmatprep.subr.mxu0 0.0
    %2567 = vmatpush2.xpose.msra.mxu0 0.0
    %2568 = vmatprep.subr.mxu0 0.0
    %2569 = vmatpush2.xpose.msra.mxu0 0.0
    %2570 = vmatprep.subr.mxu0 0.0
    %2571 = vmatpush2.xpose.msra.mxu0 0.0
    %2572 = vmatprep.subr.mxu0 0.0
    %2573 = vmatpush2.xpose.msra.mxu0 0.0
    %2574 = vmatprep.subr.mxu0 0.0
    %2575 = vmatpush2.xpose.msra.mxu0 0.0
    %2576 = vmatprep.subr.mxu0 0.0
    %2577 = vmatpush2.xpose.msra.mxu0 0.0
    %2578 = vmatprep.subr.mxu0 0.0
    %2579 = vmatpush2.xpose.msra.mxu0 0.0
    %2580 = vmatprep.subr.mxu0 0.0
    %2581 = vmatpush2.xpose.msra.mxu0 0.0
    %2582 = vmatprep.subr.mxu0 0.0
    %2583 = vmatpush2.xpose.msra.mxu0 0.0
    %2584 = vmatprep.subr.mxu0 0.0
    %2585 = vmatpush2.xpose.msra.mxu0 0.0
    %2586 = vmatprep.subr.mxu0 0.0
    %2587 = vmatpush2.xpose.msra.mxu0 0.0
    %2588 = vmatprep.subr.mxu0 0.0
    %2589 = vmatpush2.xpose.msra.mxu0 0.0
    %2590 = vmatprep.subr.mxu0 0.0
    %2591 = vmatpush2.xpose.msra.mxu0 0.0
    %2592 = vmatprep.subr.mxu0 0.0
    %2593 = vmatpush2.xpose.msra.mxu0 0.0
    %2594 = vmatprep.subr.mxu0 0.0
    %2595 = vmatpush2.xpose.msra.mxu0 0.0
    %2596 = vmatprep.subr.mxu0 0.0
    %2597 = vmatpush2.xpose.msra.mxu0 0.0
    %2598 = vmatprep.mubr.f32.mxu0 0.0
    %2599 = vmatmul.mubr.f32.gmra.mxu0 %v2530
    %v2600 = vpop.f32.mrf.mxu0
    %v2601 = vadd.f32 0.0, %v2600
    %v2602 = vpop.f32.mrf.mxu0
    %2603 = vdwg.mxu0
    %2604 = vrot.lane.b32.xlu0 %v2415, 96
    %v2605 = vpop.permute.xlu0 %2604
    %v2606 = vsel %vm586, %v2390, 0
    %v2608 = vsel %vm586, %v2605, 0
    %2610 = vmatprep.subr.mxu0 0.0
    %2611 = vmatpush1.xpose.msra.mxu0 0.0
    %2612 = vmatprep.subr.mxu0 0.0
    %2613 = vmatpush1.xpose.msra.mxu0 0.0
    %2614 = vmatprep.subr.mxu0 0.0
    %2615 = vmatpush1.xpose.msra.mxu0 0.0
    %2616 = vmatprep.subr.mxu0 0.0
    %2617 = vmatpush1.xpose.msra.mxu0 0.0
    %2618 = vmatprep.subr.mxu0 0.0
    %2619 = vmatpush1.xpose.msra.mxu0 0.0
    %2620 = vmatprep.subr.mxu0 0.0
    %2621 = vmatpush1.xpose.msra.mxu0 0.0
    %2622 = vmatprep.subr.mxu0 0.0
    %2623 = vmatpush1.xpose.msra.mxu0 0.0
    %2624 = vmatprep.subr.mxu0 0.0
    %2625 = vmatpush1.xpose.msra.mxu0 0.0
    %2626 = vmatprep.subr.mxu0 0.0
    %2627 = vmatpush1.xpose.msra.mxu0 0.0
    %2628 = vmatprep.subr.mxu0 0.0
    %2629 = vmatpush1.xpose.msra.mxu0 0.0
    %2630 = vmatprep.subr.mxu0 0.0
    %2631 = vmatpush1.xpose.msra.mxu0 0.0
    %2632 = vmatprep.subr.mxu0 0.0
    %2633 = vmatpush1.xpose.msra.mxu0 0.0
    %2634 = vmatprep.subr.mxu0 0.0
    %2635 = vmatpush1.xpose.msra.mxu0 0.0
    %2636 = vmatprep.subr.mxu0 0.0
    %2637 = vmatpush1.xpose.msra.mxu0 0.0
    %2638 = vmatprep.subr.mxu0 0.0
    %2639 = vmatpush1.xpose.msra.mxu0 0.0
    %2640 = vmatprep.subr.mxu0 0.0
    %2641 = vmatpush1.xpose.msra.mxu0 %v2608
    %2642 = vmatprep.subr.mxu0 0.0
    %2643 = vmatpush2.xpose.msra.mxu0 0.0
    %2644 = vmatprep.subr.mxu0 0.0
    %2645 = vmatpush2.xpose.msra.mxu0 0.0
    %2646 = vmatprep.subr.mxu0 0.0
    %2647 = vmatpush2.xpose.msra.mxu0 0.0
    %2648 = vmatprep.subr.mxu0 0.0
    %2649 = vmatpush2.xpose.msra.mxu0 0.0
    %2650 = vmatprep.subr.mxu0 0.0
    %2651 = vmatpush2.xpose.msra.mxu0 0.0
    %2652 = vmatprep.subr.mxu0 0.0
    %2653 = vmatpush2.xpose.msra.mxu0 0.0
    %2654 = vmatprep.subr.mxu0 0.0
    %2655 = vmatpush2.xpose.msra.mxu0 0.0
    %2656 = vmatprep.subr.mxu0 0.0
    %2657 = vmatpush2.xpose.msra.mxu0 0.0
    %2658 = vmatprep.subr.mxu0 0.0
    %2659 = vmatpush2.xpose.msra.mxu0 0.0
    %2660 = vmatprep.subr.mxu0 0.0
    %2661 = vmatpush2.xpose.msra.mxu0 0.0
    %2662 = vmatprep.subr.mxu0 0.0
    %2663 = vmatpush2.xpose.msra.mxu0 0.0
    %2664 = vmatprep.subr.mxu0 0.0
    %2665 = vmatpush2.xpose.msra.mxu0 0.0
    %2666 = vmatprep.subr.mxu0 0.0
    %2667 = vmatpush2.xpose.msra.mxu0 0.0
    %2668 = vmatprep.subr.mxu0 0.0
    %2669 = vmatpush2.xpose.msra.mxu0 0.0
    %2670 = vmatprep.subr.mxu0 0.0
    %2671 = vmatpush2.xpose.msra.mxu0 0.0
    %2672 = vmatprep.subr.mxu0 0.0
    %2673 = vmatpush2.xpose.msra.mxu0 0.0
    %2674 = vmatprep.mubr.f32.mxu0 0.0
    %2675 = vmatmul.mubr.f32.gmra.mxu0 %v2606
    %v2676 = vpop.f32.mrf.mxu0
    %v2677 = vadd.f32 0.0, %v2676
    %v2678 = vpop.f32.mrf.mxu0
    %2679 = vdwg.mxu0
    %2680 = vrot.lane.b32.xlu0 %v2418, 96
    %v2681 = vpop.permute.xlu0 %2680
    %v2682 = vsel %vm586, %v2393, 0
    %v2684 = vsel %vm586, %v2681, 0
    %2686 = vmatprep.subr.mxu0 0.0
    %2687 = vmatpush1.xpose.msra.mxu0 0.0
    %2688 = vmatprep.subr.mxu0 0.0
    %2689 = vmatpush1.xpose.msra.mxu0 0.0
    %2690 = vmatprep.subr.mxu0 0.0
    %2691 = vmatpush1.xpose.msra.mxu0 0.0
    %2692 = vmatprep.subr.mxu0 0.0
    %2693 = vmatpush1.xpose.msra.mxu0 0.0
    %2694 = vmatprep.subr.mxu0 0.0
    %2695 = vmatpush1.xpose.msra.mxu0 0.0
    %2696 = vmatprep.subr.mxu0 0.0
    %2697 = vmatpush1.xpose.msra.mxu0 0.0
    %2698 = vmatprep.subr.mxu0 0.0
    %2699 = vmatpush1.xpose.msra.mxu0 0.0
    %2700 = vmatprep.subr.mxu0 0.0
    %2701 = vmatpush1.xpose.msra.mxu0 0.0
    %2702 = vmatprep.subr.mxu0 0.0
    %2703 = vmatpush1.xpose.msra.mxu0 0.0
    %2704 = vmatprep.subr.mxu0 0.0
    %2705 = vmatpush1.xpose.msra.mxu0 0.0
    %2706 = vmatprep.subr.mxu0 0.0
    %2707 = vmatpush1.xpose.msra.mxu0 0.0
    %2708 = vmatprep.subr.mxu0 0.0
    %2709 = vmatpush1.xpose.msra.mxu0 0.0
    %2710 = vmatprep.subr.mxu0 0.0
    %2711 = vmatpush1.xpose.msra.mxu0 0.0
    %2712 = vmatprep.subr.mxu0 0.0
    %2713 = vmatpush1.xpose.msra.mxu0 0.0
    %2714 = vmatprep.subr.mxu0 0.0
    %2715 = vmatpush1.xpose.msra.mxu0 0.0
    %2716 = vmatprep.subr.mxu0 0.0
    %2717 = vmatpush1.xpose.msra.mxu0 %v2684
    %2718 = vmatprep.subr.mxu0 0.0
    %2719 = vmatpush2.xpose.msra.mxu0 0.0
    %2720 = vmatprep.subr.mxu0 0.0
    %2721 = vmatpush2.xpose.msra.mxu0 0.0
    %2722 = vmatprep.subr.mxu0 0.0
    %2723 = vmatpush2.xpose.msra.mxu0 0.0
    %2724 = vmatprep.subr.mxu0 0.0
    %2725 = vmatpush2.xpose.msra.mxu0 0.0
    %2726 = vmatprep.subr.mxu0 0.0
    %2727 = vmatpush2.xpose.msra.mxu0 0.0
    %2728 = vmatprep.subr.mxu0 0.0
    %2729 = vmatpush2.xpose.msra.mxu0 0.0
    %2730 = vmatprep.subr.mxu0 0.0
    %2731 = vmatpush2.xpose.msra.mxu0 0.0
    %2732 = vmatprep.subr.mxu0 0.0
    %2733 = vmatpush2.xpose.msra.mxu0 0.0
    %2734 = vmatprep.subr.mxu0 0.0
    %2735 = vmatpush2.xpose.msra.mxu0 0.0
    %2736 = vmatprep.subr.mxu0 0.0
    %2737 = vmatpush2.xpose.msra.mxu0 0.0
    %2738 = vmatprep.subr.mxu0 0.0
    %2739 = vmatpush2.xpose.msra.mxu0 0.0
    %2740 = vmatprep.subr.mxu0 0.0
    %2741 = vmatpush2.xpose.msra.mxu0 0.0
    %2742 = vmatprep.subr.mxu0 0.0
    %2743 = vmatpush2.xpose.msra.mxu0 0.0
    %2744 = vmatprep.subr.mxu0 0.0
    %2745 = vmatpush2.xpose.msra.mxu0 0.0
    %2746 = vmatprep.subr.mxu0 0.0
    %2747 = vmatpush2.xpose.msra.mxu0 0.0
    %2748 = vmatprep.subr.mxu0 0.0
    %2749 = vmatpush2.xpose.msra.mxu0 0.0
    %2750 = vmatprep.mubr.f32.mxu0 0.0
    %2751 = vmatmul.mubr.f32.gmra.mxu0 %v2682
    %v2752 = vpop.f32.mrf.mxu0
    %v2753 = vadd.f32 0.0, %v2752
    %v2754 = vpop.f32.mrf.mxu0
    %2755 = vdwg.mxu0
    %2756 = vrot.lane.b32.xlu0 %v2420, 96
    %v2757 = vpop.permute.xlu0 %2756
    %v2758 = vsel %vm586, %v2395, 0
    %v2760 = vsel %vm586, %v2757, 0
    %2762 = vmatprep.subr.mxu0 0.0
    %2763 = vmatpush1.xpose.msra.mxu0 0.0
    %2764 = vmatprep.subr.mxu0 0.0
    %2765 = vmatpush1.xpose.msra.mxu0 0.0
    %2766 = vmatprep.subr.mxu0 0.0
    %2767 = vmatpush1.xpose.msra.mxu0 0.0
    %2768 = vmatprep.subr.mxu0 0.0
    %2769 = vmatpush1.xpose.msra.mxu0 0.0
    %2770 = vmatprep.subr.mxu0 0.0
    %2771 = vmatpush1.xpose.msra.mxu0 0.0
    %2772 = vmatprep.subr.mxu0 0.0
    %2773 = vmatpush1.xpose.msra.mxu0 0.0
    %2774 = vmatprep.subr.mxu0 0.0
    %2775 = vmatpush1.xpose.msra.mxu0 0.0
    %2776 = vmatprep.subr.mxu0 0.0
    %2777 = vmatpush1.xpose.msra.mxu0 0.0
    %2778 = vmatprep.subr.mxu0 0.0
    %2779 = vmatpush1.xpose.msra.mxu0 0.0
    %2780 = vmatprep.subr.mxu0 0.0
    %2781 = vmatpush1.xpose.msra.mxu0 0.0
    %2782 = vmatprep.subr.mxu0 0.0
    %2783 = vmatpush1.xpose.msra.mxu0 0.0
    %2784 = vmatprep.subr.mxu0 0.0
    %2785 = vmatpush1.xpose.msra.mxu0 0.0
    %2786 = vmatprep.subr.mxu0 0.0
    %2787 = vmatpush1.xpose.msra.mxu0 0.0
    %2788 = vmatprep.subr.mxu0 0.0
    %2789 = vmatpush1.xpose.msra.mxu0 0.0
    %2790 = vmatprep.subr.mxu0 0.0
    %2791 = vmatpush1.xpose.msra.mxu0 0.0
    %2792 = vmatprep.subr.mxu0 0.0
    %2793 = vmatpush1.xpose.msra.mxu0 %v2760
    %2794 = vmatprep.subr.mxu0 0.0
    %2795 = vmatpush2.xpose.msra.mxu0 0.0
    %2796 = vmatprep.subr.mxu0 0.0
    %2797 = vmatpush2.xpose.msra.mxu0 0.0
    %2798 = vmatprep.subr.mxu0 0.0
    %2799 = vmatpush2.xpose.msra.mxu0 0.0
    %2800 = vmatprep.subr.mxu0 0.0
    %2801 = vmatpush2.xpose.msra.mxu0 0.0
    %2802 = vmatprep.subr.mxu0 0.0
    %2803 = vmatpush2.xpose.msra.mxu0 0.0
    %2804 = vmatprep.subr.mxu0 0.0
    %2805 = vmatpush2.xpose.msra.mxu0 0.0
    %2806 = vmatprep.subr.mxu0 0.0
    %2807 = vmatpush2.xpose.msra.mxu0 0.0
    %2808 = vmatprep.subr.mxu0 0.0
    %2809 = vmatpush2.xpose.msra.mxu0 0.0
    %2810 = vmatprep.subr.mxu0 0.0
    %2811 = vmatpush2.xpose.msra.mxu0 0.0
    %2812 = vmatprep.subr.mxu0 0.0
    %2813 = vmatpush2.xpose.msra.mxu0 0.0
    %2814 = vmatprep.subr.mxu0 0.0
    %2815 = vmatpush2.xpose.msra.mxu0 0.0
    %2816 = vmatprep.subr.mxu0 0.0
    %2817 = vmatpush2.xpose.msra.mxu0 0.0
    %2818 = vmatprep.subr.mxu0 0.0
    %2819 = vmatpush2.xpose.msra.mxu0 0.0
    %2820 = vmatprep.subr.mxu0 0.0
    %2821 = vmatpush2.xpose.msra.mxu0 0.0
    %2822 = vmatprep.subr.mxu0 0.0
    %2823 = vmatpush2.xpose.msra.mxu0 0.0
    %2824 = vmatprep.subr.mxu0 0.0
    %2825 = vmatpush2.xpose.msra.mxu0 0.0
    %2826 = vmatprep.mubr.f32.mxu0 0.0
    %2827 = vmatmul.mubr.f32.gmra.mxu0 %v2758
    %v2828 = vpop.f32.mrf.mxu0
    %v2829 = vadd.f32 0.0, %v2828
    %v2830 = vpop.f32.mrf.mxu0
    %2831 = vdwg.mxu0
    %2832 = vrot.lane.b32.xlu0 %v2422, 96
    %v2833 = vpop.permute.xlu0 %2832
    %v2834 = vsel %vm586, %v2397, 0
    %v2836 = vsel %vm586, %v2833, 0
    %2838 = vmatprep.subr.mxu0 0.0
    %2839 = vmatpush1.xpose.msra.mxu0 0.0
    %2840 = vmatprep.subr.mxu0 0.0
    %2841 = vmatpush1.xpose.msra.mxu0 0.0
    %2842 = vmatprep.subr.mxu0 0.0
    %2843 = vmatpush1.xpose.msra.mxu0 0.0
    %2844 = vmatprep.subr.mxu0 0.0
    %2845 = vmatpush1.xpose.msra.mxu0 0.0
    %2846 = vmatprep.subr.mxu0 0.0
    %2847 = vmatpush1.xpose.msra.mxu0 0.0
    %2848 = vmatprep.subr.mxu0 0.0
    %2849 = vmatpush1.xpose.msra.mxu0 0.0
    %2850 = vmatprep.subr.mxu0 0.0
    %2851 = vmatpush1.xpose.msra.mxu0 0.0
    %2852 = vmatprep.subr.mxu0 0.0
    %2853 = vmatpush1.xpose.msra.mxu0 0.0
    %2854 = vmatprep.subr.mxu0 0.0
    %2855 = vmatpush1.xpose.msra.mxu0 0.0
    %2856 = vmatprep.subr.mxu0 0.0
    %2857 = vmatpush1.xpose.msra.mxu0 0.0
    %2858 = vmatprep.subr.mxu0 0.0
    %2859 = vmatpush1.xpose.msra.mxu0 0.0
    %2860 = vmatprep.subr.mxu0 0.0
    %2861 = vmatpush1.xpose.msra.mxu0 0.0
    %2862 = vmatprep.subr.mxu0 0.0
    %2863 = vmatpush1.xpose.msra.mxu0 0.0
    %2864 = vmatprep.subr.mxu0 0.0
    %2865 = vmatpush1.xpose.msra.mxu0 0.0
    %2866 = vmatprep.subr.mxu0 0.0
    %2867 = vmatpush1.xpose.msra.mxu0 0.0
    %2868 = vmatprep.subr.mxu0 0.0
    %2869 = vmatpush1.xpose.msra.mxu0 %v2836
    %2870 = vmatprep.subr.mxu0 0.0
    %2871 = vmatpush2.xpose.msra.mxu0 0.0
    %2872 = vmatprep.subr.mxu0 0.0
    %2873 = vmatpush2.xpose.msra.mxu0 0.0
    %2874 = vmatprep.subr.mxu0 0.0
    %2875 = vmatpush2.xpose.msra.mxu0 0.0
    %2876 = vmatprep.subr.mxu0 0.0
    %2877 = vmatpush2.xpose.msra.mxu0 0.0
    %2878 = vmatprep.subr.mxu0 0.0
    %2879 = vmatpush2.xpose.msra.mxu0 0.0
    %2880 = vmatprep.subr.mxu0 0.0
    %2881 = vmatpush2.xpose.msra.mxu0 0.0
    %2882 = vmatprep.subr.mxu0 0.0
    %2883 = vmatpush2.xpose.msra.mxu0 0.0
    %2884 = vmatprep.subr.mxu0 0.0
    %2885 = vmatpush2.xpose.msra.mxu0 0.0
    %2886 = vmatprep.subr.mxu0 0.0
    %2887 = vmatpush2.xpose.msra.mxu0 0.0
    %2888 = vmatprep.subr.mxu0 0.0
    %2889 = vmatpush2.xpose.msra.mxu0 0.0
    %2890 = vmatprep.subr.mxu0 0.0
    %2891 = vmatpush2.xpose.msra.mxu0 0.0
    %2892 = vmatprep.subr.mxu0 0.0
    %2893 = vmatpush2.xpose.msra.mxu0 0.0
    %2894 = vmatprep.subr.mxu0 0.0
    %2895 = vmatpush2.xpose.msra.mxu0 0.0
    %2896 = vmatprep.subr.mxu0 0.0
    %2897 = vmatpush2.xpose.msra.mxu0 0.0
    %2898 = vmatprep.subr.mxu0 0.0
    %2899 = vmatpush2.xpose.msra.mxu0 0.0
    %2900 = vmatprep.subr.mxu0 0.0
    %2901 = vmatpush2.xpose.msra.mxu0 0.0
    %2902 = vmatprep.mubr.f32.mxu0 0.0
    %2903 = vmatmul.mubr.f32.gmra.mxu0 %v2834
    %v2904 = vpop.f32.mrf.mxu0
    %v2905 = vadd.f32 0.0, %v2904
    %v2906 = vpop.f32.mrf.mxu0
    %2907 = vdwg.mxu0
    %2908 = vrot.lane.b32.xlu0 %v2424, 96
    %v2909 = vpop.permute.xlu0 %2908
    %v2910 = vsel %vm586, %v2399, 0
    %v2912 = vsel %vm586, %v2909, 0
    %2914 = vmatprep.subr.mxu0 0.0
    %2915 = vmatpush1.xpose.msra.mxu0 0.0
    %2916 = vmatprep.subr.mxu0 0.0
    %2917 = vmatpush1.xpose.msra.mxu0 0.0
    %2918 = vmatprep.subr.mxu0 0.0
    %2919 = vmatpush1.xpose.msra.mxu0 0.0
    %2920 = vmatprep.subr.mxu0 0.0
    %2921 = vmatpush1.xpose.msra.mxu0 0.0
    %2922 = vmatprep.subr.mxu0 0.0
    %2923 = vmatpush1.xpose.msra.mxu0 0.0
    %2924 = vmatprep.subr.mxu0 0.0
    %2925 = vmatpush1.xpose.msra.mxu0 0.0
    %2926 = vmatprep.subr.mxu0 0.0
    %2927 = vmatpush1.xpose.msra.mxu0 0.0
    %2928 = vmatprep.subr.mxu0 0.0
    %2929 = vmatpush1.xpose.msra.mxu0 0.0
    %2930 = vmatprep.subr.mxu0 0.0
    %2931 = vmatpush1.xpose.msra.mxu0 0.0
    %2932 = vmatprep.subr.mxu0 0.0
    %2933 = vmatpush1.xpose.msra.mxu0 0.0
    %2934 = vmatprep.subr.mxu0 0.0
    %2935 = vmatpush1.xpose.msra.mxu0 0.0
    %2936 = vmatprep.subr.mxu0 0.0
    %2937 = vmatpush1.xpose.msra.mxu0 0.0
    %2938 = vmatprep.subr.mxu0 0.0
    %2939 = vmatpush1.xpose.msra.mxu0 0.0
    %2940 = vmatprep.subr.mxu0 0.0
    %2941 = vmatpush1.xpose.msra.mxu0 0.0
    %2942 = vmatprep.subr.mxu0 0.0
    %2943 = vmatpush1.xpose.msra.mxu0 0.0
    %2944 = vmatprep.subr.mxu0 0.0
    %2945 = vmatpush1.xpose.msra.mxu0 %v2912
    %2946 = vmatprep.subr.mxu0 0.0
    %2947 = vmatpush2.xpose.msra.mxu0 0.0
    %2948 = vmatprep.subr.mxu0 0.0
    %2949 = vmatpush2.xpose.msra.mxu0 0.0
    %2950 = vmatprep.subr.mxu0 0.0
    %2951 = vmatpush2.xpose.msra.mxu0 0.0
    %2952 = vmatprep.subr.mxu0 0.0
    %2953 = vmatpush2.xpose.msra.mxu0 0.0
    %2954 = vmatprep.subr.mxu0 0.0
    %2955 = vmatpush2.xpose.msra.mxu0 0.0
    %2956 = vmatprep.subr.mxu0 0.0
    %2957 = vmatpush2.xpose.msra.mxu0 0.0
    %2958 = vmatprep.subr.mxu0 0.0
    %2959 = vmatpush2.xpose.msra.mxu0 0.0
    %2960 = vmatprep.subr.mxu0 0.0
    %2961 = vmatpush2.xpose.msra.mxu0 0.0
    %2962 = vmatprep.subr.mxu0 0.0
    %2963 = vmatpush2.xpose.msra.mxu0 0.0
    %2964 = vmatprep.subr.mxu0 0.0
    %2965 = vmatpush2.xpose.msra.mxu0 0.0
    %2966 = vmatprep.subr.mxu0 0.0
    %2967 = vmatpush2.xpose.msra.mxu0 0.0
    %2968 = vmatprep.subr.mxu0 0.0
    %2969 = vmatpush2.xpose.msra.mxu0 0.0
    %2970 = vmatprep.subr.mxu0 0.0
    %2971 = vmatpush2.xpose.msra.mxu0 0.0
    %2972 = vmatprep.subr.mxu0 0.0
    %2973 = vmatpush2.xpose.msra.mxu0 0.0
    %2974 = vmatprep.subr.mxu0 0.0
    %2975 = vmatpush2.xpose.msra.mxu0 0.0
    %2976 = vmatprep.subr.mxu0 0.0
    %2977 = vmatpush2.xpose.msra.mxu0 0.0
    %2978 = vmatprep.mubr.f32.mxu0 0.0
    %2979 = vmatmul.mubr.f32.gmra.mxu0 %v2910
    %v2980 = vpop.f32.mrf.mxu0
    %v2981 = vadd.f32 0.0, %v2980
    %v2982 = vpop.f32.mrf.mxu0
    %2983 = vdwg.mxu0
    %2984 = vrot.lane.b32.xlu0 %v2426, 96
    %v2985 = vpop.permute.xlu0 %2984
    %v2986 = vsel %vm586, %v2401, 0
    %v2988 = vsel %vm586, %v2985, 0
    %2990 = vmatprep.subr.mxu0 0.0
    %2991 = vmatpush1.xpose.msra.mxu0 0.0
    %2992 = vmatprep.subr.mxu0 0.0
    %2993 = vmatpush1.xpose.msra.mxu0 0.0
    %2994 = vmatprep.subr.mxu0 0.0
    %2995 = vmatpush1.xpose.msra.mxu0 0.0
    %2996 = vmatprep.subr.mxu0 0.0
    %2997 = vmatpush1.xpose.msra.mxu0 0.0
    %2998 = vmatprep.subr.mxu0 0.0
    %2999 = vmatpush1.xpose.msra.mxu0 0.0
    %3000 = vmatprep.subr.mxu0 0.0
    %3001 = vmatpush1.xpose.msra.mxu0 0.0
    %3002 = vmatprep.subr.mxu0 0.0
    %3003 = vmatpush1.xpose.msra.mxu0 0.0
    %3004 = vmatprep.subr.mxu0 0.0
    %3005 = vmatpush1.xpose.msra.mxu0 0.0
    %3006 = vmatprep.subr.mxu0 0.0
    %3007 = vmatpush1.xpose.msra.mxu0 0.0
    %3008 = vmatprep.subr.mxu0 0.0
    %3009 = vmatpush1.xpose.msra.mxu0 0.0
    %3010 = vmatprep.subr.mxu0 0.0
    %3011 = vmatpush1.xpose.msra.mxu0 0.0
    %3012 = vmatprep.subr.mxu0 0.0
    %3013 = vmatpush1.xpose.msra.mxu0 0.0
    %3014 = vmatprep.subr.mxu0 0.0
    %3015 = vmatpush1.xpose.msra.mxu0 0.0
    %3016 = vmatprep.subr.mxu0 0.0
    %3017 = vmatpush1.xpose.msra.mxu0 0.0
    %3018 = vmatprep.subr.mxu0 0.0
    %3019 = vmatpush1.xpose.msra.mxu0 0.0
    %3020 = vmatprep.subr.mxu0 0.0
    %3021 = vmatpush1.xpose.msra.mxu0 %v2988
    %3022 = vmatprep.subr.mxu0 0.0
    %3023 = vmatpush2.xpose.msra.mxu0 0.0
    %3024 = vmatprep.subr.mxu0 0.0
    %3025 = vmatpush2.xpose.msra.mxu0 0.0
    %3026 = vmatprep.subr.mxu0 0.0
    %3027 = vmatpush2.xpose.msra.mxu0 0.0
    %3028 = vmatprep.subr.mxu0 0.0
    %3029 = vmatpush2.xpose.msra.mxu0 0.0
    %3030 = vmatprep.subr.mxu0 0.0
    %3031 = vmatpush2.xpose.msra.mxu0 0.0
    %3032 = vmatprep.subr.mxu0 0.0
    %3033 = vmatpush2.xpose.msra.mxu0 0.0
    %3034 = vmatprep.subr.mxu0 0.0
    %3035 = vmatpush2.xpose.msra.mxu0 0.0
    %3036 = vmatprep.subr.mxu0 0.0
    %3037 = vmatpush2.xpose.msra.mxu0 0.0
    %3038 = vmatprep.subr.mxu0 0.0
    %3039 = vmatpush2.xpose.msra.mxu0 0.0
    %3040 = vmatprep.subr.mxu0 0.0
    %3041 = vmatpush2.xpose.msra.mxu0 0.0
    %3042 = vmatprep.subr.mxu0 0.0
    %3043 = vmatpush2.xpose.msra.mxu0 0.0
    %3044 = vmatprep.subr.mxu0 0.0
    %3045 = vmatpush2.xpose.msra.mxu0 0.0
    %3046 = vmatprep.subr.mxu0 0.0
    %3047 = vmatpush2.xpose.msra.mxu0 0.0
    %3048 = vmatprep.subr.mxu0 0.0
    %3049 = vmatpush2.xpose.msra.mxu0 0.0
    %3050 = vmatprep.subr.mxu0 0.0
    %3051 = vmatpush2.xpose.msra.mxu0 0.0
    %3052 = vmatprep.subr.mxu0 0.0
    %3053 = vmatpush2.xpose.msra.mxu0 0.0
    %3054 = vmatprep.mubr.f32.mxu0 0.0
    %3055 = vmatmul.mubr.f32.gmra.mxu0 %v2986
    %v3056 = vpop.f32.mrf.mxu0
    %v3057 = vadd.f32 0.0, %v3056
    %v3058 = vpop.f32.mrf.mxu0
    %3059 = vdwg.mxu0
    %v3060 = vmul.f32 %v2525, 0.35355338
    %v3061 = vmul.f32 %v2601, 0.35355338
    %v3062 = vmul.f32 %v2677, 0.35355338
    %v3063 = vmul.f32 %v2753, 0.35355338
    %v3064 = vmul.f32 %v2829, 0.35355338
    %v3065 = vmul.f32 %v2905, 0.35355338
    %v3066 = vmul.f32 %v2981, 0.35355338
    %v3067 = vmul.f32 %v3057, 0.35355338
    %v3068 = vadd.f32 %v3060, %v420
    %v3069 = vadd.f32 %v3061, %v421
    %v3070 = vadd.f32 %v3062, %v422
    %v3071 = vadd.f32 %v3063, %v423
    %v3072 = vadd.f32 %v3064, %v424
    %v3073 = vadd.f32 %v3065, %v425
    %v3074 = vadd.f32 %v3066, %v426
    %v3075 = vadd.f32 %v3067, %v427
    %v3076 = vsel %vm586, %v3068, -inf
    %3077 = vmax.xlane.f32.xlu0 %v3076
    %v3078 = vpop.xlane.xlu0 %3077
    %v3079 = vsel %vm586, %v3069, -inf
    %3080 = vmax.xlane.f32.xlu0 %v3079
    %v3081 = vpop.xlane.xlu0 %3080
    %v3082 = vsel %vm586, %v3070, -inf
    %3083 = vmax.xlane.f32.xlu0 %v3082
    %v3084 = vpop.xlane.xlu0 %3083
    %v3085 = vsel %vm586, %v3071, -inf
    %3086 = vmax.xlane.f32.xlu0 %v3085
    %v3087 = vpop.xlane.xlu0 %3086
    %v3088 = vsel %vm586, %v3072, -inf
    %3089 = vmax.xlane.f32.xlu0 %v3088
    %v3090 = vpop.xlane.xlu0 %3089
    %v3091 = vsel %vm586, %v3073, -inf
    %3092 = vmax.xlane.f32.xlu0 %v3091
    %v3093 = vpop.xlane.xlu0 %3092
    %v3094 = vsel %vm586, %v3074, -inf
    %3095 = vmax.xlane.f32.xlu0 %v3094
    %v3096 = vpop.xlane.xlu0 %3095
    %v3097 = vsel %vm586, %v3075, -inf
    %3098 = vmax.xlane.f32.xlu0 %v3097
    %v3099 = vpop.xlane.xlu0 %3098
    %v3100 = vsub.f32 %v3068, %v3078
    %v3101 = vsub.f32 %v3069, %v3081
    %v3102 = vsub.f32 %v3070, %v3084
    %v3103 = vsub.f32 %v3071, %v3087
    %v3104 = vsub.f32 %v3072, %v3090
    %v3105 = vsub.f32 %v3073, %v3093
    %v3106 = vsub.f32 %v3074, %v3096
    %v3107 = vsub.f32 %v3075, %v3099
    %v3108 = vmul.f32 %v3100, 1.442695
    %v3109 = vpow.pop %v3108
    %v3110 = vmul.f32 %v3101, 1.442695
    %v3111 = vpow.pop %v3110
    %v3112 = vmul.f32 %v3102, 1.442695
    %v3113 = vpow.pop %v3112
    %v3114 = vmul.f32 %v3103, 1.442695
    %v3115 = vpow.pop %v3114
    %v3116 = vmul.f32 %v3104, 1.442695
    %v3117 = vpow.pop %v3116
    %v3118 = vmul.f32 %v3105, 1.442695
    %v3119 = vpow.pop %v3118
    %v3120 = vmul.f32 %v3106, 1.442695
    %v3121 = vpow.pop %v3120
    %v3122 = vmul.f32 %v3107, 1.442695
    %v3123 = vpow.pop %v3122
    %v3124 = vsel %vm586, %v3109, 0.0
    %3125 = vadd.xlane.f32.xlu0 %v3124
    %v3126 = vpop.xlane.xlu0 %3125
    %v3127 = vsel %vm586, %v3111, 0.0
    %3128 = vadd.xlane.f32.xlu0 %v3127
    %v3129 = vpop.xlane.xlu0 %3128
    %v3130 = vsel %vm586, %v3113, 0.0
    %3131 = vadd.xlane.f32.xlu0 %v3130
    %v3132 = vpop.xlane.xlu0 %3131
    %v3133 = vsel %vm586, %v3115, 0.0
    %3134 = vadd.xlane.f32.xlu0 %v3133
    %v3135 = vpop.xlane.xlu0 %3134
    %v3136 = vsel %vm586, %v3117, 0.0
    %3137 = vadd.xlane.f32.xlu0 %v3136
    %v3138 = vpop.xlane.xlu0 %3137
    %v3139 = vsel %vm586, %v3119, 0.0
    %3140 = vadd.xlane.f32.xlu0 %v3139
    %v3141 = vpop.xlane.xlu0 %3140
    %v3142 = vsel %vm586, %v3121, 0.0
    %3143 = vadd.xlane.f32.xlu0 %v3142
    %v3144 = vpop.xlane.xlu0 %3143
    %v3145 = vsel %vm586, %v3123, 0.0
    %3146 = vadd.xlane.f32.xlu0 %v3145
    %v3147 = vpop.xlane.xlu0 %3146
    %v3148 = vrcp.pop %v3126
    %v3149 = vmul.f32 %v3109, %v3148
    %v3150 = vrcp.pop %v3129
    %v3151 = vmul.f32 %v3111, %v3150
    %v3152 = vrcp.pop %v3132
    %v3153 = vmul.f32 %v3113, %v3152
    %v3154 = vrcp.pop %v3135
    %v3155 = vmul.f32 %v3115, %v3154
    %v3156 = vrcp.pop %v3138
    %v3157 = vmul.f32 %v3117, %v3156
    %v3158 = vrcp.pop %v3141
    %v3159 = vmul.f32 %v3119, %v3158
    %v3160 = vrcp.pop %v3144
    %v3161 = vmul.f32 %v3121, %v3160
    %v3162 = vrcp.pop %v3147
    %v3163 = vmul.f32 %v3123, %v3162
    %3164 = vrot.lane.b32.xlu0 %v2436, 64
    %v3165 = vpop.permute.xlu0 %3164
    %v3168 = vsel %vm586, %v3149, 0
    %3170 = vmatprep.subr.mxu0 0.0
    %3171 = vmatpush1.msra.mxu0 0.0
    %3172 = vmatprep.subr.mxu0 0.0
    %3173 = vmatpush1.msra.mxu0 0.0
    %3174 = vmatprep.subr.mxu0 0.0
    %3175 = vmatpush1.msra.mxu0 0.0
    %3176 = vmatprep.subr.mxu0 0.0
    %3177 = vmatpush1.msra.mxu0 0.0
    %3178 = vmatprep.subr.mxu0 0.0
    %3179 = vmatpush1.msra.mxu0 0.0
    %3180 = vmatprep.subr.mxu0 0.0
    %3181 = vmatpush1.msra.mxu0 0.0
    %3182 = vmatprep.subr.mxu0 0.0
    %3183 = vmatpush1.msra.mxu0 0.0
    %3184 = vmatprep.subr.mxu0 0.0
    %3185 = vmatpush1.msra.mxu0 0.0
    %3186 = vmatprep.subr.mxu0 0.0
    %3187 = vmatpush1.msra.mxu0 0.0
    %3188 = vmatprep.subr.mxu0 0.0
    %3189 = vmatpush1.msra.mxu0 0.0
    %3190 = vmatprep.subr.mxu0 0.0
    %3191 = vmatpush1.msra.mxu0 0.0
    %3192 = vmatprep.subr.mxu0 0.0
    %3193 = vmatpush1.msra.mxu0 0.0
    %3194 = vmatprep.subr.mxu0 0.0
    %3195 = vmatpush1.msra.mxu0 0.0
    %3196 = vmatprep.subr.mxu0 0.0
    %3197 = vmatpush1.msra.mxu0 0.0
    %3198 = vmatprep.subr.mxu0 0.0
    %3199 = vmatpush1.msra.mxu0 0.0
    %3200 = vmatprep.subr.mxu0 0.0
    %3201 = vmatpush1.msra.mxu0 %v3165
    %3202 = vmatprep.subr.mxu0 0.0
    %3203 = vmatpush2.msra.mxu0 0.0
    %3204 = vmatprep.subr.mxu0 0.0
    %3205 = vmatpush2.msra.mxu0 0.0
    %3206 = vmatprep.subr.mxu0 0.0
    %3207 = vmatpush2.msra.mxu0 0.0
    %3208 = vmatprep.subr.mxu0 0.0
    %3209 = vmatpush2.msra.mxu0 0.0
    %3210 = vmatprep.subr.mxu0 0.0
    %3211 = vmatpush2.msra.mxu0 0.0
    %3212 = vmatprep.subr.mxu0 0.0
    %3213 = vmatpush2.msra.mxu0 0.0
    %3214 = vmatprep.subr.mxu0 0.0
    %3215 = vmatpush2.msra.mxu0 0.0
    %3216 = vmatprep.subr.mxu0 0.0
    %3217 = vmatpush2.msra.mxu0 0.0
    %3218 = vmatprep.subr.mxu0 0.0
    %3219 = vmatpush2.msra.mxu0 0.0
    %3220 = vmatprep.subr.mxu0 0.0
    %3221 = vmatpush2.msra.mxu0 0.0
    %3222 = vmatprep.subr.mxu0 0.0
    %3223 = vmatpush2.msra.mxu0 0.0
    %3224 = vmatprep.subr.mxu0 0.0
    %3225 = vmatpush2.msra.mxu0 0.0
    %3226 = vmatprep.subr.mxu0 0.0
    %3227 = vmatpush2.msra.mxu0 0.0
    %3228 = vmatprep.subr.mxu0 0.0
    %3229 = vmatpush2.msra.mxu0 0.0
    %3230 = vmatprep.subr.mxu0 0.0
    %3231 = vmatpush2.msra.mxu0 0.0
    %3232 = vmatprep.subr.mxu0 0.0
    %3233 = vmatpush2.msra.mxu0 0.0
    %3234 = vmatprep.mubr.f32.mxu0 0.0
    %3235 = vmatmul.mubr.f32.gmra.mxu0 %v3168
    %v3236 = vpop.f32.mrf.mxu0
    %v3237 = vadd.f32 0.0, %v3236
    %v3238 = vpop.f32.mrf.mxu0
    %3239 = vdwg.mxu0
    %3240 = vrot.lane.b32.xlu0 %v2437, 64
    %v3241 = vpop.permute.xlu0 %3240
    %v3244 = vsel %vm586, %v3151, 0
    %3246 = vmatprep.subr.mxu0 0.0
    %3247 = vmatpush1.msra.mxu0 0.0
    %3248 = vmatprep.subr.mxu0 0.0
    %3249 = vmatpush1.msra.mxu0 0.0
    %3250 = vmatprep.subr.mxu0 0.0
    %3251 = vmatpush1.msra.mxu0 0.0
    %3252 = vmatprep.subr.mxu0 0.0
    %3253 = vmatpush1.msra.mxu0 0.0
    %3254 = vmatprep.subr.mxu0 0.0
    %3255 = vmatpush1.msra.mxu0 0.0
    %3256 = vmatprep.subr.mxu0 0.0
    %3257 = vmatpush1.msra.mxu0 0.0
    %3258 = vmatprep.subr.mxu0 0.0
    %3259 = vmatpush1.msra.mxu0 0.0
    %3260 = vmatprep.subr.mxu0 0.0
    %3261 = vmatpush1.msra.mxu0 0.0
    %3262 = vmatprep.subr.mxu0 0.0
    %3263 = vmatpush1.msra.mxu0 0.0
    %3264 = vmatprep.subr.mxu0 0.0
    %3265 = vmatpush1.msra.mxu0 0.0
    %3266 = vmatprep.subr.mxu0 0.0
    %3267 = vmatpush1.msra.mxu0 0.0
    %3268 = vmatprep.subr.mxu0 0.0
    %3269 = vmatpush1.msra.mxu0 0.0
    %3270 = vmatprep.subr.mxu0 0.0
    %3271 = vmatpush1.msra.mxu0 0.0
    %3272 = vmatprep.subr.mxu0 0.0
    %3273 = vmatpush1.msra.mxu0 0.0
    %3274 = vmatprep.subr.mxu0 0.0
    %3275 = vmatpush1.msra.mxu0 0.0
    %3276 = vmatprep.subr.mxu0 0.0
    %3277 = vmatpush1.msra.mxu0 %v3241
    %3278 = vmatprep.subr.mxu0 0.0
    %3279 = vmatpush2.msra.mxu0 0.0
    %3280 = vmatprep.subr.mxu0 0.0
    %3281 = vmatpush2.msra.mxu0 0.0
    %3282 = vmatprep.subr.mxu0 0.0
    %3283 = vmatpush2.msra.mxu0 0.0
    %3284 = vmatprep.subr.mxu0 0.0
    %3285 = vmatpush2.msra.mxu0 0.0
    %3286 = vmatprep.subr.mxu0 0.0
    %3287 = vmatpush2.msra.mxu0 0.0
    %3288 = vmatprep.subr.mxu0 0.0
    %3289 = vmatpush2.msra.mxu0 0.0
    %3290 = vmatprep.subr.mxu0 0.0
    %3291 = vmatpush2.msra.mxu0 0.0
    %3292 = vmatprep.subr.mxu0 0.0
    %3293 = vmatpush2.msra.mxu0 0.0
    %3294 = vmatprep.subr.mxu0 0.0
    %3295 = vmatpush2.msra.mxu0 0.0
    %3296 = vmatprep.subr.mxu0 0.0
    %3297 = vmatpush2.msra.mxu0 0.0
    %3298 = vmatprep.subr.mxu0 0.0
    %3299 = vmatpush2.msra.mxu0 0.0
    %3300 = vmatprep.subr.mxu0 0.0
    %3301 = vmatpush2.msra.mxu0 0.0
    %3302 = vmatprep.subr.mxu0 0.0
    %3303 = vmatpush2.msra.mxu0 0.0
    %3304 = vmatprep.subr.mxu0 0.0
    %3305 = vmatpush2.msra.mxu0 0.0
    %3306 = vmatprep.subr.mxu0 0.0
    %3307 = vmatpush2.msra.mxu0 0.0
    %3308 = vmatprep.subr.mxu0 0.0
    %3309 = vmatpush2.msra.mxu0 0.0
    %3310 = vmatprep.mubr.f32.mxu0 0.0
    %3311 = vmatmul.mubr.f32.gmra.mxu0 %v3244
    %v3312 = vpop.f32.mrf.mxu0
    %v3313 = vadd.f32 0.0, %v3312
    %v3314 = vpop.f32.mrf.mxu0
    %3315 = vdwg.mxu0
    %3316 = vrot.lane.b32.xlu0 %v2440, 64
    %v3317 = vpop.permute.xlu0 %3316
    %v3320 = vsel %vm586, %v3153, 0
    %3322 = vmatprep.subr.mxu0 0.0
    %3323 = vmatpush1.msra.mxu0 0.0
    %3324 = vmatprep.subr.mxu0 0.0
    %3325 = vmatpush1.msra.mxu0 0.0
    %3326 = vmatprep.subr.mxu0 0.0
    %3327 = vmatpush1.msra.mxu0 0.0
    %3328 = vmatprep.subr.mxu0 0.0
    %3329 = vmatpush1.msra.mxu0 0.0
    %3330 = vmatprep.subr.mxu0 0.0
    %3331 = vmatpush1.msra.mxu0 0.0
    %3332 = vmatprep.subr.mxu0 0.0
    %3333 = vmatpush1.msra.mxu0 0.0
    %3334 = vmatprep.subr.mxu0 0.0
    %3335 = vmatpush1.msra.mxu0 0.0
    %3336 = vmatprep.subr.mxu0 0.0
    %3337 = vmatpush1.msra.mxu0 0.0
    %3338 = vmatprep.subr.mxu0 0.0
    %3339 = vmatpush1.msra.mxu0 0.0
    %3340 = vmatprep.subr.mxu0 0.0
    %3341 = vmatpush1.msra.mxu0 0.0
    %3342 = vmatprep.subr.mxu0 0.0
    %3343 = vmatpush1.msra.mxu0 0.0
    %3344 = vmatprep.subr.mxu0 0.0
    %3345 = vmatpush1.msra.mxu0 0.0
    %3346 = vmatprep.subr.mxu0 0.0
    %3347 = vmatpush1.msra.mxu0 0.0
    %3348 = vmatprep.subr.mxu0 0.0
    %3349 = vmatpush1.msra.mxu0 0.0
    %3350 = vmatprep.subr.mxu0 0.0
    %3351 = vmatpush1.msra.mxu0 0.0
    %3352 = vmatprep.subr.mxu0 0.0
    %3353 = vmatpush1.msra.mxu0 %v3317
    %3354 = vmatprep.subr.mxu0 0.0
    %3355 = vmatpush2.msra.mxu0 0.0
    %3356 = vmatprep.subr.mxu0 0.0
    %3357 = vmatpush2.msra.mxu0 0.0
    %3358 = vmatprep.subr.mxu0 0.0
    %3359 = vmatpush2.msra.mxu0 0.0
    %3360 = vmatprep.subr.mxu0 0.0
    %3361 = vmatpush2.msra.mxu0 0.0
    %3362 = vmatprep.subr.mxu0 0.0
    %3363 = vmatpush2.msra.mxu0 0.0
    %3364 = vmatprep.subr.mxu0 0.0
    %3365 = vmatpush2.msra.mxu0 0.0
    %3366 = vmatprep.subr.mxu0 0.0
    %3367 = vmatpush2.msra.mxu0 0.0
    %3368 = vmatprep.subr.mxu0 0.0
    %3369 = vmatpush2.msra.mxu0 0.0
    %3370 = vmatprep.subr.mxu0 0.0
    %3371 = vmatpush2.msra.mxu0 0.0
    %3372 = vmatprep.subr.mxu0 0.0
    %3373 = vmatpush2.msra.mxu0 0.0
    %3374 = vmatprep.subr.mxu0 0.0
    %3375 = vmatpush2.msra.mxu0 0.0
    %3376 = vmatprep.subr.mxu0 0.0
    %3377 = vmatpush2.msra.mxu0 0.0
    %3378 = vmatprep.subr.mxu0 0.0
    %3379 = vmatpush2.msra.mxu0 0.0
    %3380 = vmatprep.subr.mxu0 0.0
    %3381 = vmatpush2.msra.mxu0 0.0
    %3382 = vmatprep.subr.mxu0 0.0
    %3383 = vmatpush2.msra.mxu0 0.0
    %3384 = vmatprep.subr.mxu0 0.0
    %3385 = vmatpush2.msra.mxu0 0.0
    %3386 = vmatprep.mubr.f32.mxu0 0.0
    %3387 = vmatmul.mubr.f32.gmra.mxu0 %v3320
    %v3388 = vpop.f32.mrf.mxu0
    %v3389 = vadd.f32 0.0, %v3388
    %v3390 = vpop.f32.mrf.mxu0
    %3391 = vdwg.mxu0
    %3392 = vrot.lane.b32.xlu0 %v2443, 64
    %v3393 = vpop.permute.xlu0 %3392
    %v3396 = vsel %vm586, %v3155, 0
    %3398 = vmatprep.subr.mxu0 0.0
    %3399 = vmatpush1.msra.mxu0 0.0
    %3400 = vmatprep.subr.mxu0 0.0
    %3401 = vmatpush1.msra.mxu0 0.0
    %3402 = vmatprep.subr.mxu0 0.0
    %3403 = vmatpush1.msra.mxu0 0.0
    %3404 = vmatprep.subr.mxu0 0.0
    %3405 = vmatpush1.msra.mxu0 0.0
    %3406 = vmatprep.subr.mxu0 0.0
    %3407 = vmatpush1.msra.mxu0 0.0
    %3408 = vmatprep.subr.mxu0 0.0
    %3409 = vmatpush1.msra.mxu0 0.0
    %3410 = vmatprep.subr.mxu0 0.0
    %3411 = vmatpush1.msra.mxu0 0.0
    %3412 = vmatprep.subr.mxu0 0.0
    %3413 = vmatpush1.msra.mxu0 0.0
    %3414 = vmatprep.subr.mxu0 0.0
    %3415 = vmatpush1.msra.mxu0 0.0
    %3416 = vmatprep.subr.mxu0 0.0
    %3417 = vmatpush1.msra.mxu0 0.0
    %3418 = vmatprep.subr.mxu0 0.0
    %3419 = vmatpush1.msra.mxu0 0.0
    %3420 = vmatprep.subr.mxu0 0.0
    %3421 = vmatpush1.msra.mxu0 0.0
    %3422 = vmatprep.subr.mxu0 0.0
    %3423 = vmatpush1.msra.mxu0 0.0
    %3424 = vmatprep.subr.mxu0 0.0
    %3425 = vmatpush1.msra.mxu0 0.0
    %3426 = vmatprep.subr.mxu0 0.0
    %3427 = vmatpush1.msra.mxu0 0.0
    %3428 = vmatprep.subr.mxu0 0.0
    %3429 = vmatpush1.msra.mxu0 %v3393
    %3430 = vmatprep.subr.mxu0 0.0
    %3431 = vmatpush2.msra.mxu0 0.0
    %3432 = vmatprep.subr.mxu0 0.0
    %3433 = vmatpush2.msra.mxu0 0.0
    %3434 = vmatprep.subr.mxu0 0.0
    %3435 = vmatpush2.msra.mxu0 0.0
    %3436 = vmatprep.subr.mxu0 0.0
    %3437 = vmatpush2.msra.mxu0 0.0
    %3438 = vmatprep.subr.mxu0 0.0
    %3439 = vmatpush2.msra.mxu0 0.0
    %3440 = vmatprep.subr.mxu0 0.0
    %3441 = vmatpush2.msra.mxu0 0.0
    %3442 = vmatprep.subr.mxu0 0.0
    %3443 = vmatpush2.msra.mxu0 0.0
    %3444 = vmatprep.subr.mxu0 0.0
    %3445 = vmatpush2.msra.mxu0 0.0
    %3446 = vmatprep.subr.mxu0 0.0
    %3447 = vmatpush2.msra.mxu0 0.0
    %3448 = vmatprep.subr.mxu0 0.0
    %3449 = vmatpush2.msra.mxu0 0.0
    %3450 = vmatprep.subr.mxu0 0.0
    %3451 = vmatpush2.msra.mxu0 0.0
    %3452 = vmatprep.subr.mxu0 0.0
    %3453 = vmatpush2.msra.mxu0 0.0
    %3454 = vmatprep.subr.mxu0 0.0
    %3455 = vmatpush2.msra.mxu0 0.0
    %3456 = vmatprep.subr.mxu0 0.0
    %3457 = vmatpush2.msra.mxu0 0.0
    %3458 = vmatprep.subr.mxu0 0.0
    %3459 = vmatpush2.msra.mxu0 0.0
    %3460 = vmatprep.subr.mxu0 0.0
    %3461 = vmatpush2.msra.mxu0 0.0
    %3462 = vmatprep.mubr.f32.mxu0 0.0
    %3463 = vmatmul.mubr.f32.gmra.mxu0 %v3396
    %v3464 = vpop.f32.mrf.mxu0
    %v3465 = vadd.f32 0.0, %v3464
    %v3466 = vpop.f32.mrf.mxu0
    %3467 = vdwg.mxu0
    %3468 = vrot.lane.b32.xlu0 %v2445, 64
    %v3469 = vpop.permute.xlu0 %3468
    %v3472 = vsel %vm586, %v3157, 0
    %3474 = vmatprep.subr.mxu0 0.0
    %3475 = vmatpush1.msra.mxu0 0.0
    %3476 = vmatprep.subr.mxu0 0.0
    %3477 = vmatpush1.msra.mxu0 0.0
    %3478 = vmatprep.subr.mxu0 0.0
    %3479 = vmatpush1.msra.mxu0 0.0
    %3480 = vmatprep.subr.mxu0 0.0
    %3481 = vmatpush1.msra.mxu0 0.0
    %3482 = vmatprep.subr.mxu0 0.0
    %3483 = vmatpush1.msra.mxu0 0.0
    %3484 = vmatprep.subr.mxu0 0.0
    %3485 = vmatpush1.msra.mxu0 0.0
    %3486 = vmatprep.subr.mxu0 0.0
    %3487 = vmatpush1.msra.mxu0 0.0
    %3488 = vmatprep.subr.mxu0 0.0
    %3489 = vmatpush1.msra.mxu0 0.0
    %3490 = vmatprep.subr.mxu0 0.0
    %3491 = vmatpush1.msra.mxu0 0.0
    %3492 = vmatprep.subr.mxu0 0.0
    %3493 = vmatpush1.msra.mxu0 0.0
    %3494 = vmatprep.subr.mxu0 0.0
    %3495 = vmatpush1.msra.mxu0 0.0
    %3496 = vmatprep.subr.mxu0 0.0
    %3497 = vmatpush1.msra.mxu0 0.0
    %3498 = vmatprep.subr.mxu0 0.0
    %3499 = vmatpush1.msra.mxu0 0.0
    %3500 = vmatprep.subr.mxu0 0.0
    %3501 = vmatpush1.msra.mxu0 0.0
    %3502 = vmatprep.subr.mxu0 0.0
    %3503 = vmatpush1.msra.mxu0 0.0
    %3504 = vmatprep.subr.mxu0 0.0
    %3505 = vmatpush1.msra.mxu0 %v3469
    %3506 = vmatprep.subr.mxu0 0.0
    %3507 = vmatpush2.msra.mxu0 0.0
    %3508 = vmatprep.subr.mxu0 0.0
    %3509 = vmatpush2.msra.mxu0 0.0
    %3510 = vmatprep.subr.mxu0 0.0
    %3511 = vmatpush2.msra.mxu0 0.0
    %3512 = vmatprep.subr.mxu0 0.0
    %3513 = vmatpush2.msra.mxu0 0.0
    %3514 = vmatprep.subr.mxu0 0.0
    %3515 = vmatpush2.msra.mxu0 0.0
    %3516 = vmatprep.subr.mxu0 0.0
    %3517 = vmatpush2.msra.mxu0 0.0
    %3518 = vmatprep.subr.mxu0 0.0
    %3519 = vmatpush2.msra.mxu0 0.0
    %3520 = vmatprep.subr.mxu0 0.0
    %3521 = vmatpush2.msra.mxu0 0.0
    %3522 = vmatprep.subr.mxu0 0.0
    %3523 = vmatpush2.msra.mxu0 0.0
    %3524 = vmatprep.subr.mxu0 0.0
    %3525 = vmatpush2.msra.mxu0 0.0
    %3526 = vmatprep.subr.mxu0 0.0
    %3527 = vmatpush2.msra.mxu0 0.0
    %3528 = vmatprep.subr.mxu0 0.0
    %3529 = vmatpush2.msra.mxu0 0.0
    %3530 = vmatprep.subr.mxu0 0.0
    %3531 = vmatpush2.msra.mxu0 0.0
    %3532 = vmatprep.subr.mxu0 0.0
    %3533 = vmatpush2.msra.mxu0 0.0
    %3534 = vmatprep.subr.mxu0 0.0
    %3535 = vmatpush2.msra.mxu0 0.0
    %3536 = vmatprep.subr.mxu0 0.0
    %3537 = vmatpush2.msra.mxu0 0.0
    %3538 = vmatprep.mubr.f32.mxu0 0.0
    %3539 = vmatmul.mubr.f32.gmra.mxu0 %v3472
    %v3540 = vpop.f32.mrf.mxu0
    %v3541 = vadd.f32 0.0, %v3540
    %v3542 = vpop.f32.mrf.mxu0
    %3543 = vdwg.mxu0
    %3544 = vrot.lane.b32.xlu0 %v2447, 64
    %v3545 = vpop.permute.xlu0 %3544
    %v3548 = vsel %vm586, %v3159, 0
    %3550 = vmatprep.subr.mxu0 0.0
    %3551 = vmatpush1.msra.mxu0 0.0
    %3552 = vmatprep.subr.mxu0 0.0
    %3553 = vmatpush1.msra.mxu0 0.0
    %3554 = vmatprep.subr.mxu0 0.0
    %3555 = vmatpush1.msra.mxu0 0.0
    %3556 = vmatprep.subr.mxu0 0.0
    %3557 = vmatpush1.msra.mxu0 0.0
    %3558 = vmatprep.subr.mxu0 0.0
    %3559 = vmatpush1.msra.mxu0 0.0
    %3560 = vmatprep.subr.mxu0 0.0
    %3561 = vmatpush1.msra.mxu0 0.0
    %3562 = vmatprep.subr.mxu0 0.0
    %3563 = vmatpush1.msra.mxu0 0.0
    %3564 = vmatprep.subr.mxu0 0.0
    %3565 = vmatpush1.msra.mxu0 0.0
    %3566 = vmatprep.subr.mxu0 0.0
    %3567 = vmatpush1.msra.mxu0 0.0
    %3568 = vmatprep.subr.mxu0 0.0
    %3569 = vmatpush1.msra.mxu0 0.0
    %3570 = vmatprep.subr.mxu0 0.0
    %3571 = vmatpush1.msra.mxu0 0.0
    %3572 = vmatprep.subr.mxu0 0.0
    %3573 = vmatpush1.msra.mxu0 0.0
    %3574 = vmatprep.subr.mxu0 0.0
    %3575 = vmatpush1.msra.mxu0 0.0
    %3576 = vmatprep.subr.mxu0 0.0
    %3577 = vmatpush1.msra.mxu0 0.0
    %3578 = vmatprep.subr.mxu0 0.0
    %3579 = vmatpush1.msra.mxu0 0.0
    %3580 = vmatprep.subr.mxu0 0.0
    %3581 = vmatpush1.msra.mxu0 %v3545
    %3582 = vmatprep.subr.mxu0 0.0
    %3583 = vmatpush2.msra.mxu0 0.0
    %3584 = vmatprep.subr.mxu0 0.0
    %3585 = vmatpush2.msra.mxu0 0.0
    %3586 = vmatprep.subr.mxu0 0.0
    %3587 = vmatpush2.msra.mxu0 0.0
    %3588 = vmatprep.subr.mxu0 0.0
    %3589 = vmatpush2.msra.mxu0 0.0
    %3590 = vmatprep.subr.mxu0 0.0
    %3591 = vmatpush2.msra.mxu0 0.0
    %3592 = vmatprep.subr.mxu0 0.0
    %3593 = vmatpush2.msra.mxu0 0.0
    %3594 = vmatprep.subr.mxu0 0.0
    %3595 = vmatpush2.msra.mxu0 0.0
    %3596 = vmatprep.subr.mxu0 0.0
    %3597 = vmatpush2.msra.mxu0 0.0
    %3598 = vmatprep.subr.mxu0 0.0
    %3599 = vmatpush2.msra.mxu0 0.0
    %3600 = vmatprep.subr.mxu0 0.0
    %3601 = vmatpush2.msra.mxu0 0.0
    %3602 = vmatprep.subr.mxu0 0.0
    %3603 = vmatpush2.msra.mxu0 0.0
    %3604 = vmatprep.subr.mxu0 0.0
    %3605 = vmatpush2.msra.mxu0 0.0
    %3606 = vmatprep.subr.mxu0 0.0
    %3607 = vmatpush2.msra.mxu0 0.0
    %3608 = vmatprep.subr.mxu0 0.0
    %3609 = vmatpush2.msra.mxu0 0.0
    %3610 = vmatprep.subr.mxu0 0.0
    %3611 = vmatpush2.msra.mxu0 0.0
    %3612 = vmatprep.subr.mxu0 0.0
    %3613 = vmatpush2.msra.mxu0 0.0
    %3614 = vmatprep.mubr.f32.mxu0 0.0
    %3615 = vmatmul.mubr.f32.gmra.mxu0 %v3548
    %v3616 = vpop.f32.mrf.mxu0
    %v3617 = vadd.f32 0.0, %v3616
    %v3618 = vpop.f32.mrf.mxu0
    %3619 = vdwg.mxu0
    %3620 = vrot.lane.b32.xlu0 %v2449, 64
    %v3621 = vpop.permute.xlu0 %3620
    %v3624 = vsel %vm586, %v3161, 0
    %3626 = vmatprep.subr.mxu0 0.0
    %3627 = vmatpush1.msra.mxu0 0.0
    %3628 = vmatprep.subr.mxu0 0.0
    %3629 = vmatpush1.msra.mxu0 0.0
    %3630 = vmatprep.subr.mxu0 0.0
    %3631 = vmatpush1.msra.mxu0 0.0
    %3632 = vmatprep.subr.mxu0 0.0
    %3633 = vmatpush1.msra.mxu0 0.0
    %3634 = vmatprep.subr.mxu0 0.0
    %3635 = vmatpush1.msra.mxu0 0.0
    %3636 = vmatprep.subr.mxu0 0.0
    %3637 = vmatpush1.msra.mxu0 0.0
    %3638 = vmatprep.subr.mxu0 0.0
    %3639 = vmatpush1.msra.mxu0 0.0
    %3640 = vmatprep.subr.mxu0 0.0
    %3641 = vmatpush1.msra.mxu0 0.0
    %3642 = vmatprep.subr.mxu0 0.0
    %3643 = vmatpush1.msra.mxu0 0.0
    %3644 = vmatprep.subr.mxu0 0.0
    %3645 = vmatpush1.msra.mxu0 0.0
    %3646 = vmatprep.subr.mxu0 0.0
    %3647 = vmatpush1.msra.mxu0 0.0
    %3648 = vmatprep.subr.mxu0 0.0
    %3649 = vmatpush1.msra.mxu0 0.0
    %3650 = vmatprep.subr.mxu0 0.0
    %3651 = vmatpush1.msra.mxu0 0.0
    %3652 = vmatprep.subr.mxu0 0.0
    %3653 = vmatpush1.msra.mxu0 0.0
    %3654 = vmatprep.subr.mxu0 0.0
    %3655 = vmatpush1.msra.mxu0 0.0
    %3656 = vmatprep.subr.mxu0 0.0
    %3657 = vmatpush1.msra.mxu0 %v3621
    %3658 = vmatprep.subr.mxu0 0.0
    %3659 = vmatpush2.msra.mxu0 0.0
    %3660 = vmatprep.subr.mxu0 0.0
    %3661 = vmatpush2.msra.mxu0 0.0
    %3662 = vmatprep.subr.mxu0 0.0
    %3663 = vmatpush2.msra.mxu0 0.0
    %3664 = vmatprep.subr.mxu0 0.0
    %3665 = vmatpush2.msra.mxu0 0.0
    %3666 = vmatprep.subr.mxu0 0.0
    %3667 = vmatpush2.msra.mxu0 0.0
    %3668 = vmatprep.subr.mxu0 0.0
    %3669 = vmatpush2.msra.mxu0 0.0
    %3670 = vmatprep.subr.mxu0 0.0
    %3671 = vmatpush2.msra.mxu0 0.0
    %3672 = vmatprep.subr.mxu0 0.0
    %3673 = vmatpush2.msra.mxu0 0.0
    %3674 = vmatprep.subr.mxu0 0.0
    %3675 = vmatpush2.msra.mxu0 0.0
    %3676 = vmatprep.subr.mxu0 0.0
    %3677 = vmatpush2.msra.mxu0 0.0
    %3678 = vmatprep.subr.mxu0 0.0
    %3679 = vmatpush2.msra.mxu0 0.0
    %3680 = vmatprep.subr.mxu0 0.0
    %3681 = vmatpush2.msra.mxu0 0.0
    %3682 = vmatprep.subr.mxu0 0.0
    %3683 = vmatpush2.msra.mxu0 0.0
    %3684 = vmatprep.subr.mxu0 0.0
    %3685 = vmatpush2.msra.mxu0 0.0
    %3686 = vmatprep.subr.mxu0 0.0
    %3687 = vmatpush2.msra.mxu0 0.0
    %3688 = vmatprep.subr.mxu0 0.0
    %3689 = vmatpush2.msra.mxu0 0.0
    %3690 = vmatprep.mubr.f32.mxu0 0.0
    %3691 = vmatmul.mubr.f32.gmra.mxu0 %v3624
    %v3692 = vpop.f32.mrf.mxu0
    %v3693 = vadd.f32 0.0, %v3692
    %v3694 = vpop.f32.mrf.mxu0
    %3695 = vdwg.mxu0
    %3696 = vrot.lane.b32.xlu0 %v2451, 64
    %v3697 = vpop.permute.xlu0 %3696
    %v3700 = vsel %vm586, %v3163, 0
    %3702 = vmatprep.subr.mxu0 0.0
    %3703 = vmatpush1.msra.mxu0 0.0
    %3704 = vmatprep.subr.mxu0 0.0
    %3705 = vmatpush1.msra.mxu0 0.0
    %3706 = vmatprep.subr.mxu0 0.0
    %3707 = vmatpush1.msra.mxu0 0.0
    %3708 = vmatprep.subr.mxu0 0.0
    %3709 = vmatpush1.msra.mxu0 0.0
    %3710 = vmatprep.subr.mxu0 0.0
    %3711 = vmatpush1.msra.mxu0 0.0
    %3712 = vmatprep.subr.mxu0 0.0
    %3713 = vmatpush1.msra.mxu0 0.0
    %3714 = vmatprep.subr.mxu0 0.0
    %3715 = vmatpush1.msra.mxu0 0.0
    %3716 = vmatprep.subr.mxu0 0.0
    %3717 = vmatpush1.msra.mxu0 0.0
    %3718 = vmatprep.subr.mxu0 0.0
    %3719 = vmatpush1.msra.mxu0 0.0
    %3720 = vmatprep.subr.mxu0 0.0
    %3721 = vmatpush1.msra.mxu0 0.0
    %3722 = vmatprep.subr.mxu0 0.0
    %3723 = vmatpush1.msra.mxu0 0.0
    %3724 = vmatprep.subr.mxu0 0.0
    %3725 = vmatpush1.msra.mxu0 0.0
    %3726 = vmatprep.subr.mxu0 0.0
    %3727 = vmatpush1.msra.mxu0 0.0
    %3728 = vmatprep.subr.mxu0 0.0
    %3729 = vmatpush1.msra.mxu0 0.0
    %3730 = vmatprep.subr.mxu0 0.0
    %3731 = vmatpush1.msra.mxu0 0.0
    %3732 = vmatprep.subr.mxu0 0.0
    %3733 = vmatpush1.msra.mxu0 %v3697
    %3734 = vmatprep.subr.mxu0 0.0
    %3735 = vmatpush2.msra.mxu0 0.0
    %3736 = vmatprep.subr.mxu0 0.0
    %3737 = vmatpush2.msra.mxu0 0.0
    %3738 = vmatprep.subr.mxu0 0.0
    %3739 = vmatpush2.msra.mxu0 0.0
    %3740 = vmatprep.subr.mxu0 0.0
    %3741 = vmatpush2.msra.mxu0 0.0
    %3742 = vmatprep.subr.mxu0 0.0
    %3743 = vmatpush2.msra.mxu0 0.0
    %3744 = vmatprep.subr.mxu0 0.0
    %3745 = vmatpush2.msra.mxu0 0.0
    %3746 = vmatprep.subr.mxu0 0.0
    %3747 = vmatpush2.msra.mxu0 0.0
    %3748 = vmatprep.subr.mxu0 0.0
    %3749 = vmatpush2.msra.mxu0 0.0
    %3750 = vmatprep.subr.mxu0 0.0
    %3751 = vmatpush2.msra.mxu0 0.0
    %3752 = vmatprep.subr.mxu0 0.0
    %3753 = vmatpush2.msra.mxu0 0.0
    %3754 = vmatprep.subr.mxu0 0.0
    %3755 = vmatpush2.msra.mxu0 0.0
    %3756 = vmatprep.subr.mxu0 0.0
    %3757 = vmatpush2.msra.mxu0 0.0
    %3758 = vmatprep.subr.mxu0 0.0
    %3759 = vmatpush2.msra.mxu0 0.0
    %3760 = vmatprep.subr.mxu0 0.0
    %3761 = vmatpush2.msra.mxu0 0.0
    %3762 = vmatprep.subr.mxu0 0.0
    %3763 = vmatpush2.msra.mxu0 0.0
    %3764 = vmatprep.subr.mxu0 0.0
    %3765 = vmatpush2.msra.mxu0 0.0
    %3766 = vmatprep.mubr.f32.mxu0 0.0
    %3767 = vmatmul.mubr.f32.gmra.mxu0 %v3700
    %v3768 = vpop.f32.mrf.mxu0
    %v3769 = vadd.f32 0.0, %v3768
    %v3770 = vpop.f32.mrf.mxu0
    %3771 = vdwg.mxu0
    %3773 = vrot.lane.b32.xlu0 %v3389, 8
    %v3774 = vpop.permute.xlu0 %3773
    %3777 = vrot.lane.b32.xlu0 %v3541, 16
    %v3778 = vpop.permute.xlu0 %3777
    %3781 = vrot.lane.b32.xlu0 %v3693, 24
    %v3782 = vpop.permute.xlu0 %3781
    %v3784 = vsel %vm586, %v3237, %v3774
    %v3785 = vsel %vm113, %v3784, %v3778
    %v3786 = vsel %vm1919, %v3785, %v3782
    %3788 = vrot.lane.b32.xlu0 %v3465, 8
    %v3789 = vpop.permute.xlu0 %3788
    %3792 = vrot.lane.b32.xlu0 %v3617, 16
    %v3793 = vpop.permute.xlu0 %3792
    %3796 = vrot.lane.b32.xlu0 %v3769, 24
    %v3797 = vpop.permute.xlu0 %3796
    %v3799 = vsel %vm586, %v3313, %v3789
    %v3800 = vsel %vm113, %v3799, %v3793
    %v3801 = vsel %vm1919, %v3800, %v3797
    %s3802 = scalar_lea.vmem [#allocation2], 160
    %v3803 = vld [vmem:[%s3802] sm:$0xff]
    %v3804 = vld [vmem:[%s3802 + $0x8] sm:$0xff]
    %v3805 = vld [vmem:[%s3802 + $0x10] sm:$0xff]
    %v3806 = vld [vmem:[%s3802 + $0x18] sm:$0xff]
    %v3807 = vld [vmem:[%s5 + $0x14] sm:$0x1]
    %v3808 = vlaneseq
    %v3809 = vshrl.u32 %v3808, 7
    %v3810 = vsub.s32 0, %v3809
    %v3811 = vrot.slane %v3807, %v3810
    %v3813 = vsel %vm195, %v3786, 0
    %v3816 = vsel %vm195, %v3801, 0
    %3818 = vmatprep.subr.mxu0 0.0
    %3819 = vmatpush1.msra.mxu0 0.0
    %3820 = vmatprep.subr.mxu0 0.0
    %3821 = vmatpush1.msra.mxu0 0.0
    %3822 = vmatprep.subr.mxu0 0.0
    %3823 = vmatpush1.msra.mxu0 0.0
    %3824 = vmatprep.subr.mxu0 0.0
    %3825 = vmatpush1.msra.mxu0 0.0
    %3826 = vmatprep.subr.mxu0 0.0
    %3827 = vmatpush1.msra.mxu0 0.0
    %3828 = vmatprep.subr.mxu0 0.0
    %3829 = vmatpush1.msra.mxu0 0.0
    %3830 = vmatprep.subr.mxu0 0.0
    %3831 = vmatpush1.msra.mxu0 0.0
    %3832 = vmatprep.subr.mxu0 0.0
    %3833 = vmatpush1.msra.mxu0 0.0
    %3834 = vmatprep.subr.mxu0 0.0
    %3835 = vmatpush1.msra.mxu0 0.0
    %3836 = vmatprep.subr.mxu0 0.0
    %3837 = vmatpush1.msra.mxu0 0.0
    %3838 = vmatprep.subr.mxu0 0.0
    %3839 = vmatpush1.msra.mxu0 0.0
    %3840 = vmatprep.subr.mxu0 0.0
    %3841 = vmatpush1.msra.mxu0 0.0
    %3842 = vmatprep.subr.mxu0 0.0
    %3843 = vmatpush1.msra.mxu0 %v3806
    %3844 = vmatprep.subr.mxu0 0.0
    %3845 = vmatpush1.msra.mxu0 %v3805
    %3846 = vmatprep.subr.mxu0 0.0
    %3847 = vmatpush1.msra.mxu0 %v3804
    %3848 = vmatprep.subr.mxu0 0.0
    %3849 = vmatpush1.msra.mxu0 %v3803
    %3850 = vmatprep.subr.mxu0 0.0
    %3851 = vmatpush2.msra.mxu0 0.0
    %3852 = vmatprep.subr.mxu0 0.0
    %3853 = vmatpush2.msra.mxu0 0.0
    %3854 = vmatprep.subr.mxu0 0.0
    %3855 = vmatpush2.msra.mxu0 0.0
    %3856 = vmatprep.subr.mxu0 0.0
    %3857 = vmatpush2.msra.mxu0 0.0
    %3858 = vmatprep.subr.mxu0 0.0
    %3859 = vmatpush2.msra.mxu0 0.0
    %3860 = vmatprep.subr.mxu0 0.0
    %3861 = vmatpush2.msra.mxu0 0.0
    %3862 = vmatprep.subr.mxu0 0.0
    %3863 = vmatpush2.msra.mxu0 0.0
    %3864 = vmatprep.subr.mxu0 0.0
    %3865 = vmatpush2.msra.mxu0 0.0
    %3866 = vmatprep.subr.mxu0 0.0
    %3867 = vmatpush2.msra.mxu0 0.0
    %3868 = vmatprep.subr.mxu0 0.0
    %3869 = vmatpush2.msra.mxu0 0.0
    %3870 = vmatprep.subr.mxu0 0.0
    %3871 = vmatpush2.msra.mxu0 0.0
    %3872 = vmatprep.subr.mxu0 0.0
    %3873 = vmatpush2.msra.mxu0 0.0
    %3874 = vmatprep.subr.mxu0 0.0
    %3875 = vmatpush2.msra.mxu0 0.0
    %3876 = vmatprep.subr.mxu0 0.0
    %3877 = vmatpush2.msra.mxu0 0.0
    %3878 = vmatprep.subr.mxu0 0.0
    %3879 = vmatpush2.msra.mxu0 0.0
    %3880 = vmatprep.subr.mxu0 0.0
    %3881 = vmatpush2.msra.mxu0 0.0
    %3882 = vmatprep.mubr.f32.mxu0 0.0
    %3883 = vmatmul.mubr.f32.gmra.mxu0 %v3813
    %v3884 = vpop.f32.mrf.mxu0
    %v3885 = vadd.f32 %v3811, %v3884
    %v3886 = vpop.f32.mrf.mxu0
    %3887 = vmatprep.mubr.f32.mxu0 0.0
    %3888 = vmatmul.mubr.f32.gmra.mxu0 %v3816
    %v3889 = vpop.f32.mrf.mxu0
    %v3890 = vadd.f32 %v3811, %v3889
    %v3891 = vpop.f32.mrf.mxu0
    %3892 = vdwg.mxu0
    %v3893 = vadd.f32 %v2293, %v3885
    %v3894 = vadd.f32 %v2294, %v3890
    %v3895 = vsel %vm195, %v3893, 0.0
    %3896 = vadd.xlane.f32.xlu0 %v3895
    %v3897 = vpop.xlane.xlu0 %3896
    %v3898 = vsel %vm195, %v3894, 0.0
    %3899 = vadd.xlane.f32.xlu0 %v3898
    %v3900 = vpop.xlane.xlu0 %3899
    %v3901 = vmul.f32 %v3897, %v202
    %v3902 = vmul.f32 %v3900, %v202
    %v3903 = vsub.f32 %v3893, %v3901
    %v3904 = vsub.f32 %v3894, %v3902
    %v3905 = vmul.f32 %v3903, %v3903
    %v3906 = vmul.f32 %v3904, %v3904
    %v3907 = vsel %vm195, %v3905, 0.0
    %3908 = vadd.xlane.f32.xlu0 %v3907
    %v3909 = vpop.xlane.xlu0 %3908
    %v3910 = vsel %vm195, %v3906, 0.0
    %3911 = vadd.xlane.f32.xlu0 %v3910
    %v3912 = vpop.xlane.xlu0 %3911
    %v3913 = vmul.f32 %v3909, %v202
    %v3914 = vmul.f32 %v3912, %v202
    %v3915 = vadd.f32 %v3913, 1e-05
    %v3916 = vadd.f32 %v3914, 1e-05
    %v3917 = vrsqrt.pop %v3915
    %v3918 = vrsqrt.pop %v3916
    %v3919 = vmul.f32 %v3903, %v3917
    %v3920 = vmul.f32 %v3904, %v3918
    %v3921 = vld [vmem:[%s5 + $0x15] sm:$0x1]
    %v3922 = vlaneseq
    %v3923 = vshrl.u32 %v3922, 7
    %v3924 = vsub.s32 0, %v3923
    %v3925 = vrot.slane %v3921, %v3924
    %v3926 = vmul.f32 %v3919, %v3925
    %v3927 = vmul.f32 %v3920, %v3925
    %v3928 = vld [vmem:[%s5 + $0x16] sm:$0x1]
    %v3929 = vlaneseq
    %v3930 = vshrl.u32 %v3929, 7
    %v3931 = vsub.s32 0, %v3930
    %v3932 = vrot.slane %v3928, %v3931
    %v3933 = vadd.f32 %v3926, %v3932
    %v3934 = vadd.f32 %v3927, %v3932
    %s3935 = scalar_lea.vmem [#allocation2], 192
    %v3936 = vld [vmem:[%s3935] sm:$0xff]
    %v3937 = vld [vmem:[%s3935 + $0x8] sm:$0xff]
    %v3938 = vld [vmem:[%s3935 + $0x10] sm:$0xff]
    %v3939 = vld [vmem:[%s3935 + $0x18] sm:$0xff]
    %v3940 = vld [vmem:[%s5 + $0x17] sm:$0x1]
    %v3941 = vlaneseq
    %v3942 = vshrl.u32 %v3941, 7
    %v3943 = vsub.s32 0, %v3942
    %v3944 = vrot.slane %v3940, %v3943
    %v3946 = vsel %vm195, %v3933, 0
    %v3949 = vsel %vm195, %v3934, 0
    %3951 = vmatprep.subr.mxu0 0.0
    %3952 = vmatpush1.msra.mxu0 0.0
    %3953 = vmatprep.subr.mxu0 0.0
    %3954 = vmatpush1.msra.mxu0 0.0
    %3955 = vmatprep.subr.mxu0 0.0
    %3956 = vmatpush1.msra.mxu0 0.0
    %3957 = vmatprep.subr.mxu0 0.0
    %3958 = vmatpush1.msra.mxu0 0.0
    %3959 = vmatprep.subr.mxu0 0.0
    %3960 = vmatpush1.msra.mxu0 0.0
    %3961 = vmatprep.subr.mxu0 0.0
    %3962 = vmatpush1.msra.mxu0 0.0
    %3963 = vmatprep.subr.mxu0 0.0
    %3964 = vmatpush1.msra.mxu0 0.0
    %3965 = vmatprep.subr.mxu0 0.0
    %3966 = vmatpush1.msra.mxu0 0.0
    %3967 = vmatprep.subr.mxu0 0.0
    %3968 = vmatpush1.msra.mxu0 0.0
    %3969 = vmatprep.subr.mxu0 0.0
    %3970 = vmatpush1.msra.mxu0 0.0
    %3971 = vmatprep.subr.mxu0 0.0
    %3972 = vmatpush1.msra.mxu0 0.0
    %3973 = vmatprep.subr.mxu0 0.0
    %3974 = vmatpush1.msra.mxu0 0.0
    %3975 = vmatprep.subr.mxu0 0.0
    %3976 = vmatpush1.msra.mxu0 %v3939
    %3977 = vmatprep.subr.mxu0 0.0
    %3978 = vmatpush1.msra.mxu0 %v3938
    %3979 = vmatprep.subr.mxu0 0.0
    %3980 = vmatpush1.msra.mxu0 %v3937
    %3981 = vmatprep.subr.mxu0 0.0
    %3982 = vmatpush1.msra.mxu0 %v3936
    %3983 = vmatprep.subr.mxu0 0.0
    %3984 = vmatpush2.msra.mxu0 0.0
    %3985 = vmatprep.subr.mxu0 0.0
    %3986 = vmatpush2.msra.mxu0 0.0
    %3987 = vmatprep.subr.mxu0 0.0
    %3988 = vmatpush2.msra.mxu0 0.0
    %3989 = vmatprep.subr.mxu0 0.0
    %3990 = vmatpush2.msra.mxu0 0.0
    %3991 = vmatprep.subr.mxu0 0.0
    %3992 = vmatpush2.msra.mxu0 0.0
    %3993 = vmatprep.subr.mxu0 0.0
    %3994 = vmatpush2.msra.mxu0 0.0
    %3995 = vmatprep.subr.mxu0 0.0
    %3996 = vmatpush2.msra.mxu0 0.0
    %3997 = vmatprep.subr.mxu0 0.0
    %3998 = vmatpush2.msra.mxu0 0.0
    %3999 = vmatprep.subr.mxu0 0.0
    %4000 = vmatpush2.msra.mxu0 0.0
    %4001 = vmatprep.subr.mxu0 0.0
    %4002 = vmatpush2.msra.mxu0 0.0
    %4003 = vmatprep.subr.mxu0 0.0
    %4004 = vmatpush2.msra.mxu0 0.0
    %4005 = vmatprep.subr.mxu0 0.0
    %4006 = vmatpush2.msra.mxu0 0.0
    %4007 = vmatprep.subr.mxu0 0.0
    %4008 = vmatpush2.msra.mxu0 0.0
    %4009 = vmatprep.subr.mxu0 0.0
    %4010 = vmatpush2.msra.mxu0 0.0
    %4011 = vmatprep.subr.mxu0 0.0
    %4012 = vmatpush2.msra.mxu0 0.0
    %4013 = vmatprep.subr.mxu0 0.0
    %4014 = vmatpush2.msra.mxu0 0.0
    %4015 = vmatprep.mubr.f32.mxu0 0.0
    %4016 = vmatmul.mubr.f32.gmra.mxu0 %v3946
    %v4017 = vpop.f32.mrf.mxu0
    %v4018 = vadd.f32 %v3944, %v4017
    %v4019 = vpop.f32.mrf.mxu0
    %4020 = vmatprep.mubr.f32.mxu0 0.0
    %4021 = vmatmul.mubr.f32.gmra.mxu0 %v3949
    %v4022 = vpop.f32.mrf.mxu0
    %v4023 = vadd.f32 %v3944, %v4022
    %v4024 = vpop.f32.mrf.mxu0
    %4025 = vdwg.mxu0
    %v4026 = vmax.f32 %v4018, 0.0
    %v4027 = vmax.f32 %v4023, 0.0
    %s4028 = scalar_lea.vmem [#allocation2], 224
    %v4029 = vld [vmem:[%s4028] sm:$0xff]
    %v4030 = vld [vmem:[%s4028 + $0x8] sm:$0xff]
    %v4031 = vld [vmem:[%s4028 + $0x10] sm:$0xff]
    %v4032 = vld [vmem:[%s4028 + $0x18] sm:$0xff]
    %v4033 = vld [vmem:[%s5 + $0x18] sm:$0x1]
    %v4034 = vlaneseq
    %v4035 = vshrl.u32 %v4034, 7
    %v4036 = vsub.s32 0, %v4035
    %v4037 = vrot.slane %v4033, %v4036
    %v4039 = vsel %vm195, %v4026, 0
    %v4042 = vsel %vm195, %v4027, 0
    %4044 = vmatprep.subr.mxu0 0.0
    %4045 = vmatpush1.msra.mxu0 0.0
    %4046 = vmatprep.subr.mxu0 0.0
    %4047 = vmatpush1.msra.mxu0 0.0
    %4048 = vmatprep.subr.mxu0 0.0
    %4049 = vmatpush1.msra.mxu0 0.0
    %4050 = vmatprep.subr.mxu0 0.0
    %4051 = vmatpush1.msra.mxu0 0.0
    %4052 = vmatprep.subr.mxu0 0.0
    %4053 = vmatpush1.msra.mxu0 0.0
    %4054 = vmatprep.subr.mxu0 0.0
    %4055 = vmatpush1.msra.mxu0 0.0
    %4056 = vmatprep.subr.mxu0 0.0
    %4057 = vmatpush1.msra.mxu0 0.0
    %4058 = vmatprep.subr.mxu0 0.0
    %4059 = vmatpush1.msra.mxu0 0.0
    %4060 = vmatprep.subr.mxu0 0.0
    %4061 = vmatpush1.msra.mxu0 0.0
    %4062 = vmatprep.subr.mxu0 0.0
    %4063 = vmatpush1.msra.mxu0 0.0
    %4064 = vmatprep.subr.mxu0 0.0
    %4065 = vmatpush1.msra.mxu0 0.0
    %4066 = vmatprep.subr.mxu0 0.0
    %4067 = vmatpush1.msra.mxu0 0.0
    %4068 = vmatprep.subr.mxu0 0.0
    %4069 = vmatpush1.msra.mxu0 %v4032
    %4070 = vmatprep.subr.mxu0 0.0
    %4071 = vmatpush1.msra.mxu0 %v4031
    %4072 = vmatprep.subr.mxu0 0.0
    %4073 = vmatpush1.msra.mxu0 %v4030
    %4074 = vmatprep.subr.mxu0 0.0
    %4075 = vmatpush1.msra.mxu0 %v4029
    %4076 = vmatprep.subr.mxu0 0.0
    %4077 = vmatpush2.msra.mxu0 0.0
    %4078 = vmatprep.subr.mxu0 0.0
    %4079 = vmatpush2.msra.mxu0 0.0
    %4080 = vmatprep.subr.mxu0 0.0
    %4081 = vmatpush2.msra.mxu0 0.0
    %4082 = vmatprep.subr.mxu0 0.0
    %4083 = vmatpush2.msra.mxu0 0.0
    %4084 = vmatprep.subr.mxu0 0.0
    %4085 = vmatpush2.msra.mxu0 0.0
    %4086 = vmatprep.subr.mxu0 0.0
    %4087 = vmatpush2.msra.mxu0 0.0
    %4088 = vmatprep.subr.mxu0 0.0
    %4089 = vmatpush2.msra.mxu0 0.0
    %4090 = vmatprep.subr.mxu0 0.0
    %4091 = vmatpush2.msra.mxu0 0.0
    %4092 = vmatprep.subr.mxu0 0.0
    %4093 = vmatpush2.msra.mxu0 0.0
    %4094 = vmatprep.subr.mxu0 0.0
    %4095 = vmatpush2.msra.mxu0 0.0
    %4096 = vmatprep.subr.mxu0 0.0
    %4097 = vmatpush2.msra.mxu0 0.0
    %4098 = vmatprep.subr.mxu0 0.0
    %4099 = vmatpush2.msra.mxu0 0.0
    %4100 = vmatprep.subr.mxu0 0.0
    %4101 = vmatpush2.msra.mxu0 0.0
    %4102 = vmatprep.subr.mxu0 0.0
    %4103 = vmatpush2.msra.mxu0 0.0
    %4104 = vmatprep.subr.mxu0 0.0
    %4105 = vmatpush2.msra.mxu0 0.0
    %4106 = vmatprep.subr.mxu0 0.0
    %4107 = vmatpush2.msra.mxu0 0.0
    %4108 = vmatprep.mubr.f32.mxu0 0.0
    %4109 = vmatmul.mubr.f32.gmra.mxu0 %v4039
    %v4110 = vpop.f32.mrf.mxu0
    %v4111 = vadd.f32 %v4037, %v4110
    %v4112 = vpop.f32.mrf.mxu0
    %4113 = vmatprep.mubr.f32.mxu0 0.0
    %4114 = vmatmul.mubr.f32.gmra.mxu0 %v4042
    %v4115 = vpop.f32.mrf.mxu0
    %v4116 = vadd.f32 %v4037, %v4115
    %v4117 = vpop.f32.mrf.mxu0
    %4118 = vdwg.mxu0
    %v4119 = vadd.f32 %v3933, %v4111
    %v4120 = vadd.f32 %v3934, %v4116
    %v4121 = vsel %vm195, %v4119, 0.0
    %4122 = vadd.xlane.f32.xlu0 %v4121
    %v4123 = vpop.xlane.xlu0 %4122
    %v4124 = vsel %vm195, %v4120, 0.0
    %4125 = vadd.xlane.f32.xlu0 %v4124
    %v4126 = vpop.xlane.xlu0 %4125
    %v4127 = vmul.f32 %v4123, %v202
    %v4128 = vmul.f32 %v4126, %v202
    %v4129 = vsub.f32 %v4119, %v4127
    %v4130 = vsub.f32 %v4120, %v4128
    %v4131 = vmul.f32 %v4129, %v4129
    %v4132 = vmul.f32 %v4130, %v4130
    %v4133 = vsel %vm195, %v4131, 0.0
    %4134 = vadd.xlane.f32.xlu0 %v4133
    %v4135 = vpop.xlane.xlu0 %4134
    %v4136 = vsel %vm195, %v4132, 0.0
    %4137 = vadd.xlane.f32.xlu0 %v4136
    %v4138 = vpop.xlane.xlu0 %4137
    %v4139 = vmul.f32 %v4135, %v202
    %v4140 = vmul.f32 %v4138, %v202
    %v4141 = vadd.f32 %v4139, 1e-05
    %v4142 = vadd.f32 %v4140, 1e-05
    %v4143 = vrsqrt.pop %v4141
    %v4144 = vrsqrt.pop %v4142
    %v4145 = vmul.f32 %v4129, %v4143
    %v4146 = vmul.f32 %v4130, %v4144
    %v4147 = vld [vmem:[%s5 + $0x19] sm:$0x1]
    %v4148 = vlaneseq
    %v4149 = vshrl.u32 %v4148, 7
    %v4150 = vsub.s32 0, %v4149
    %v4151 = vrot.slane %v4147, %v4150
    %v4152 = vmul.f32 %v4145, %v4151
    %v4153 = vmul.f32 %v4146, %v4151
    %v4154 = vld [vmem:[%s5 + $0x1a] sm:$0x1]
    %v4155 = vlaneseq
    %v4156 = vshrl.u32 %v4155, 7
    %v4157 = vsub.s32 0, %v4156
    %v4158 = vrot.slane %v4154, %v4157
    %v4159 = vadd.f32 %v4152, %v4158
    %v4160 = vadd.f32 %v4153, %v4158
    %v4161 = vsel %vm195, %v4159, 0.0
    %4162 = vadd.xlane.f32.xlu0 %v4161
    %v4163 = vpop.xlane.xlu0 %4162
    %v4164 = vsel %vm195, %v4160, 0.0
    %4165 = vadd.xlane.f32.xlu0 %v4164
    %v4166 = vpop.xlane.xlu0 %4165
    %v4167 = vmul.f32 %v4163, %v202
    %v4168 = vmul.f32 %v4166, %v202
    %v4169 = vsub.f32 %v4159, %v4167
    %v4170 = vsub.f32 %v4160, %v4168
    %v4171 = vmul.f32 %v4169, %v4169
    %v4172 = vmul.f32 %v4170, %v4170
    %v4173 = vsel %vm195, %v4171, 0.0
    %4174 = vadd.xlane.f32.xlu0 %v4173
    %v4175 = vpop.xlane.xlu0 %4174
    %v4176 = vsel %vm195, %v4172, 0.0
    %4177 = vadd.xlane.f32.xlu0 %v4176
    %v4178 = vpop.xlane.xlu0 %4177
    %v4179 = vmul.f32 %v4175, %v202
    %v4180 = vmul.f32 %v4178, %v202
    %v4181 = vadd.f32 %v4179, 1e-05
    %v4182 = vadd.f32 %v4180, 1e-05
    %v4183 = vrsqrt.pop %v4181
    %v4184 = vrsqrt.pop %v4182
    %v4185 = vmul.f32 %v4169, %v4183
    %v4186 = vmul.f32 %v4170, %v4184
    %v4187 = vld [vmem:[%s5 + $0x5] sm:$0x1]
    %v4188 = vlaneseq
    %v4189 = vshrl.u32 %v4188, 7
    %v4190 = vsub.s32 0, %v4189
    %v4191 = vrot.slane %v4187, %v4190
    %v4192 = vmul.f32 %v4185, %v4191
    %v4193 = vmul.f32 %v4186, %v4191
    %v4194 = vld [vmem:[%s5 + $0x6] sm:$0x1]
    %v4195 = vlaneseq
    %v4196 = vshrl.u32 %v4195, 7
    %v4197 = vsub.s32 0, %v4196
    %v4198 = vrot.slane %v4194, %v4197
    %v4199 = vadd.f32 %v4192, %v4198
    %v4200 = vadd.f32 %v4193, %v4198
    %4201 = vst.msk [vmem:[#allocation5] sm:$0xff] %vm195, %v4199
    %4202 = vst.msk [vmem:[#allocation5 + $0x8] sm:$0xff] %vm195, %v4200
    // Predicated region
    $region30: #{transformer_encoder.1} parent=1 // pred_check
      _
    $region31: #{transformer_encoder.1} parent=1 // pred_check_branch
      %4204 = sbr.rel (0) target = $region33
    $region32: #{transformer_encoder.1} parent=1 // pred_region
      %s4206 = ssub.s32 256, 256
      %4207 = vsyncadd [#allocation4], %s4206
      %s4208 = sshll.u32 [#allocation5], 4
      %s4209 = int_to_ptr.vmem [resolvable:$true] %s4208
      %4214 = dma.vmem_to_hbm [thread:$0]  %s4209, 256, %s6, [#allocation4], 128, 128, 8
    $region33: #{transformer_encoder.1} parent=1 // pred_fallthru
      _
    // Predicated region
    $region34: #{transformer_encoder.1} parent=1 // pred_check
      _
    $region35: #{transformer_encoder.1} parent=1 // pred_check_branch
      %4216 = sbr.rel (0) target = $region37
    $region36: #{transformer_encoder.1} parent=1 // pred_region
      %4217 = dma.done [#allocation4], 256
    $region37: #{transformer_encoder.1} parent=1 // pred_fallthru
      _
    %4218 = vsyncpa [#allocation3], 1
    %4219 = vsyncpa [#allocation4], 1

</llo_original>
